<compile_context>
chip_gen: v5e
topology: v5e:2x2
jax: 0.10.0
libtpu: 0.0.40
codegen_flags: <defaults>
</compile_context>

<pallas_src>
import functools

import jax
import jax.numpy as jnp
from jax.experimental import pallas as pl
from jax.experimental.pallas import tpu as pltpu

IN_FEATURES = 784
HIDDEN = 500
OUT_FEATURES = 10

# lane-aligned padded dims (multiples of 128)
IN_PAD = 896     # 7 * 128
HID_PAD = 512    # 4 * 128
OUT_PAD = 128    # 1 * 128

TB = 256         # batch tile (multiple of 8, fills the 256x256 MXU on v6e/v7x)


def mlp_kernel(x_ref, w1_ref, b1_ref, w2_ref, b2_ref, o_ref):
    # fc1: (TB, 896) @ (896, 512) -> f32 accumulator on the MXU
    h = jnp.dot(x_ref[...], w1_ref[...], preferred_element_type=jnp.float32)
    h = jnp.maximum(h + b1_ref[...], 0.0)                      # bias + ReLU on the VPU
    # fc2: cast hidden to bf16 so the second matmul also takes the fast MXU path
    out = jnp.dot(h.astype(jnp.bfloat16), w2_ref[...],
                  preferred_element_type=jnp.float32)
    o_ref[...] = (out + b2_ref[...]).astype(o_ref.dtype)


@functools.partial(jax.jit, static_argnames=())
def mlp_forward(x, w1, b1, w2, b2):
    """x: (B, 784) f32.  w1: (784, 500), b1: (500,), w2: (500, 10), b2: (10,) f32.

    Returns (B, 10) f32, equivalent to relu(x @ w1 + b1) @ w2 + b2.
    """
    B = x.shape[0]
    Bp = pl.cdiv(B, TB) * TB

    # --- pad + cast (done once, outside the kernel) ---------------------------------
    # zero padding keeps the math exact: extra K columns hit zero weight rows,
    # padded hidden/output columns are sliced away before returning.
    xb = jnp.pad(x, ((0, Bp - B), (0, IN_PAD - IN_FEATURES))).astype(jnp.bfloat16)
    w1b = jnp.pad(w1, ((0, IN_PAD - IN_FEATURES), (0, HID_PAD - HIDDEN))).astype(jnp.bfloat16)
    b1p = jnp.pad(b1.reshape(1, -1), ((0, 0), (0, HID_PAD - HIDDEN))).astype(jnp.float32)
    w2b = jnp.pad(w2, ((0, HID_PAD - HIDDEN), (0, OUT_PAD - OUT_FEATURES))).astype(jnp.bfloat16)
    b2p = jnp.pad(b2.reshape(1, -1), ((0, 0), (0, OUT_PAD - OUT_FEATURES))).astype(jnp.float32)

    grid = (Bp // TB,)

    cost = pl.CostEstimate(
        flops=2 * B * (IN_FEATURES * HIDDEN + HIDDEN * OUT_FEATURES),
        transcendentals=0,
        bytes_accessed=(x.size * 2 + w1b.size * 2 + w2b.size * 2
                        + b1p.size * 4 + b2p.size * 4 + B * OUT_PAD * 4),
    )

    out_padded = pl.pallas_call(
        mlp_kernel,
        out_shape=jax.ShapeDtypeStruct((Bp, OUT_PAD), jnp.float32),
        grid=grid,
        in_specs=[
            pl.BlockSpec((TB, IN_PAD), lambda i: (i, 0)),       # x tile streams per step
            pl.BlockSpec((IN_PAD, HID_PAD), lambda i: (0, 0)),  # w1 resident
            pl.BlockSpec((1, HID_PAD), lambda i: (0, 0)),       # b1 resident
            pl.BlockSpec((HID_PAD, OUT_PAD), lambda i: (0, 0)), # w2 resident
            pl.BlockSpec((1, OUT_PAD), lambda i: (0, 0)),       # b2 resident
        ],
        out_specs=pl.BlockSpec((TB, OUT_PAD), lambda i: (i, 0)),
        compiler_params=pltpu.CompilerParams(
            dimension_semantics=("parallel",),   # megacore split on v7x
            vmem_limit_bytes=32 * 1024 * 1024,   # well within v7x's 64 MiB physical VMEM
        ),
        cost_estimate=cost,
    )(xb, w1b, b1p, w2b, b2p)

    return out_padded[:B, :OUT_FEATURES]


def init_params(key):
    """Deterministic init mimicking torch.nn.Linear defaults (U(-k, k), k=1/sqrt(fan_in)).

    Weights are stored (in, out), i.e. transposed relative to torch's (out, in),
    so the kernel computes x @ W directly.
    """
    k1, k2, k3, k4 = jax.random.split(key, 4)
    bound1 = 1.0 / (IN_FEATURES ** 0.5)
    bound2 = 1.0 / (HIDDEN ** 0.5)
    w1 = jax.random.uniform(k1, (IN_FEATURES, HIDDEN), jnp.float32, -bound1, bound1)
    b1 = jax.random.uniform(k2, (HIDDEN,), jnp.float32, -bound1, bound1)
    w2 = jax.random.uniform(k3, (HIDDEN, OUT_FEATURES), jnp.float32, -bound2, bound2)
    b2 = jax.random.uniform(k4, (OUT_FEATURES,), jnp.float32, -bound2, bound2)
    return w1, b1, w2, b2


if __name__ == "__main__":
    key = jax.random.PRNGKey(0)
    kx, kp = jax.random.split(key)

    batch = 8
    x = jax.random.normal(kx, (batch, IN_FEATURES), jnp.float32)
    w1, b1, w2, b2 = init_params(kp)

    out = mlp_forward(x, w1, b1, w2, b2)
    out = jax.block_until_ready(out)
    assert out.shape == (batch, OUT_FEATURES)

    # Reference in plain JAX with the same bf16 casts the kernel applies
    # (weights/activations bf16, f32 accumulation).
    f32 = jnp.float32
    xb = x.astype(jnp.bfloat16).astype(f32)
    w1b = w1.astype(jnp.bfloat16).astype(f32)
    w2b = w2.astype(jnp.bfloat16).astype(f32)
    h = jnp.maximum(xb @ w1b + b1, 0.0)
    ref = h.astype(jnp.bfloat16).astype(f32) @ w2b + b2
    assert jnp.allclose(out, ref, atol=2e-2, rtol=2e-2), (
        float(jnp.max(jnp.abs(out - ref))))

    print("KERNEL_OK")
</pallas_src>

<mosaic_0001>
module attributes {stable_mosaic.version = 11 : i64} {
  func.func @mlp_kernel(%arg0: i32, %arg1: memref<256x896xbf16, #tpu.memory_space<vmem>>, %arg2: memref<896x512xbf16, #tpu.memory_space<vmem>>, %arg3: memref<1x512xf32, #tpu.memory_space<vmem>>, %arg4: memref<512x128xbf16, #tpu.memory_space<vmem>>, %arg5: memref<1x128xf32, #tpu.memory_space<vmem>>, %arg6: memref<256x128xf32, #tpu.memory_space<vmem>>) attributes {dimension_semantics = [#tpu.dimension_semantics<parallel>], iteration_bounds = array<i64: 1>, scalar_prefetch = 0 : i64, scratch_operands = 0 : i64, tpu.core_type = #tpu.core_type<tc>, window_params = [{transform_indices = @transform_0, window_bounds = array<i64: 256, 896>}, {pipeline_mode = #tpu.pipeline_mode<synchronous>, transform_indices = @transform_1, window_bounds = array<i64: 896, 512>}, {pipeline_mode = #tpu.pipeline_mode<synchronous>, transform_indices = @transform_2, window_bounds = array<i64: 1, 512>}, {pipeline_mode = #tpu.pipeline_mode<synchronous>, transform_indices = @transform_3, window_bounds = array<i64: 512, 128>}, {pipeline_mode = #tpu.pipeline_mode<synchronous>, transform_indices = @transform_4, window_bounds = array<i64: 1, 128>}, {transform_indices = @transform_5, window_bounds = array<i64: 256, 128>}]} {
    %c0 = arith.constant 0 : index
    %c0_0 = arith.constant 0 : index
    %0 = vector.load %arg1[%c0, %c0_0] : memref<256x896xbf16, #tpu.memory_space<vmem>>, vector<256x896xbf16>
    %c0_1 = arith.constant 0 : index
    %c0_2 = arith.constant 0 : index
    %1 = vector.load %arg2[%c0_1, %c0_2] : memref<896x512xbf16, #tpu.memory_space<vmem>>, vector<896x512xbf16>
    %cst = arith.constant dense<0.000000e+00> : vector<256x512xf32>
    %2 = tpu.matmul %0, %1, %cst {dimension_numbers = #tpu.dot_dimension_numbers<[1], [0], [0], [1], [0, 0, 1, 1], [], []>} : vector<256x896xbf16>, vector<896x512xbf16>, vector<256x512xf32> -> vector<256x512xf32>
    %c0_3 = arith.constant 0 : index
    %c0_4 = arith.constant 0 : index
    %3 = vector.load %arg3[%c0_3, %c0_4] : memref<1x512xf32, #tpu.memory_space<vmem>>, vector<1x512xf32>
    %4 = vector.broadcast %3 : vector<1x512xf32> to vector<256x512xf32>
    %5 = arith.addf %2, %4 : vector<256x512xf32>
    %cst_5 = arith.constant 0.000000e+00 : f32
    %6 = vector.broadcast %cst_5 : f32 to vector<256x512xf32>
    %7 = arith.maximumf %5, %6 : vector<256x512xf32>
    %8 = arith.truncf %7 : vector<256x512xf32> to vector<256x512xbf16>
    %c0_6 = arith.constant 0 : index
    %c0_7 = arith.constant 0 : index
    %9 = vector.load %arg4[%c0_6, %c0_7] : memref<512x128xbf16, #tpu.memory_space<vmem>>, vector<512x128xbf16>
    %cst_8 = arith.constant dense<0.000000e+00> : vector<256x128xf32>
    %10 = tpu.matmul %8, %9, %cst_8 {dimension_numbers = #tpu.dot_dimension_numbers<[1], [0], [0], [1], [0, 0, 1, 1], [], []>} : vector<256x512xbf16>, vector<512x128xbf16>, vector<256x128xf32> -> vector<256x128xf32>
    %c0_9 = arith.constant 0 : index
    %c0_10 = arith.constant 0 : index
    %11 = vector.load %arg5[%c0_9, %c0_10] : memref<1x128xf32, #tpu.memory_space<vmem>>, vector<1x128xf32>
    %12 = vector.broadcast %11 : vector<1x128xf32> to vector<256x128xf32>
    %13 = arith.addf %10, %12 : vector<256x128xf32>
    %c0_11 = arith.constant 0 : index
    %c0_12 = arith.constant 0 : index
    %14 = vector.load %arg6[%c0_11, %c0_12] : memref<256x128xf32, #tpu.memory_space<vmem>>, vector<256x128xf32>
    tpu.vector_store %arg6[%c0_11, %c0_12], %13 {strides = array<i32>} : memref<256x128xf32, #tpu.memory_space<vmem>>, vector<256x128xf32>,
    return
  }
  func.func @transform_0(%arg0: i32) -> (i32, i32) {
    %c0_i32 = arith.constant 0 : i32
    %c0_i32_0 = arith.constant 0 : i32
    return %arg0, %c0_i32 : i32, i32
  }
  func.func @transform_1(%arg0: i32) -> (i32, i32) {
    %c0_i32 = arith.constant 0 : i32
    %c0_i32_0 = arith.constant 0 : i32
    %c0_i32_1 = arith.constant 0 : i32
    return %c0_i32, %c0_i32_0 : i32, i32
  }
  func.func @transform_2(%arg0: i32) -> (i32, i32) {
    %c0_i32 = arith.constant 0 : i32
    %c0_i32_0 = arith.constant 0 : i32
    %c0_i32_1 = arith.constant 0 : i32
    return %c0_i32, %c0_i32_0 : i32, i32
  }
  func.func @transform_3(%arg0: i32) -> (i32, i32) {
    %c0_i32 = arith.constant 0 : i32
    %c0_i32_0 = arith.constant 0 : i32
    %c0_i32_1 = arith.constant 0 : i32
    return %c0_i32, %c0_i32_0 : i32, i32
  }
  func.func @transform_4(%arg0: i32) -> (i32, i32) {
    %c0_i32 = arith.constant 0 : i32
    %c0_i32_0 = arith.constant 0 : i32
    %c0_i32_1 = arith.constant 0 : i32
    return %c0_i32, %c0_i32_0 : i32, i32
  }
  func.func @transform_5(%arg0: i32) -> (i32, i32) {
    %c0_i32 = arith.constant 0 : i32
    %c0_i32_0 = arith.constant 0 : i32
    return %arg0, %c0_i32 : i32, i32
  }
}

</mosaic_0001>

<llo_original>
// kernel: mlp_forward.1
$region0: #{mlp_forward.1}
  #allocation0 [shape = 'u32[]', space=smem, size = 0x4, offset = 0x4, fixed_abs, tag = 'smem constant byte address 0x4 - core index']
  #allocation1 [shape = 'u32[72,128]{1,0:T(1,128)}', space=vmem, size = 0x9000, scoped, tag = 'internal scratch']
  %s0 = inlined_call_operand.vmem [shape: bf16[256,896], index: 0, kind: input, shape index: {}]
  %s1 = inlined_call_operand.vmem [shape: bf16[896,512], index: 1, kind: input, shape index: {}]
  %s2 = inlined_call_operand.vmem [shape: f32[1,512], index: 2, kind: input, shape index: {}]
  %s3 = inlined_call_operand.vmem [shape: bf16[512,128], index: 3, kind: input, shape index: {}]
  %s4 = inlined_call_operand.vmem [shape: f32[1,128], index: 4, kind: input, shape index: {}]
  %s5 = inlined_call_operand.vmem [shape: f32[256,128], index: 5, kind: output, shape index: {}]
  %s6 = sld [smem:[#allocation0]]
  $region30: #{mlp_forward.1} parent=0
    _
  %s8 = ssub.s32 1, %s6
  %s9 = scalar_select 0, %s8, %s6
  // Predicated region
  $region2: #{mlp_forward.1} parent=0 // pred_check
    _
  $region3: #{mlp_forward.1} parent=0 // pred_check_branch
    %11 = sbr.rel (0) target = $region5
  $region4: #{mlp_forward.1} parent=0 // pred_region
    _
  $region5: #{mlp_forward.1} parent=0 // pred_fallthru
    _
  // Predicated region
  $region6: #{mlp_forward.1} parent=0 // pred_check
    _
  $region7: #{mlp_forward.1} parent=0 // pred_check_branch
    %13 = sbr.rel (0) target = $region9
  $region8: #{mlp_forward.1} parent=0 // pred_region
    _
  $region9: #{mlp_forward.1} parent=0 // pred_fallthru
    _
  // Predicated region
  $region10: #{mlp_forward.1} parent=0 // pred_check
    _
  $region11: #{mlp_forward.1} parent=0 // pred_check_branch
    %15 = sbr.rel (0) target = $region13
  $region12: #{mlp_forward.1} parent=0 // pred_region
    _
  $region13: #{mlp_forward.1} parent=0 // pred_fallthru
    _
  // Predicated region
  $region14: #{mlp_forward.1} parent=0 // pred_check
    _
  $region15: #{mlp_forward.1} parent=0 // pred_check_branch
    %17 = sbr.rel (0) target = $region17
  $region16: #{mlp_forward.1} parent=0 // pred_region
    _
  $region17: #{mlp_forward.1} parent=0 // pred_fallthru
    _
  // Predicated region
  $region18: #{mlp_forward.1} parent=0 // pred_check
    _
  $region19: #{mlp_forward.1} parent=0 // pred_check_branch
    %19 = sbr.rel (0) target = $region21
  $region20: #{mlp_forward.1} parent=0 // pred_region
    _
  $region21: #{mlp_forward.1} parent=0 // pred_fallthru
    _
  %v20 = vld [vmem:[%s0] sm:$0xff]
  %v21 = vld [vmem:[%s0 + $0x8] sm:$0xff]
  %v22 = vld [vmem:[%s0 + $0x10] sm:$0xff]
  %v23 = vld [vmem:[%s0 + $0x18] sm:$0xf]
  %v24 = vld [vmem:[%s0 + $0x1c] sm:$0xff]
  %v25 = vld [vmem:[%s0 + $0x24] sm:$0xff]
  %v26 = vld [vmem:[%s0 + $0x2c] sm:$0xff]
  %v27 = vld [vmem:[%s0 + $0x34] sm:$0xf]
  %v28 = vld [vmem:[%s0 + $0x38] sm:$0xff]
  %v29 = vld [vmem:[%s0 + $0x40] sm:$0xff]
  %v30 = vld [vmem:[%s0 + $0x48] sm:$0xff]
  %v31 = vld [vmem:[%s0 + $0x50] sm:$0xf]
  %v32 = vld [vmem:[%s0 + $0x54] sm:$0xff]
  %v33 = vld [vmem:[%s0 + $0x5c] sm:$0xff]
  %v34 = vld [vmem:[%s0 + $0x64] sm:$0xff]
  %v35 = vld [vmem:[%s0 + $0x6c] sm:$0xf]
  %v36 = vld [vmem:[%s0 + $0x70] sm:$0xff]
  %v37 = vld [vmem:[%s0 + $0x78] sm:$0xff]
  %v38 = vld [vmem:[%s0 + $0x80] sm:$0xff]
  %v39 = vld [vmem:[%s0 + $0x88] sm:$0xf]
  %v40 = vld [vmem:[%s0 + $0x8c] sm:$0xff]
  %v41 = vld [vmem:[%s0 + $0x94] sm:$0xff]
  %v42 = vld [vmem:[%s0 + $0x9c] sm:$0xff]
  %v43 = vld [vmem:[%s0 + $0xa4] sm:$0xf]
  %v44 = vld [vmem:[%s0 + $0xa8] sm:$0xff]
  %v45 = vld [vmem:[%s0 + $0xb0] sm:$0xff]
  %v46 = vld [vmem:[%s0 + $0xb8] sm:$0xff]
  %v47 = vld [vmem:[%s0 + $0xc0] sm:$0xf]
  %v48 = vld [vmem:[%s0 + $0xc4] sm:$0xff]
  %v49 = vld [vmem:[%s0 + $0xcc] sm:$0xff]
  %v50 = vld [vmem:[%s0 + $0xd4] sm:$0xff]
  %v51 = vld [vmem:[%s0 + $0xdc] sm:$0xf]
  %v52 = vld [vmem:[%s0 + $0xe0] sm:$0xff]
  %v53 = vld [vmem:[%s0 + $0xe8] sm:$0xff]
  %v54 = vld [vmem:[%s0 + $0xf0] sm:$0xff]
  %v55 = vld [vmem:[%s0 + $0xf8] sm:$0xf]
  %v56 = vld [vmem:[%s0 + $0xfc] sm:$0xff]
  %v57 = vld [vmem:[%s0 + $0x104] sm:$0xff]
  %v58 = vld [vmem:[%s0 + $0x10c] sm:$0xff]
  %v59 = vld [vmem:[%s0 + $0x114] sm:$0xf]
  %v60 = vld [vmem:[%s0 + $0x118] sm:$0xff]
  %v61 = vld [vmem:[%s0 + $0x120] sm:$0xff]
  %v62 = vld [vmem:[%s0 + $0x128] sm:$0xff]
  %v63 = vld [vmem:[%s0 + $0x130] sm:$0xf]
  %v64 = vld [vmem:[%s0 + $0x134] sm:$0xff]
  %v65 = vld [vmem:[%s0 + $0x13c] sm:$0xff]
  %v66 = vld [vmem:[%s0 + $0x144] sm:$0xff]
  %v67 = vld [vmem:[%s0 + $0x14c] sm:$0xf]
  %v68 = vld [vmem:[%s0 + $0x150] sm:$0xff]
  %v69 = vld [vmem:[%s0 + $0x158] sm:$0xff]
  %v70 = vld [vmem:[%s0 + $0x160] sm:$0xff]
  %v71 = vld [vmem:[%s0 + $0x168] sm:$0xf]
  %v72 = vld [vmem:[%s0 + $0x16c] sm:$0xff]
  %v73 = vld [vmem:[%s0 + $0x174] sm:$0xff]
  %v74 = vld [vmem:[%s0 + $0x17c] sm:$0xff]
  %v75 = vld [vmem:[%s0 + $0x184] sm:$0xf]
  %v76 = vld [vmem:[%s0 + $0x188] sm:$0xff]
  %v77 = vld [vmem:[%s0 + $0x190] sm:$0xff]
  %v78 = vld [vmem:[%s0 + $0x198] sm:$0xff]
  %v79 = vld [vmem:[%s0 + $0x1a0] sm:$0xf]
  %v80 = vld [vmem:[%s0 + $0x1a4] sm:$0xff]
  %v81 = vld [vmem:[%s0 + $0x1ac] sm:$0xff]
  %v82 = vld [vmem:[%s0 + $0x1b4] sm:$0xff]
  %v83 = vld [vmem:[%s0 + $0x1bc] sm:$0xf]
  %v84 = vld [vmem:[%s0 + $0x1c0] sm:$0xff]
  %v85 = vld [vmem:[%s0 + $0x1c8] sm:$0xff]
  %v86 = vld [vmem:[%s0 + $0x1d0] sm:$0xff]
  %v87 = vld [vmem:[%s0 + $0x1d8] sm:$0xf]
  %v88 = vld [vmem:[%s0 + $0x1dc] sm:$0xff]
  %v89 = vld [vmem:[%s0 + $0x1e4] sm:$0xff]
  %v90 = vld [vmem:[%s0 + $0x1ec] sm:$0xff]
  %v91 = vld [vmem:[%s0 + $0x1f4] sm:$0xf]
  %v92 = vld [vmem:[%s0 + $0x1f8] sm:$0xff]
  %v93 = vld [vmem:[%s0 + $0x200] sm:$0xff]
  %v94 = vld [vmem:[%s0 + $0x208] sm:$0xff]
  %v95 = vld [vmem:[%s0 + $0x210] sm:$0xf]
  %v96 = vld [vmem:[%s0 + $0x214] sm:$0xff]
  %v97 = vld [vmem:[%s0 + $0x21c] sm:$0xff]
  %v98 = vld [vmem:[%s0 + $0x224] sm:$0xff]
  %v99 = vld [vmem:[%s0 + $0x22c] sm:$0xf]
  %v100 = vld [vmem:[%s0 + $0x230] sm:$0xff]
  %v101 = vld [vmem:[%s0 + $0x238] sm:$0xff]
  %v102 = vld [vmem:[%s0 + $0x240] sm:$0xff]
  %v103 = vld [vmem:[%s0 + $0x248] sm:$0xf]
  %v104 = vld [vmem:[%s0 + $0x24c] sm:$0xff]
  %v105 = vld [vmem:[%s0 + $0x254] sm:$0xff]
  %v106 = vld [vmem:[%s0 + $0x25c] sm:$0xff]
  %v107 = vld [vmem:[%s0 + $0x264] sm:$0xf]
  %v108 = vld [vmem:[%s0 + $0x268] sm:$0xff]
  %v109 = vld [vmem:[%s0 + $0x270] sm:$0xff]
  %v110 = vld [vmem:[%s0 + $0x278] sm:$0xff]
  %v111 = vld [vmem:[%s0 + $0x280] sm:$0xf]
  %v112 = vld [vmem:[%s0 + $0x284] sm:$0xff]
  %v113 = vld [vmem:[%s0 + $0x28c] sm:$0xff]
  %v114 = vld [vmem:[%s0 + $0x294] sm:$0xff]
  %v115 = vld [vmem:[%s0 + $0x29c] sm:$0xf]
  %v116 = vld [vmem:[%s0 + $0x2a0] sm:$0xff]
  %v117 = vld [vmem:[%s0 + $0x2a8] sm:$0xff]
  %v118 = vld [vmem:[%s0 + $0x2b0] sm:$0xff]
  %v119 = vld [vmem:[%s0 + $0x2b8] sm:$0xf]
  %v120 = vld [vmem:[%s0 + $0x2bc] sm:$0xff]
  %v121 = vld [vmem:[%s0 + $0x2c4] sm:$0xff]
  %v122 = vld [vmem:[%s0 + $0x2cc] sm:$0xff]
  %v123 = vld [vmem:[%s0 + $0x2d4] sm:$0xf]
  %v124 = vld [vmem:[%s0 + $0x2d8] sm:$0xff]
  %v125 = vld [vmem:[%s0 + $0x2e0] sm:$0xff]
  %v126 = vld [vmem:[%s0 + $0x2e8] sm:$0xff]
  %v127 = vld [vmem:[%s0 + $0x2f0] sm:$0xf]
  %v128 = vld [vmem:[%s0 + $0x2f4] sm:$0xff]
  %v129 = vld [vmem:[%s0 + $0x2fc] sm:$0xff]
  %v130 = vld [vmem:[%s0 + $0x304] sm:$0xff]
  %v131 = vld [vmem:[%s0 + $0x30c] sm:$0xf]
  %v132 = vld [vmem:[%s0 + $0x310] sm:$0xff]
  %v133 = vld [vmem:[%s0 + $0x318] sm:$0xff]
  %v134 = vld [vmem:[%s0 + $0x320] sm:$0xff]
  %v135 = vld [vmem:[%s0 + $0x328] sm:$0xf]
  %v136 = vld [vmem:[%s0 + $0x32c] sm:$0xff]
  %v137 = vld [vmem:[%s0 + $0x334] sm:$0xff]
  %v138 = vld [vmem:[%s0 + $0x33c] sm:$0xff]
  %v139 = vld [vmem:[%s0 + $0x344] sm:$0xf]
  %v140 = vld [vmem:[%s0 + $0x348] sm:$0xff]
  %v141 = vld [vmem:[%s0 + $0x350] sm:$0xff]
  %v142 = vld [vmem:[%s0 + $0x358] sm:$0xff]
  %v143 = vld [vmem:[%s0 + $0x360] sm:$0xf]
  %v144 = vld [vmem:[%s0 + $0x364] sm:$0xff]
  %v145 = vld [vmem:[%s0 + $0x36c] sm:$0xff]
  %v146 = vld [vmem:[%s0 + $0x374] sm:$0xff]
  %v147 = vld [vmem:[%s0 + $0x37c] sm:$0xf]
  %v148 = vld [vmem:[%s1] sm:$0xff]
  %v149 = vld [vmem:[%s1 + $0x8] sm:$0xff]
  %v150 = vld [vmem:[%s1 + $0x10] sm:$0xff]
  %v151 = vld [vmem:[%s1 + $0x18] sm:$0xff]
  %v152 = vld [vmem:[%s1 + $0x20] sm:$0xff]
  %v153 = vld [vmem:[%s1 + $0x28] sm:$0xff]
  %v154 = vld [vmem:[%s1 + $0x30] sm:$0xff]
  %v155 = vld [vmem:[%s1 + $0x38] sm:$0xff]
  %v156 = vld [vmem:[%s1 + $0x40] sm:$0xff]
  %v157 = vld [vmem:[%s1 + $0x48] sm:$0xff]
  %v158 = vld [vmem:[%s1 + $0x50] sm:$0xff]
  %v159 = vld [vmem:[%s1 + $0x58] sm:$0xff]
  %v160 = vld [vmem:[%s1 + $0x60] sm:$0xff]
  %v161 = vld [vmem:[%s1 + $0x68] sm:$0xff]
  %v162 = vld [vmem:[%s1 + $0x70] sm:$0xff]
  %v163 = vld [vmem:[%s1 + $0x78] sm:$0xff]
  %v164 = vld [vmem:[%s1 + $0x80] sm:$0xff]
  %v165 = vld [vmem:[%s1 + $0x88] sm:$0xff]
  %v166 = vld [vmem:[%s1 + $0x90] sm:$0xff]
  %v167 = vld [vmem:[%s1 + $0x98] sm:$0xff]
  %v168 = vld [vmem:[%s1 + $0xa0] sm:$0xff]
  %v169 = vld [vmem:[%s1 + $0xa8] sm:$0xff]
  %v170 = vld [vmem:[%s1 + $0xb0] sm:$0xff]
  %v171 = vld [vmem:[%s1 + $0xb8] sm:$0xff]
  %v172 = vld [vmem:[%s1 + $0xc0] sm:$0xff]
  %v173 = vld [vmem:[%s1 + $0xc8] sm:$0xff]
  %v174 = vld [vmem:[%s1 + $0xd0] sm:$0xff]
  %v175 = vld [vmem:[%s1 + $0xd8] sm:$0xff]
  %v176 = vld [vmem:[%s1 + $0xe0] sm:$0xff]
  %v177 = vld [vmem:[%s1 + $0xe8] sm:$0xff]
  %v178 = vld [vmem:[%s1 + $0xf0] sm:$0xff]
  %v179 = vld [vmem:[%s1 + $0xf8] sm:$0xff]
  %v180 = vld [vmem:[%s1 + $0x100] sm:$0xff]
  %v181 = vld [vmem:[%s1 + $0x108] sm:$0xff]
  %v182 = vld [vmem:[%s1 + $0x110] sm:$0xff]
  %v183 = vld [vmem:[%s1 + $0x118] sm:$0xff]
  %v184 = vld [vmem:[%s1 + $0x120] sm:$0xff]
  %v185 = vld [vmem:[%s1 + $0x128] sm:$0xff]
  %v186 = vld [vmem:[%s1 + $0x130] sm:$0xff]
  %v187 = vld [vmem:[%s1 + $0x138] sm:$0xff]
  %v188 = vld [vmem:[%s1 + $0x140] sm:$0xff]
  %v189 = vld [vmem:[%s1 + $0x148] sm:$0xff]
  %v190 = vld [vmem:[%s1 + $0x150] sm:$0xff]
  %v191 = vld [vmem:[%s1 + $0x158] sm:$0xff]
  %v192 = vld [vmem:[%s1 + $0x160] sm:$0xff]
  %v193 = vld [vmem:[%s1 + $0x168] sm:$0xff]
  %v194 = vld [vmem:[%s1 + $0x170] sm:$0xff]
  %v195 = vld [vmem:[%s1 + $0x178] sm:$0xff]
  %v196 = vld [vmem:[%s1 + $0x180] sm:$0xff]
  %v197 = vld [vmem:[%s1 + $0x188] sm:$0xff]
  %v198 = vld [vmem:[%s1 + $0x190] sm:$0xff]
  %v199 = vld [vmem:[%s1 + $0x198] sm:$0xff]
  %v200 = vld [vmem:[%s1 + $0x1a0] sm:$0xff]
  %v201 = vld [vmem:[%s1 + $0x1a8] sm:$0xff]
  %v202 = vld [vmem:[%s1 + $0x1b0] sm:$0xff]
  %v203 = vld [vmem:[%s1 + $0x1b8] sm:$0xff]
  %v204 = vld [vmem:[%s1 + $0x1c0] sm:$0xff]
  %v205 = vld [vmem:[%s1 + $0x1c8] sm:$0xff]
  %v206 = vld [vmem:[%s1 + $0x1d0] sm:$0xff]
  %v207 = vld [vmem:[%s1 + $0x1d8] sm:$0xff]
  %v208 = vld [vmem:[%s1 + $0x1e0] sm:$0xff]
  %v209 = vld [vmem:[%s1 + $0x1e8] sm:$0xff]
  %v210 = vld [vmem:[%s1 + $0x1f0] sm:$0xff]
  %v211 = vld [vmem:[%s1 + $0x1f8] sm:$0xff]
  %v212 = vld [vmem:[%s1 + $0x200] sm:$0xff]
  %v213 = vld [vmem:[%s1 + $0x208] sm:$0xff]
  %v214 = vld [vmem:[%s1 + $0x210] sm:$0xff]
  %v215 = vld [vmem:[%s1 + $0x218] sm:$0xff]
  %v216 = vld [vmem:[%s1 + $0x220] sm:$0xff]
  %v217 = vld [vmem:[%s1 + $0x228] sm:$0xff]
  %v218 = vld [vmem:[%s1 + $0x230] sm:$0xff]
  %v219 = vld [vmem:[%s1 + $0x238] sm:$0xff]
  %v220 = vld [vmem:[%s1 + $0x240] sm:$0xff]
  %v221 = vld [vmem:[%s1 + $0x248] sm:$0xff]
  %v222 = vld [vmem:[%s1 + $0x250] sm:$0xff]
  %v223 = vld [vmem:[%s1 + $0x258] sm:$0xff]
  %v224 = vld [vmem:[%s1 + $0x260] sm:$0xff]
  %v225 = vld [vmem:[%s1 + $0x268] sm:$0xff]
  %v226 = vld [vmem:[%s1 + $0x270] sm:$0xff]
  %v227 = vld [vmem:[%s1 + $0x278] sm:$0xff]
  %v228 = vld [vmem:[%s1 + $0x280] sm:$0xff]
  %v229 = vld [vmem:[%s1 + $0x288] sm:$0xff]
  %v230 = vld [vmem:[%s1 + $0x290] sm:$0xff]
  %v231 = vld [vmem:[%s1 + $0x298] sm:$0xff]
  %v232 = vld [vmem:[%s1 + $0x2a0] sm:$0xff]
  %v233 = vld [vmem:[%s1 + $0x2a8] sm:$0xff]
  %v234 = vld [vmem:[%s1 + $0x2b0] sm:$0xff]
  %v235 = vld [vmem:[%s1 + $0x2b8] sm:$0xff]
  %v236 = vld [vmem:[%s1 + $0x2c0] sm:$0xff]
  %v237 = vld [vmem:[%s1 + $0x2c8] sm:$0xff]
  %v238 = vld [vmem:[%s1 + $0x2d0] sm:$0xff]
  %v239 = vld [vmem:[%s1 + $0x2d8] sm:$0xff]
  %v240 = vld [vmem:[%s1 + $0x2e0] sm:$0xff]
  %v241 = vld [vmem:[%s1 + $0x2e8] sm:$0xff]
  %v242 = vld [vmem:[%s1 + $0x2f0] sm:$0xff]
  %v243 = vld [vmem:[%s1 + $0x2f8] sm:$0xff]
  %v244 = vld [vmem:[%s1 + $0x300] sm:$0xff]
  %v245 = vld [vmem:[%s1 + $0x308] sm:$0xff]
  %v246 = vld [vmem:[%s1 + $0x310] sm:$0xff]
  %v247 = vld [vmem:[%s1 + $0x318] sm:$0xff]
  %v248 = vld [vmem:[%s1 + $0x320] sm:$0xff]
  %v249 = vld [vmem:[%s1 + $0x328] sm:$0xff]
  %v250 = vld [vmem:[%s1 + $0x330] sm:$0xff]
  %v251 = vld [vmem:[%s1 + $0x338] sm:$0xff]
  %v252 = vld [vmem:[%s1 + $0x340] sm:$0xff]
  %v253 = vld [vmem:[%s1 + $0x348] sm:$0xff]
  %v254 = vld [vmem:[%s1 + $0x350] sm:$0xff]
  %v255 = vld [vmem:[%s1 + $0x358] sm:$0xff]
  %v256 = vld [vmem:[%s1 + $0x360] sm:$0xff]
  %v257 = vld [vmem:[%s1 + $0x368] sm:$0xff]
  %v258 = vld [vmem:[%s1 + $0x370] sm:$0xff]
  %v259 = vld [vmem:[%s1 + $0x378] sm:$0xff]
  %v260 = vld [vmem:[%s1 + $0x380] sm:$0xff]
  %v261 = vld [vmem:[%s1 + $0x388] sm:$0xff]
  %v262 = vld [vmem:[%s1 + $0x390] sm:$0xff]
  %v263 = vld [vmem:[%s1 + $0x398] sm:$0xff]
  %v264 = vld [vmem:[%s1 + $0x3a0] sm:$0xff]
  %v265 = vld [vmem:[%s1 + $0x3a8] sm:$0xff]
  %v266 = vld [vmem:[%s1 + $0x3b0] sm:$0xff]
  %v267 = vld [vmem:[%s1 + $0x3b8] sm:$0xff]
  %v268 = vld [vmem:[%s1 + $0x3c0] sm:$0xff]
  %v269 = vld [vmem:[%s1 + $0x3c8] sm:$0xff]
  %v270 = vld [vmem:[%s1 + $0x3d0] sm:$0xff]
  %v271 = vld [vmem:[%s1 + $0x3d8] sm:$0xff]
  %v272 = vld [vmem:[%s1 + $0x3e0] sm:$0xff]
  %v273 = vld [vmem:[%s1 + $0x3e8] sm:$0xff]
  %v274 = vld [vmem:[%s1 + $0x3f0] sm:$0xff]
  %v275 = vld [vmem:[%s1 + $0x3f8] sm:$0xff]
  %v276 = vld [vmem:[%s1 + $0x400] sm:$0xff]
  %v277 = vld [vmem:[%s1 + $0x408] sm:$0xff]
  %v278 = vld [vmem:[%s1 + $0x410] sm:$0xff]
  %v279 = vld [vmem:[%s1 + $0x418] sm:$0xff]
  %v280 = vld [vmem:[%s1 + $0x420] sm:$0xff]
  %v281 = vld [vmem:[%s1 + $0x428] sm:$0xff]
  %v282 = vld [vmem:[%s1 + $0x430] sm:$0xff]
  %v283 = vld [vmem:[%s1 + $0x438] sm:$0xff]
  %v284 = vld [vmem:[%s1 + $0x440] sm:$0xff]
  %v285 = vld [vmem:[%s1 + $0x448] sm:$0xff]
  %v286 = vld [vmem:[%s1 + $0x450] sm:$0xff]
  %v287 = vld [vmem:[%s1 + $0x458] sm:$0xff]
  %v288 = vld [vmem:[%s1 + $0x460] sm:$0xff]
  %v289 = vld [vmem:[%s1 + $0x468] sm:$0xff]
  %v290 = vld [vmem:[%s1 + $0x470] sm:$0xff]
  %v291 = vld [vmem:[%s1 + $0x478] sm:$0xff]
  %v292 = vld [vmem:[%s1 + $0x480] sm:$0xff]
  %v293 = vld [vmem:[%s1 + $0x488] sm:$0xff]
  %v294 = vld [vmem:[%s1 + $0x490] sm:$0xff]
  %v295 = vld [vmem:[%s1 + $0x498] sm:$0xff]
  %v296 = vld [vmem:[%s1 + $0x4a0] sm:$0xff]
  %v297 = vld [vmem:[%s1 + $0x4a8] sm:$0xff]
  %v298 = vld [vmem:[%s1 + $0x4b0] sm:$0xff]
  %v299 = vld [vmem:[%s1 + $0x4b8] sm:$0xff]
  %v300 = vld [vmem:[%s1 + $0x4c0] sm:$0xff]
  %v301 = vld [vmem:[%s1 + $0x4c8] sm:$0xff]
  %v302 = vld [vmem:[%s1 + $0x4d0] sm:$0xff]
  %v303 = vld [vmem:[%s1 + $0x4d8] sm:$0xff]
  %v304 = vld [vmem:[%s1 + $0x4e0] sm:$0xff]
  %v305 = vld [vmem:[%s1 + $0x4e8] sm:$0xff]
  %v306 = vld [vmem:[%s1 + $0x4f0] sm:$0xff]
  %v307 = vld [vmem:[%s1 + $0x4f8] sm:$0xff]
  %v308 = vld [vmem:[%s1 + $0x500] sm:$0xff]
  %v309 = vld [vmem:[%s1 + $0x508] sm:$0xff]
  %v310 = vld [vmem:[%s1 + $0x510] sm:$0xff]
  %v311 = vld [vmem:[%s1 + $0x518] sm:$0xff]
  %v312 = vld [vmem:[%s1 + $0x520] sm:$0xff]
  %v313 = vld [vmem:[%s1 + $0x528] sm:$0xff]
  %v314 = vld [vmem:[%s1 + $0x530] sm:$0xff]
  %v315 = vld [vmem:[%s1 + $0x538] sm:$0xff]
  %v316 = vld [vmem:[%s1 + $0x540] sm:$0xff]
  %v317 = vld [vmem:[%s1 + $0x548] sm:$0xff]
  %v318 = vld [vmem:[%s1 + $0x550] sm:$0xff]
  %v319 = vld [vmem:[%s1 + $0x558] sm:$0xff]
  %v320 = vld [vmem:[%s1 + $0x560] sm:$0xff]
  %v321 = vld [vmem:[%s1 + $0x568] sm:$0xff]
  %v322 = vld [vmem:[%s1 + $0x570] sm:$0xff]
  %v323 = vld [vmem:[%s1 + $0x578] sm:$0xff]
  %v324 = vld [vmem:[%s1 + $0x580] sm:$0xff]
  %v325 = vld [vmem:[%s1 + $0x588] sm:$0xff]
  %v326 = vld [vmem:[%s1 + $0x590] sm:$0xff]
  %v327 = vld [vmem:[%s1 + $0x598] sm:$0xff]
  %v328 = vld [vmem:[%s1 + $0x5a0] sm:$0xff]
  %v329 = vld [vmem:[%s1 + $0x5a8] sm:$0xff]
  %v330 = vld [vmem:[%s1 + $0x5b0] sm:$0xff]
  %v331 = vld [vmem:[%s1 + $0x5b8] sm:$0xff]
  %v332 = vld [vmem:[%s1 + $0x5c0] sm:$0xff]
  %v333 = vld [vmem:[%s1 + $0x5c8] sm:$0xff]
  %v334 = vld [vmem:[%s1 + $0x5d0] sm:$0xff]
  %v335 = vld [vmem:[%s1 + $0x5d8] sm:$0xff]
  %v336 = vld [vmem:[%s1 + $0x5e0] sm:$0xff]
  %v337 = vld [vmem:[%s1 + $0x5e8] sm:$0xff]
  %v338 = vld [vmem:[%s1 + $0x5f0] sm:$0xff]
  %v339 = vld [vmem:[%s1 + $0x5f8] sm:$0xff]
  %v340 = vld [vmem:[%s1 + $0x600] sm:$0xff]
  %v341 = vld [vmem:[%s1 + $0x608] sm:$0xff]
  %v342 = vld [vmem:[%s1 + $0x610] sm:$0xff]
  %v343 = vld [vmem:[%s1 + $0x618] sm:$0xff]
  %v344 = vld [vmem:[%s1 + $0x620] sm:$0xff]
  %v345 = vld [vmem:[%s1 + $0x628] sm:$0xff]
  %v346 = vld [vmem:[%s1 + $0x630] sm:$0xff]
  %v347 = vld [vmem:[%s1 + $0x638] sm:$0xff]
  %v348 = vld [vmem:[%s1 + $0x640] sm:$0xff]
  %v349 = vld [vmem:[%s1 + $0x648] sm:$0xff]
  %v350 = vld [vmem:[%s1 + $0x650] sm:$0xff]
  %v351 = vld [vmem:[%s1 + $0x658] sm:$0xff]
  %v352 = vld [vmem:[%s1 + $0x660] sm:$0xff]
  %v353 = vld [vmem:[%s1 + $0x668] sm:$0xff]
  %v354 = vld [vmem:[%s1 + $0x670] sm:$0xff]
  %v355 = vld [vmem:[%s1 + $0x678] sm:$0xff]
  %v356 = vld [vmem:[%s1 + $0x680] sm:$0xff]
  %v357 = vld [vmem:[%s1 + $0x688] sm:$0xff]
  %v358 = vld [vmem:[%s1 + $0x690] sm:$0xff]
  %v359 = vld [vmem:[%s1 + $0x698] sm:$0xff]
  %v360 = vld [vmem:[%s1 + $0x6a0] sm:$0xff]
  %v361 = vld [vmem:[%s1 + $0x6a8] sm:$0xff]
  %v362 = vld [vmem:[%s1 + $0x6b0] sm:$0xff]
  %v363 = vld [vmem:[%s1 + $0x6b8] sm:$0xff]
  %v364 = vld [vmem:[%s1 + $0x6c0] sm:$0xff]
  %v365 = vld [vmem:[%s1 + $0x6c8] sm:$0xff]
  %v366 = vld [vmem:[%s1 + $0x6d0] sm:$0xff]
  %v367 = vld [vmem:[%s1 + $0x6d8] sm:$0xff]
  %v368 = vld [vmem:[%s1 + $0x6e0] sm:$0xff]
  %v369 = vld [vmem:[%s1 + $0x6e8] sm:$0xff]
  %v370 = vld [vmem:[%s1 + $0x6f0] sm:$0xff]
  %v371 = vld [vmem:[%s1 + $0x6f8] sm:$0xff]
  %v372 = vld [vmem:[%s2] sm:$0xf]
  %v374 = vperm.slane %v372, 0
  %v375 = vperm.slane %v372, 1
  %v376 = vperm.slane %v372, 2
  %v377 = vperm.slane %v372, 3
  %v510 = vunpack.c.l.b16 %v20
  %v511 = vunpack.c.h.b16 %v20
  %v512 = vunpack.c.l.b16 %v21
  %v513 = vunpack.c.h.b16 %v21
  %v514 = vunpack.c.l.b16 %v22
  %v515 = vunpack.c.h.b16 %v22
  %v516 = vunpack.c.l.b16 %v23
  %v517 = vunpack.c.l.b16 %v24
  %v518 = vunpack.c.h.b16 %v24
  %v519 = vunpack.c.l.b16 %v25
  %v520 = vunpack.c.h.b16 %v25
  %v521 = vunpack.c.l.b16 %v26
  %v522 = vunpack.c.h.b16 %v26
  %v523 = vunpack.c.l.b16 %v27
  %v524 = vunpack.c.l.b16 %v28
  %v525 = vunpack.c.h.b16 %v28
  %v526 = vunpack.c.l.b16 %v29
  %v527 = vunpack.c.h.b16 %v29
  %v528 = vunpack.c.l.b16 %v30
  %v529 = vunpack.c.h.b16 %v30
  %v530 = vunpack.c.l.b16 %v31
  %v531 = vunpack.c.l.b16 %v32
  %v532 = vunpack.c.h.b16 %v32
  %v533 = vunpack.c.l.b16 %v33
  %v534 = vunpack.c.h.b16 %v33
  %v535 = vunpack.c.l.b16 %v34
  %v536 = vunpack.c.h.b16 %v34
  %v537 = vunpack.c.l.b16 %v35
  %v538 = vunpack.c.l.b16 %v36
  %v539 = vunpack.c.h.b16 %v36
  %v540 = vunpack.c.l.b16 %v37
  %v541 = vunpack.c.h.b16 %v37
  %v542 = vunpack.c.l.b16 %v38
  %v543 = vunpack.c.h.b16 %v38
  %v544 = vunpack.c.l.b16 %v39
  %v545 = vunpack.c.l.b16 %v40
  %v546 = vunpack.c.h.b16 %v40
  %v547 = vunpack.c.l.b16 %v41
  %v548 = vunpack.c.h.b16 %v41
  %v549 = vunpack.c.l.b16 %v42
  %v550 = vunpack.c.h.b16 %v42
  %v551 = vunpack.c.l.b16 %v43
  %v552 = vunpack.c.l.b16 %v44
  %v553 = vunpack.c.h.b16 %v44
  %v554 = vunpack.c.l.b16 %v45
  %v555 = vunpack.c.h.b16 %v45
  %v556 = vunpack.c.l.b16 %v46
  %v557 = vunpack.c.h.b16 %v46
  %v558 = vunpack.c.l.b16 %v47
  %v559 = vunpack.c.l.b16 %v48
  %v560 = vunpack.c.h.b16 %v48
  %v561 = vunpack.c.l.b16 %v49
  %v562 = vunpack.c.h.b16 %v49
  %v563 = vunpack.c.l.b16 %v50
  %v564 = vunpack.c.h.b16 %v50
  %v565 = vunpack.c.l.b16 %v51
  %v566 = vunpack.c.l.b16 %v52
  %v567 = vunpack.c.h.b16 %v52
  %v568 = vunpack.c.l.b16 %v53
  %v569 = vunpack.c.h.b16 %v53
  %v570 = vunpack.c.l.b16 %v54
  %v571 = vunpack.c.h.b16 %v54
  %v572 = vunpack.c.l.b16 %v55
  %v573 = vunpack.c.l.b16 %v56
  %v574 = vunpack.c.h.b16 %v56
  %v575 = vunpack.c.l.b16 %v57
  %v576 = vunpack.c.h.b16 %v57
  %v577 = vunpack.c.l.b16 %v58
  %v578 = vunpack.c.h.b16 %v58
  %v579 = vunpack.c.l.b16 %v59
  %v580 = vunpack.c.l.b16 %v60
  %v581 = vunpack.c.h.b16 %v60
  %v582 = vunpack.c.l.b16 %v61
  %v583 = vunpack.c.h.b16 %v61
  %v584 = vunpack.c.l.b16 %v62
  %v585 = vunpack.c.h.b16 %v62
  %v586 = vunpack.c.l.b16 %v63
  %v587 = vunpack.c.l.b16 %v64
  %v588 = vunpack.c.h.b16 %v64
  %v589 = vunpack.c.l.b16 %v65
  %v590 = vunpack.c.h.b16 %v65
  %v591 = vunpack.c.l.b16 %v66
  %v592 = vunpack.c.h.b16 %v66
  %v593 = vunpack.c.l.b16 %v67
  %v594 = vunpack.c.l.b16 %v68
  %v595 = vunpack.c.h.b16 %v68
  %v596 = vunpack.c.l.b16 %v69
  %v597 = vunpack.c.h.b16 %v69
  %v598 = vunpack.c.l.b16 %v70
  %v599 = vunpack.c.h.b16 %v70
  %v600 = vunpack.c.l.b16 %v71
  %v601 = vunpack.c.l.b16 %v72
  %v602 = vunpack.c.h.b16 %v72
  %v603 = vunpack.c.l.b16 %v73
  %v604 = vunpack.c.h.b16 %v73
  %v605 = vunpack.c.l.b16 %v74
  %v606 = vunpack.c.h.b16 %v74
  %v607 = vunpack.c.l.b16 %v75
  %v608 = vunpack.c.l.b16 %v76
  %v609 = vunpack.c.h.b16 %v76
  %v610 = vunpack.c.l.b16 %v77
  %v611 = vunpack.c.h.b16 %v77
  %v612 = vunpack.c.l.b16 %v78
  %v613 = vunpack.c.h.b16 %v78
  %v614 = vunpack.c.l.b16 %v79
  %v615 = vunpack.c.l.b16 %v80
  %v616 = vunpack.c.h.b16 %v80
  %v617 = vunpack.c.l.b16 %v81
  %v618 = vunpack.c.h.b16 %v81
  %v619 = vunpack.c.l.b16 %v82
  %v620 = vunpack.c.h.b16 %v82
  %v621 = vunpack.c.l.b16 %v83
  %v622 = vunpack.c.l.b16 %v84
  %v623 = vunpack.c.h.b16 %v84
  %v624 = vunpack.c.l.b16 %v85
  %v625 = vunpack.c.h.b16 %v85
  %v626 = vunpack.c.l.b16 %v86
  %v627 = vunpack.c.h.b16 %v86
  %v628 = vunpack.c.l.b16 %v87
  %v629 = vunpack.c.l.b16 %v88
  %v630 = vunpack.c.h.b16 %v88
  %v631 = vunpack.c.l.b16 %v89
  %v632 = vunpack.c.h.b16 %v89
  %v633 = vunpack.c.l.b16 %v90
  %v634 = vunpack.c.h.b16 %v90
  %v635 = vunpack.c.l.b16 %v91
  %v636 = vunpack.c.l.b16 %v92
  %v637 = vunpack.c.h.b16 %v92
  %v638 = vunpack.c.l.b16 %v93
  %v639 = vunpack.c.h.b16 %v93
  %v640 = vunpack.c.l.b16 %v94
  %v641 = vunpack.c.h.b16 %v94
  %v642 = vunpack.c.l.b16 %v95
  %v643 = vunpack.c.l.b16 %v96
  %v644 = vunpack.c.h.b16 %v96
  %v645 = vunpack.c.l.b16 %v97
  %v646 = vunpack.c.h.b16 %v97
  %v647 = vunpack.c.l.b16 %v98
  %v648 = vunpack.c.h.b16 %v98
  %v649 = vunpack.c.l.b16 %v99
  %v650 = vunpack.c.l.b16 %v100
  %v651 = vunpack.c.h.b16 %v100
  %v652 = vunpack.c.l.b16 %v101
  %v653 = vunpack.c.h.b16 %v101
  %v654 = vunpack.c.l.b16 %v102
  %v655 = vunpack.c.h.b16 %v102
  %v656 = vunpack.c.l.b16 %v103
  %v657 = vunpack.c.l.b16 %v104
  %v658 = vunpack.c.h.b16 %v104
  %v659 = vunpack.c.l.b16 %v105
  %v660 = vunpack.c.h.b16 %v105
  %v661 = vunpack.c.l.b16 %v106
  %v662 = vunpack.c.h.b16 %v106
  %v663 = vunpack.c.l.b16 %v107
  %v664 = vunpack.c.l.b16 %v108
  %v665 = vunpack.c.h.b16 %v108
  %v666 = vunpack.c.l.b16 %v109
  %v667 = vunpack.c.h.b16 %v109
  %v668 = vunpack.c.l.b16 %v110
  %v669 = vunpack.c.h.b16 %v110
  %v670 = vunpack.c.l.b16 %v111
  %v671 = vunpack.c.l.b16 %v112
  %v672 = vunpack.c.h.b16 %v112
  %v673 = vunpack.c.l.b16 %v113
  %v674 = vunpack.c.h.b16 %v113
  %v675 = vunpack.c.l.b16 %v114
  %v676 = vunpack.c.h.b16 %v114
  %v677 = vunpack.c.l.b16 %v115
  %v678 = vunpack.c.l.b16 %v116
  %v679 = vunpack.c.h.b16 %v116
  %v680 = vunpack.c.l.b16 %v117
  %v681 = vunpack.c.h.b16 %v117
  %v682 = vunpack.c.l.b16 %v118
  %v683 = vunpack.c.h.b16 %v118
  %v684 = vunpack.c.l.b16 %v119
  %v685 = vunpack.c.l.b16 %v120
  %v686 = vunpack.c.h.b16 %v120
  %v687 = vunpack.c.l.b16 %v121
  %v688 = vunpack.c.h.b16 %v121
  %v689 = vunpack.c.l.b16 %v122
  %v690 = vunpack.c.h.b16 %v122
  %v691 = vunpack.c.l.b16 %v123
  %v692 = vunpack.c.l.b16 %v124
  %v693 = vunpack.c.h.b16 %v124
  %v694 = vunpack.c.l.b16 %v125
  %v695 = vunpack.c.h.b16 %v125
  %v696 = vunpack.c.l.b16 %v126
  %v697 = vunpack.c.h.b16 %v126
  %v698 = vunpack.c.l.b16 %v127
  %v699 = vunpack.c.l.b16 %v128
  %v700 = vunpack.c.h.b16 %v128
  %v701 = vunpack.c.l.b16 %v129
  %v702 = vunpack.c.h.b16 %v129
  %v703 = vunpack.c.l.b16 %v130
  %v704 = vunpack.c.h.b16 %v130
  %v705 = vunpack.c.l.b16 %v131
  %v706 = vunpack.c.l.b16 %v132
  %v707 = vunpack.c.h.b16 %v132
  %v708 = vunpack.c.l.b16 %v133
  %v709 = vunpack.c.h.b16 %v133
  %v710 = vunpack.c.l.b16 %v134
  %v711 = vunpack.c.h.b16 %v134
  %v712 = vunpack.c.l.b16 %v135
  %v713 = vunpack.c.l.b16 %v136
  %v714 = vunpack.c.h.b16 %v136
  %v715 = vunpack.c.l.b16 %v137
  %v716 = vunpack.c.h.b16 %v137
  %v717 = vunpack.c.l.b16 %v138
  %v718 = vunpack.c.h.b16 %v138
  %v719 = vunpack.c.l.b16 %v139
  %v720 = vunpack.c.l.b16 %v140
  %v721 = vunpack.c.h.b16 %v140
  %v722 = vunpack.c.l.b16 %v141
  %v723 = vunpack.c.h.b16 %v141
  %v724 = vunpack.c.l.b16 %v142
  %v725 = vunpack.c.h.b16 %v142
  %v726 = vunpack.c.l.b16 %v143
  %v727 = vunpack.c.l.b16 %v144
  %v728 = vunpack.c.h.b16 %v144
  %v729 = vunpack.c.l.b16 %v145
  %v730 = vunpack.c.h.b16 %v145
  %v731 = vunpack.c.l.b16 %v146
  %v732 = vunpack.c.h.b16 %v146
  %v733 = vunpack.c.l.b16 %v147
  %v734 = vpack.c.b16 %v517, %v510
  %v735 = vpack.c.b16 %v518, %v511
  %v736 = vpack.c.b16 %v519, %v512
  %v737 = vpack.c.b16 %v520, %v513
  %v738 = vpack.c.b16 %v521, %v514
  %v739 = vpack.c.b16 %v522, %v515
  %v740 = vpack.c.b16 %v523, %v516
  %v741 = vpack.c.b16 %v531, %v524
  %v742 = vpack.c.b16 %v532, %v525
  %v743 = vpack.c.b16 %v533, %v526
  %v744 = vpack.c.b16 %v534, %v527
  %v745 = vpack.c.b16 %v535, %v528
  %v746 = vpack.c.b16 %v536, %v529
  %v747 = vpack.c.b16 %v537, %v530
  %v748 = vpack.c.b16 %v545, %v538
  %v749 = vpack.c.b16 %v546, %v539
  %v750 = vpack.c.b16 %v547, %v540
  %v751 = vpack.c.b16 %v548, %v541
  %v752 = vpack.c.b16 %v549, %v542
  %v753 = vpack.c.b16 %v550, %v543
  %v754 = vpack.c.b16 %v551, %v544
  %v755 = vpack.c.b16 %v559, %v552
  %v756 = vpack.c.b16 %v560, %v553
  %v757 = vpack.c.b16 %v561, %v554
  %v758 = vpack.c.b16 %v562, %v555
  %v759 = vpack.c.b16 %v563, %v556
  %v760 = vpack.c.b16 %v564, %v557
  %v761 = vpack.c.b16 %v565, %v558
  %v762 = vpack.c.b16 %v573, %v566
  %v763 = vpack.c.b16 %v574, %v567
  %v764 = vpack.c.b16 %v575, %v568
  %v765 = vpack.c.b16 %v576, %v569
  %v766 = vpack.c.b16 %v577, %v570
  %v767 = vpack.c.b16 %v578, %v571
  %v768 = vpack.c.b16 %v579, %v572
  %v769 = vpack.c.b16 %v587, %v580
  %v770 = vpack.c.b16 %v588, %v581
  %v771 = vpack.c.b16 %v589, %v582
  %v772 = vpack.c.b16 %v590, %v583
  %v773 = vpack.c.b16 %v591, %v584
  %v774 = vpack.c.b16 %v592, %v585
  %v775 = vpack.c.b16 %v593, %v586
  %v776 = vpack.c.b16 %v601, %v594
  %v777 = vpack.c.b16 %v602, %v595
  %v778 = vpack.c.b16 %v603, %v596
  %v779 = vpack.c.b16 %v604, %v597
  %v780 = vpack.c.b16 %v605, %v598
  %v781 = vpack.c.b16 %v606, %v599
  %v782 = vpack.c.b16 %v607, %v600
  %v783 = vpack.c.b16 %v615, %v608
  %v784 = vpack.c.b16 %v616, %v609
  %v785 = vpack.c.b16 %v617, %v610
  %v786 = vpack.c.b16 %v618, %v611
  %v787 = vpack.c.b16 %v619, %v612
  %v788 = vpack.c.b16 %v620, %v613
  %v789 = vpack.c.b16 %v621, %v614
  %v790 = vpack.c.b16 %v629, %v622
  %v791 = vpack.c.b16 %v630, %v623
  %v792 = vpack.c.b16 %v631, %v624
  %v793 = vpack.c.b16 %v632, %v625
  %v794 = vpack.c.b16 %v633, %v626
  %v795 = vpack.c.b16 %v634, %v627
  %v796 = vpack.c.b16 %v635, %v628
  %v797 = vpack.c.b16 %v643, %v636
  %v798 = vpack.c.b16 %v644, %v637
  %v799 = vpack.c.b16 %v645, %v638
  %v800 = vpack.c.b16 %v646, %v639
  %v801 = vpack.c.b16 %v647, %v640
  %v802 = vpack.c.b16 %v648, %v641
  %v803 = vpack.c.b16 %v649, %v642
  %v804 = vpack.c.b16 %v657, %v650
  %v805 = vpack.c.b16 %v658, %v651
  %v806 = vpack.c.b16 %v659, %v652
  %v807 = vpack.c.b16 %v660, %v653
  %v808 = vpack.c.b16 %v661, %v654
  %v809 = vpack.c.b16 %v662, %v655
  %v810 = vpack.c.b16 %v663, %v656
  %v811 = vpack.c.b16 %v671, %v664
  %v812 = vpack.c.b16 %v672, %v665
  %v813 = vpack.c.b16 %v673, %v666
  %v814 = vpack.c.b16 %v674, %v667
  %v815 = vpack.c.b16 %v675, %v668
  %v816 = vpack.c.b16 %v676, %v669
  %v817 = vpack.c.b16 %v677, %v670
  %v818 = vpack.c.b16 %v685, %v678
  %v819 = vpack.c.b16 %v686, %v679
  %v820 = vpack.c.b16 %v687, %v680
  %v821 = vpack.c.b16 %v688, %v681
  %v822 = vpack.c.b16 %v689, %v682
  %v823 = vpack.c.b16 %v690, %v683
  %v824 = vpack.c.b16 %v691, %v684
  %v825 = vpack.c.b16 %v699, %v692
  %v826 = vpack.c.b16 %v700, %v693
  %v827 = vpack.c.b16 %v701, %v694
  %v828 = vpack.c.b16 %v702, %v695
  %v829 = vpack.c.b16 %v703, %v696
  %v830 = vpack.c.b16 %v704, %v697
  %v831 = vpack.c.b16 %v705, %v698
  %v832 = vpack.c.b16 %v713, %v706
  %v833 = vpack.c.b16 %v714, %v707
  %v834 = vpack.c.b16 %v715, %v708
  %v835 = vpack.c.b16 %v716, %v709
  %v836 = vpack.c.b16 %v717, %v710
  %v837 = vpack.c.b16 %v718, %v711
  %v838 = vpack.c.b16 %v719, %v712
  %v839 = vpack.c.b16 %v727, %v720
  %v840 = vpack.c.b16 %v728, %v721
  %v841 = vpack.c.b16 %v729, %v722
  %v842 = vpack.c.b16 %v730, %v723
  %v843 = vpack.c.b16 %v731, %v724
  %v844 = vpack.c.b16 %v732, %v725
  %v845 = vpack.c.b16 %v733, %v726
  %v1182 = vunpack.c.l.b16 %v148
  %v1183 = vunpack.c.h.b16 %v148
  %v1184 = vunpack.c.l.b16 %v149
  %v1185 = vunpack.c.h.b16 %v149
  %v1186 = vunpack.c.l.b16 %v150
  %v1187 = vunpack.c.h.b16 %v150
  %v1188 = vunpack.c.l.b16 %v151
  %v1189 = vunpack.c.h.b16 %v151
  %v1190 = vunpack.c.l.b16 %v152
  %v1191 = vunpack.c.h.b16 %v152
  %v1192 = vunpack.c.l.b16 %v153
  %v1193 = vunpack.c.h.b16 %v153
  %v1194 = vunpack.c.l.b16 %v154
  %v1195 = vunpack.c.h.b16 %v154
  %v1196 = vunpack.c.l.b16 %v155
  %v1197 = vunpack.c.h.b16 %v155
  %v1198 = vunpack.c.l.b16 %v156
  %v1199 = vunpack.c.h.b16 %v156
  %v1200 = vunpack.c.l.b16 %v157
  %v1201 = vunpack.c.h.b16 %v157
  %v1202 = vunpack.c.l.b16 %v158
  %v1203 = vunpack.c.h.b16 %v158
  %v1204 = vunpack.c.l.b16 %v159
  %v1205 = vunpack.c.h.b16 %v159
  %v1206 = vunpack.c.l.b16 %v160
  %v1207 = vunpack.c.h.b16 %v160
  %v1208 = vunpack.c.l.b16 %v161
  %v1209 = vunpack.c.h.b16 %v161
  %v1210 = vunpack.c.l.b16 %v162
  %v1211 = vunpack.c.h.b16 %v162
  %v1212 = vunpack.c.l.b16 %v163
  %v1213 = vunpack.c.h.b16 %v163
  %v1214 = vunpack.c.l.b16 %v164
  %v1215 = vunpack.c.h.b16 %v164
  %v1216 = vunpack.c.l.b16 %v165
  %v1217 = vunpack.c.h.b16 %v165
  %v1218 = vunpack.c.l.b16 %v166
  %v1219 = vunpack.c.h.b16 %v166
  %v1220 = vunpack.c.l.b16 %v167
  %v1221 = vunpack.c.h.b16 %v167
  %v1222 = vunpack.c.l.b16 %v168
  %v1223 = vunpack.c.h.b16 %v168
  %v1224 = vunpack.c.l.b16 %v169
  %v1225 = vunpack.c.h.b16 %v169
  %v1226 = vunpack.c.l.b16 %v170
  %v1227 = vunpack.c.h.b16 %v170
  %v1228 = vunpack.c.l.b16 %v171
  %v1229 = vunpack.c.h.b16 %v171
  %v1230 = vunpack.c.l.b16 %v172
  %v1231 = vunpack.c.h.b16 %v172
  %v1232 = vunpack.c.l.b16 %v173
  %v1233 = vunpack.c.h.b16 %v173
  %v1234 = vunpack.c.l.b16 %v174
  %v1235 = vunpack.c.h.b16 %v174
  %v1236 = vunpack.c.l.b16 %v175
  %v1237 = vunpack.c.h.b16 %v175
  %v1238 = vunpack.c.l.b16 %v176
  %v1239 = vunpack.c.h.b16 %v176
  %v1240 = vunpack.c.l.b16 %v177
  %v1241 = vunpack.c.h.b16 %v177
  %v1242 = vunpack.c.l.b16 %v178
  %v1243 = vunpack.c.h.b16 %v178
  %v1244 = vunpack.c.l.b16 %v179
  %v1245 = vunpack.c.h.b16 %v179
  %v1246 = vunpack.c.l.b16 %v180
  %v1247 = vunpack.c.h.b16 %v180
  %v1248 = vunpack.c.l.b16 %v181
  %v1249 = vunpack.c.h.b16 %v181
  %v1250 = vunpack.c.l.b16 %v182
  %v1251 = vunpack.c.h.b16 %v182
  %v1252 = vunpack.c.l.b16 %v183
  %v1253 = vunpack.c.h.b16 %v183
  %v1254 = vunpack.c.l.b16 %v184
  %v1255 = vunpack.c.h.b16 %v184
  %v1256 = vunpack.c.l.b16 %v185
  %v1257 = vunpack.c.h.b16 %v185
  %v1258 = vunpack.c.l.b16 %v186
  %v1259 = vunpack.c.h.b16 %v186
  %v1260 = vunpack.c.l.b16 %v187
  %v1261 = vunpack.c.h.b16 %v187
  %v1262 = vunpack.c.l.b16 %v188
  %v1263 = vunpack.c.h.b16 %v188
  %v1264 = vunpack.c.l.b16 %v189
  %v1265 = vunpack.c.h.b16 %v189
  %v1266 = vunpack.c.l.b16 %v190
  %v1267 = vunpack.c.h.b16 %v190
  %v1268 = vunpack.c.l.b16 %v191
  %v1269 = vunpack.c.h.b16 %v191
  %v1270 = vunpack.c.l.b16 %v192
  %v1271 = vunpack.c.h.b16 %v192
  %v1272 = vunpack.c.l.b16 %v193
  %v1273 = vunpack.c.h.b16 %v193
  %v1274 = vunpack.c.l.b16 %v194
  %v1275 = vunpack.c.h.b16 %v194
  %v1276 = vunpack.c.l.b16 %v195
  %v1277 = vunpack.c.h.b16 %v195
  %v1278 = vunpack.c.l.b16 %v196
  %v1279 = vunpack.c.h.b16 %v196
  %v1280 = vunpack.c.l.b16 %v197
  %v1281 = vunpack.c.h.b16 %v197
  %v1282 = vunpack.c.l.b16 %v198
  %v1283 = vunpack.c.h.b16 %v198
  %v1284 = vunpack.c.l.b16 %v199
  %v1285 = vunpack.c.h.b16 %v199
  %v1286 = vunpack.c.l.b16 %v200
  %v1287 = vunpack.c.h.b16 %v200
  %v1288 = vunpack.c.l.b16 %v201
  %v1289 = vunpack.c.h.b16 %v201
  %v1290 = vunpack.c.l.b16 %v202
  %v1291 = vunpack.c.h.b16 %v202
  %v1292 = vunpack.c.l.b16 %v203
  %v1293 = vunpack.c.h.b16 %v203
  %v1294 = vunpack.c.l.b16 %v204
  %v1295 = vunpack.c.h.b16 %v204
  %v1296 = vunpack.c.l.b16 %v205
  %v1297 = vunpack.c.h.b16 %v205
  %v1298 = vunpack.c.l.b16 %v206
  %v1299 = vunpack.c.h.b16 %v206
  %v1300 = vunpack.c.l.b16 %v207
  %v1301 = vunpack.c.h.b16 %v207
  %v1302 = vunpack.c.l.b16 %v208
  %v1303 = vunpack.c.h.b16 %v208
  %v1304 = vunpack.c.l.b16 %v209
  %v1305 = vunpack.c.h.b16 %v209
  %v1306 = vunpack.c.l.b16 %v210
  %v1307 = vunpack.c.h.b16 %v210
  %v1308 = vunpack.c.l.b16 %v211
  %v1309 = vunpack.c.h.b16 %v211
  %v1310 = vunpack.c.l.b16 %v212
  %v1311 = vunpack.c.h.b16 %v212
  %v1312 = vunpack.c.l.b16 %v213
  %v1313 = vunpack.c.h.b16 %v213
  %v1314 = vunpack.c.l.b16 %v214
  %v1315 = vunpack.c.h.b16 %v214
  %v1316 = vunpack.c.l.b16 %v215
  %v1317 = vunpack.c.h.b16 %v215
  %v1318 = vunpack.c.l.b16 %v216
  %v1319 = vunpack.c.h.b16 %v216
  %v1320 = vunpack.c.l.b16 %v217
  %v1321 = vunpack.c.h.b16 %v217
  %v1322 = vunpack.c.l.b16 %v218
  %v1323 = vunpack.c.h.b16 %v218
  %v1324 = vunpack.c.l.b16 %v219
  %v1325 = vunpack.c.h.b16 %v219
  %v1326 = vunpack.c.l.b16 %v220
  %v1327 = vunpack.c.h.b16 %v220
  %v1328 = vunpack.c.l.b16 %v221
  %v1329 = vunpack.c.h.b16 %v221
  %v1330 = vunpack.c.l.b16 %v222
  %v1331 = vunpack.c.h.b16 %v222
  %v1332 = vunpack.c.l.b16 %v223
  %v1333 = vunpack.c.h.b16 %v223
  %v1334 = vunpack.c.l.b16 %v224
  %v1335 = vunpack.c.h.b16 %v224
  %v1336 = vunpack.c.l.b16 %v225
  %v1337 = vunpack.c.h.b16 %v225
  %v1338 = vunpack.c.l.b16 %v226
  %v1339 = vunpack.c.h.b16 %v226
  %v1340 = vunpack.c.l.b16 %v227
  %v1341 = vunpack.c.h.b16 %v227
  %v1342 = vunpack.c.l.b16 %v228
  %v1343 = vunpack.c.h.b16 %v228
  %v1344 = vunpack.c.l.b16 %v229
  %v1345 = vunpack.c.h.b16 %v229
  %v1346 = vunpack.c.l.b16 %v230
  %v1347 = vunpack.c.h.b16 %v230
  %v1348 = vunpack.c.l.b16 %v231
  %v1349 = vunpack.c.h.b16 %v231
  %v1350 = vunpack.c.l.b16 %v232
  %v1351 = vunpack.c.h.b16 %v232
  %v1352 = vunpack.c.l.b16 %v233
  %v1353 = vunpack.c.h.b16 %v233
  %v1354 = vunpack.c.l.b16 %v234
  %v1355 = vunpack.c.h.b16 %v234
  %v1356 = vunpack.c.l.b16 %v235
  %v1357 = vunpack.c.h.b16 %v235
  %v1358 = vunpack.c.l.b16 %v236
  %v1359 = vunpack.c.h.b16 %v236
  %v1360 = vunpack.c.l.b16 %v237
  %v1361 = vunpack.c.h.b16 %v237
  %v1362 = vunpack.c.l.b16 %v238
  %v1363 = vunpack.c.h.b16 %v238
  %v1364 = vunpack.c.l.b16 %v239
  %v1365 = vunpack.c.h.b16 %v239
  %v1366 = vunpack.c.l.b16 %v240
  %v1367 = vunpack.c.h.b16 %v240
  %v1368 = vunpack.c.l.b16 %v241
  %v1369 = vunpack.c.h.b16 %v241
  %v1370 = vunpack.c.l.b16 %v242
  %v1371 = vunpack.c.h.b16 %v242
  %v1372 = vunpack.c.l.b16 %v243
  %v1373 = vunpack.c.h.b16 %v243
  %v1374 = vunpack.c.l.b16 %v244
  %v1375 = vunpack.c.h.b16 %v244
  %v1376 = vunpack.c.l.b16 %v245
  %v1377 = vunpack.c.h.b16 %v245
  %v1378 = vunpack.c.l.b16 %v246
  %v1379 = vunpack.c.h.b16 %v246
  %v1380 = vunpack.c.l.b16 %v247
  %v1381 = vunpack.c.h.b16 %v247
  %v1382 = vunpack.c.l.b16 %v248
  %v1383 = vunpack.c.h.b16 %v248
  %v1384 = vunpack.c.l.b16 %v249
  %v1385 = vunpack.c.h.b16 %v249
  %v1386 = vunpack.c.l.b16 %v250
  %v1387 = vunpack.c.h.b16 %v250
  %v1388 = vunpack.c.l.b16 %v251
  %v1389 = vunpack.c.h.b16 %v251
  %v1390 = vunpack.c.l.b16 %v252
  %v1391 = vunpack.c.h.b16 %v252
  %v1392 = vunpack.c.l.b16 %v253
  %v1393 = vunpack.c.h.b16 %v253
  %v1394 = vunpack.c.l.b16 %v254
  %v1395 = vunpack.c.h.b16 %v254
  %v1396 = vunpack.c.l.b16 %v255
  %v1397 = vunpack.c.h.b16 %v255
  %v1398 = vunpack.c.l.b16 %v256
  %v1399 = vunpack.c.h.b16 %v256
  %v1400 = vunpack.c.l.b16 %v257
  %v1401 = vunpack.c.h.b16 %v257
  %v1402 = vunpack.c.l.b16 %v258
  %v1403 = vunpack.c.h.b16 %v258
  %v1404 = vunpack.c.l.b16 %v259
  %v1405 = vunpack.c.h.b16 %v259
  %v1406 = vunpack.c.l.b16 %v260
  %v1407 = vunpack.c.h.b16 %v260
  %v1408 = vunpack.c.l.b16 %v261
  %v1409 = vunpack.c.h.b16 %v261
  %v1410 = vunpack.c.l.b16 %v262
  %v1411 = vunpack.c.h.b16 %v262
  %v1412 = vunpack.c.l.b16 %v263
  %v1413 = vunpack.c.h.b16 %v263
  %v1414 = vunpack.c.l.b16 %v264
  %v1415 = vunpack.c.h.b16 %v264
  %v1416 = vunpack.c.l.b16 %v265
  %v1417 = vunpack.c.h.b16 %v265
  %v1418 = vunpack.c.l.b16 %v266
  %v1419 = vunpack.c.h.b16 %v266
  %v1420 = vunpack.c.l.b16 %v267
  %v1421 = vunpack.c.h.b16 %v267
  %v1422 = vunpack.c.l.b16 %v268
  %v1423 = vunpack.c.h.b16 %v268
  %v1424 = vunpack.c.l.b16 %v269
  %v1425 = vunpack.c.h.b16 %v269
  %v1426 = vunpack.c.l.b16 %v270
  %v1427 = vunpack.c.h.b16 %v270
  %v1428 = vunpack.c.l.b16 %v271
  %v1429 = vunpack.c.h.b16 %v271
  %v1430 = vunpack.c.l.b16 %v272
  %v1431 = vunpack.c.h.b16 %v272
  %v1432 = vunpack.c.l.b16 %v273
  %v1433 = vunpack.c.h.b16 %v273
  %v1434 = vunpack.c.l.b16 %v274
  %v1435 = vunpack.c.h.b16 %v274
  %v1436 = vunpack.c.l.b16 %v275
  %v1437 = vunpack.c.h.b16 %v275
  %v1438 = vunpack.c.l.b16 %v276
  %v1439 = vunpack.c.h.b16 %v276
  %v1440 = vunpack.c.l.b16 %v277
  %v1441 = vunpack.c.h.b16 %v277
  %v1442 = vunpack.c.l.b16 %v278
  %v1443 = vunpack.c.h.b16 %v278
  %v1444 = vunpack.c.l.b16 %v279
  %v1445 = vunpack.c.h.b16 %v279
  %v1446 = vunpack.c.l.b16 %v280
  %v1447 = vunpack.c.h.b16 %v280
  %v1448 = vunpack.c.l.b16 %v281
  %v1449 = vunpack.c.h.b16 %v281
  %v1450 = vunpack.c.l.b16 %v282
  %v1451 = vunpack.c.h.b16 %v282
  %v1452 = vunpack.c.l.b16 %v283
  %v1453 = vunpack.c.h.b16 %v283
  %v1454 = vunpack.c.l.b16 %v284
  %v1455 = vunpack.c.h.b16 %v284
  %v1456 = vunpack.c.l.b16 %v285
  %v1457 = vunpack.c.h.b16 %v285
  %v1458 = vunpack.c.l.b16 %v286
  %v1459 = vunpack.c.h.b16 %v286
  %v1460 = vunpack.c.l.b16 %v287
  %v1461 = vunpack.c.h.b16 %v287
  %v1462 = vunpack.c.l.b16 %v288
  %v1463 = vunpack.c.h.b16 %v288
  %v1464 = vunpack.c.l.b16 %v289
  %v1465 = vunpack.c.h.b16 %v289
  %v1466 = vunpack.c.l.b16 %v290
  %v1467 = vunpack.c.h.b16 %v290
  %v1468 = vunpack.c.l.b16 %v291
  %v1469 = vunpack.c.h.b16 %v291
  %v1470 = vunpack.c.l.b16 %v292
  %v1471 = vunpack.c.h.b16 %v292
  %v1472 = vunpack.c.l.b16 %v293
  %v1473 = vunpack.c.h.b16 %v293
  %v1474 = vunpack.c.l.b16 %v294
  %v1475 = vunpack.c.h.b16 %v294
  %v1476 = vunpack.c.l.b16 %v295
  %v1477 = vunpack.c.h.b16 %v295
  %v1478 = vunpack.c.l.b16 %v296
  %v1479 = vunpack.c.h.b16 %v296
  %v1480 = vunpack.c.l.b16 %v297
  %v1481 = vunpack.c.h.b16 %v297
  %v1482 = vunpack.c.l.b16 %v298
  %v1483 = vunpack.c.h.b16 %v298
  %v1484 = vunpack.c.l.b16 %v299
  %v1485 = vunpack.c.h.b16 %v299
  %v1486 = vunpack.c.l.b16 %v300
  %v1487 = vunpack.c.h.b16 %v300
  %v1488 = vunpack.c.l.b16 %v301
  %v1489 = vunpack.c.h.b16 %v301
  %v1490 = vunpack.c.l.b16 %v302
  %v1491 = vunpack.c.h.b16 %v302
  %v1492 = vunpack.c.l.b16 %v303
  %v1493 = vunpack.c.h.b16 %v303
  %v1494 = vunpack.c.l.b16 %v304
  %v1495 = vunpack.c.h.b16 %v304
  %v1496 = vunpack.c.l.b16 %v305
  %v1497 = vunpack.c.h.b16 %v305
  %v1498 = vunpack.c.l.b16 %v306
  %v1499 = vunpack.c.h.b16 %v306
  %v1500 = vunpack.c.l.b16 %v307
  %v1501 = vunpack.c.h.b16 %v307
  %v1502 = vunpack.c.l.b16 %v308
  %v1503 = vunpack.c.h.b16 %v308
  %v1504 = vunpack.c.l.b16 %v309
  %v1505 = vunpack.c.h.b16 %v309
  %v1506 = vunpack.c.l.b16 %v310
  %v1507 = vunpack.c.h.b16 %v310
  %v1508 = vunpack.c.l.b16 %v311
  %v1509 = vunpack.c.h.b16 %v311
  %v1510 = vunpack.c.l.b16 %v312
  %v1511 = vunpack.c.h.b16 %v312
  %v1512 = vunpack.c.l.b16 %v313
  %v1513 = vunpack.c.h.b16 %v313
  %v1514 = vunpack.c.l.b16 %v314
  %v1515 = vunpack.c.h.b16 %v314
  %v1516 = vunpack.c.l.b16 %v315
  %v1517 = vunpack.c.h.b16 %v315
  %v1518 = vunpack.c.l.b16 %v316
  %v1519 = vunpack.c.h.b16 %v316
  %v1520 = vunpack.c.l.b16 %v317
  %v1521 = vunpack.c.h.b16 %v317
  %v1522 = vunpack.c.l.b16 %v318
  %v1523 = vunpack.c.h.b16 %v318
  %v1524 = vunpack.c.l.b16 %v319
  %v1525 = vunpack.c.h.b16 %v319
  %v1526 = vunpack.c.l.b16 %v320
  %v1527 = vunpack.c.h.b16 %v320
  %v1528 = vunpack.c.l.b16 %v321
  %v1529 = vunpack.c.h.b16 %v321
  %v1530 = vunpack.c.l.b16 %v322
  %v1531 = vunpack.c.h.b16 %v322
  %v1532 = vunpack.c.l.b16 %v323
  %v1533 = vunpack.c.h.b16 %v323
  %v1534 = vunpack.c.l.b16 %v324
  %v1535 = vunpack.c.h.b16 %v324
  %v1536 = vunpack.c.l.b16 %v325
  %v1537 = vunpack.c.h.b16 %v325
  %v1538 = vunpack.c.l.b16 %v326
  %v1539 = vunpack.c.h.b16 %v326
  %v1540 = vunpack.c.l.b16 %v327
  %v1541 = vunpack.c.h.b16 %v327
  %v1542 = vunpack.c.l.b16 %v328
  %v1543 = vunpack.c.h.b16 %v328
  %v1544 = vunpack.c.l.b16 %v329
  %v1545 = vunpack.c.h.b16 %v329
  %v1546 = vunpack.c.l.b16 %v330
  %v1547 = vunpack.c.h.b16 %v330
  %v1548 = vunpack.c.l.b16 %v331
  %v1549 = vunpack.c.h.b16 %v331
  %v1550 = vunpack.c.l.b16 %v332
  %v1551 = vunpack.c.h.b16 %v332
  %v1552 = vunpack.c.l.b16 %v333
  %v1553 = vunpack.c.h.b16 %v333
  %v1554 = vunpack.c.l.b16 %v334
  %v1555 = vunpack.c.h.b16 %v334
  %v1556 = vunpack.c.l.b16 %v335
  %v1557 = vunpack.c.h.b16 %v335
  %v1558 = vunpack.c.l.b16 %v336
  %v1559 = vunpack.c.h.b16 %v336
  %v1560 = vunpack.c.l.b16 %v337
  %v1561 = vunpack.c.h.b16 %v337
  %v1562 = vunpack.c.l.b16 %v338
  %v1563 = vunpack.c.h.b16 %v338
  %v1564 = vunpack.c.l.b16 %v339
  %v1565 = vunpack.c.h.b16 %v339
  %v1566 = vunpack.c.l.b16 %v340
  %v1567 = vunpack.c.h.b16 %v340
  %v1568 = vunpack.c.l.b16 %v341
  %v1569 = vunpack.c.h.b16 %v341
  %v1570 = vunpack.c.l.b16 %v342
  %v1571 = vunpack.c.h.b16 %v342
  %v1572 = vunpack.c.l.b16 %v343
  %v1573 = vunpack.c.h.b16 %v343
  %v1574 = vunpack.c.l.b16 %v344
  %v1575 = vunpack.c.h.b16 %v344
  %v1576 = vunpack.c.l.b16 %v345
  %v1577 = vunpack.c.h.b16 %v345
  %v1578 = vunpack.c.l.b16 %v346
  %v1579 = vunpack.c.h.b16 %v346
  %v1580 = vunpack.c.l.b16 %v347
  %v1581 = vunpack.c.h.b16 %v347
  %v1582 = vunpack.c.l.b16 %v348
  %v1583 = vunpack.c.h.b16 %v348
  %v1584 = vunpack.c.l.b16 %v349
  %v1585 = vunpack.c.h.b16 %v349
  %v1586 = vunpack.c.l.b16 %v350
  %v1587 = vunpack.c.h.b16 %v350
  %v1588 = vunpack.c.l.b16 %v351
  %v1589 = vunpack.c.h.b16 %v351
  %v1590 = vunpack.c.l.b16 %v352
  %v1591 = vunpack.c.h.b16 %v352
  %v1592 = vunpack.c.l.b16 %v353
  %v1593 = vunpack.c.h.b16 %v353
  %v1594 = vunpack.c.l.b16 %v354
  %v1595 = vunpack.c.h.b16 %v354
  %v1596 = vunpack.c.l.b16 %v355
  %v1597 = vunpack.c.h.b16 %v355
  %v1598 = vunpack.c.l.b16 %v356
  %v1599 = vunpack.c.h.b16 %v356
  %v1600 = vunpack.c.l.b16 %v357
  %v1601 = vunpack.c.h.b16 %v357
  %v1602 = vunpack.c.l.b16 %v358
  %v1603 = vunpack.c.h.b16 %v358
  %v1604 = vunpack.c.l.b16 %v359
  %v1605 = vunpack.c.h.b16 %v359
  %v1606 = vunpack.c.l.b16 %v360
  %v1607 = vunpack.c.h.b16 %v360
  %v1608 = vunpack.c.l.b16 %v361
  %v1609 = vunpack.c.h.b16 %v361
  %v1610 = vunpack.c.l.b16 %v362
  %v1611 = vunpack.c.h.b16 %v362
  %v1612 = vunpack.c.l.b16 %v363
  %v1613 = vunpack.c.h.b16 %v363
  %v1614 = vunpack.c.l.b16 %v364
  %v1615 = vunpack.c.h.b16 %v364
  %v1616 = vunpack.c.l.b16 %v365
  %v1617 = vunpack.c.h.b16 %v365
  %v1618 = vunpack.c.l.b16 %v366
  %v1619 = vunpack.c.h.b16 %v366
  %v1620 = vunpack.c.l.b16 %v367
  %v1621 = vunpack.c.h.b16 %v367
  %v1622 = vunpack.c.l.b16 %v368
  %v1623 = vunpack.c.h.b16 %v368
  %v1624 = vunpack.c.l.b16 %v369
  %v1625 = vunpack.c.h.b16 %v369
  %v1626 = vunpack.c.l.b16 %v370
  %v1627 = vunpack.c.h.b16 %v370
  %v1628 = vunpack.c.l.b16 %v371
  %v1629 = vunpack.c.h.b16 %v371
  %v1630 = vpack.c.b16 %v1186, %v1182
  %v1631 = vpack.c.b16 %v1187, %v1183
  %v1632 = vpack.c.b16 %v1188, %v1184
  %v1633 = vpack.c.b16 %v1189, %v1185
  %v1634 = vpack.c.b16 %v1194, %v1190
  %v1635 = vpack.c.b16 %v1195, %v1191
  %v1636 = vpack.c.b16 %v1196, %v1192
  %v1637 = vpack.c.b16 %v1197, %v1193
  %v1638 = vpack.c.b16 %v1202, %v1198
  %v1639 = vpack.c.b16 %v1203, %v1199
  %v1640 = vpack.c.b16 %v1204, %v1200
  %v1641 = vpack.c.b16 %v1205, %v1201
  %v1642 = vpack.c.b16 %v1210, %v1206
  %v1643 = vpack.c.b16 %v1211, %v1207
  %v1644 = vpack.c.b16 %v1212, %v1208
  %v1645 = vpack.c.b16 %v1213, %v1209
  %v1646 = vpack.c.b16 %v1218, %v1214
  %v1647 = vpack.c.b16 %v1219, %v1215
  %v1648 = vpack.c.b16 %v1220, %v1216
  %v1649 = vpack.c.b16 %v1221, %v1217
  %v1650 = vpack.c.b16 %v1226, %v1222
  %v1651 = vpack.c.b16 %v1227, %v1223
  %v1652 = vpack.c.b16 %v1228, %v1224
  %v1653 = vpack.c.b16 %v1229, %v1225
  %v1654 = vpack.c.b16 %v1234, %v1230
  %v1655 = vpack.c.b16 %v1235, %v1231
  %v1656 = vpack.c.b16 %v1236, %v1232
  %v1657 = vpack.c.b16 %v1237, %v1233
  %v1658 = vpack.c.b16 %v1242, %v1238
  %v1659 = vpack.c.b16 %v1243, %v1239
  %v1660 = vpack.c.b16 %v1244, %v1240
  %v1661 = vpack.c.b16 %v1245, %v1241
  %v1662 = vpack.c.b16 %v1250, %v1246
  %v1663 = vpack.c.b16 %v1251, %v1247
  %v1664 = vpack.c.b16 %v1252, %v1248
  %v1665 = vpack.c.b16 %v1253, %v1249
  %v1666 = vpack.c.b16 %v1258, %v1254
  %v1667 = vpack.c.b16 %v1259, %v1255
  %v1668 = vpack.c.b16 %v1260, %v1256
  %v1669 = vpack.c.b16 %v1261, %v1257
  %v1670 = vpack.c.b16 %v1266, %v1262
  %v1671 = vpack.c.b16 %v1267, %v1263
  %v1672 = vpack.c.b16 %v1268, %v1264
  %v1673 = vpack.c.b16 %v1269, %v1265
  %v1674 = vpack.c.b16 %v1274, %v1270
  %v1675 = vpack.c.b16 %v1275, %v1271
  %v1676 = vpack.c.b16 %v1276, %v1272
  %v1677 = vpack.c.b16 %v1277, %v1273
  %v1678 = vpack.c.b16 %v1282, %v1278
  %v1679 = vpack.c.b16 %v1283, %v1279
  %v1680 = vpack.c.b16 %v1284, %v1280
  %v1681 = vpack.c.b16 %v1285, %v1281
  %v1682 = vpack.c.b16 %v1290, %v1286
  %v1683 = vpack.c.b16 %v1291, %v1287
  %v1684 = vpack.c.b16 %v1292, %v1288
  %v1685 = vpack.c.b16 %v1293, %v1289
  %v1686 = vpack.c.b16 %v1298, %v1294
  %v1687 = vpack.c.b16 %v1299, %v1295
  %v1688 = vpack.c.b16 %v1300, %v1296
  %v1689 = vpack.c.b16 %v1301, %v1297
  %v1690 = vpack.c.b16 %v1306, %v1302
  %v1691 = vpack.c.b16 %v1307, %v1303
  %v1692 = vpack.c.b16 %v1308, %v1304
  %v1693 = vpack.c.b16 %v1309, %v1305
  %v1694 = vpack.c.b16 %v1314, %v1310
  %v1695 = vpack.c.b16 %v1315, %v1311
  %v1696 = vpack.c.b16 %v1316, %v1312
  %v1697 = vpack.c.b16 %v1317, %v1313
  %v1698 = vpack.c.b16 %v1322, %v1318
  %v1699 = vpack.c.b16 %v1323, %v1319
  %v1700 = vpack.c.b16 %v1324, %v1320
  %v1701 = vpack.c.b16 %v1325, %v1321
  %v1702 = vpack.c.b16 %v1330, %v1326
  %v1703 = vpack.c.b16 %v1331, %v1327
  %v1704 = vpack.c.b16 %v1332, %v1328
  %v1705 = vpack.c.b16 %v1333, %v1329
  %v1706 = vpack.c.b16 %v1338, %v1334
  %v1707 = vpack.c.b16 %v1339, %v1335
  %v1708 = vpack.c.b16 %v1340, %v1336
  %v1709 = vpack.c.b16 %v1341, %v1337
  %v1710 = vpack.c.b16 %v1346, %v1342
  %v1711 = vpack.c.b16 %v1347, %v1343
  %v1712 = vpack.c.b16 %v1348, %v1344
  %v1713 = vpack.c.b16 %v1349, %v1345
  %v1714 = vpack.c.b16 %v1354, %v1350
  %v1715 = vpack.c.b16 %v1355, %v1351
  %v1716 = vpack.c.b16 %v1356, %v1352
  %v1717 = vpack.c.b16 %v1357, %v1353
  %v1718 = vpack.c.b16 %v1362, %v1358
  %v1719 = vpack.c.b16 %v1363, %v1359
  %v1720 = vpack.c.b16 %v1364, %v1360
  %v1721 = vpack.c.b16 %v1365, %v1361
  %v1722 = vpack.c.b16 %v1370, %v1366
  %v1723 = vpack.c.b16 %v1371, %v1367
  %v1724 = vpack.c.b16 %v1372, %v1368
  %v1725 = vpack.c.b16 %v1373, %v1369
  %v1726 = vpack.c.b16 %v1378, %v1374
  %v1727 = vpack.c.b16 %v1379, %v1375
  %v1728 = vpack.c.b16 %v1380, %v1376
  %v1729 = vpack.c.b16 %v1381, %v1377
  %v1730 = vpack.c.b16 %v1386, %v1382
  %v1731 = vpack.c.b16 %v1387, %v1383
  %v1732 = vpack.c.b16 %v1388, %v1384
  %v1733 = vpack.c.b16 %v1389, %v1385
  %v1734 = vpack.c.b16 %v1394, %v1390
  %v1735 = vpack.c.b16 %v1395, %v1391
  %v1736 = vpack.c.b16 %v1396, %v1392
  %v1737 = vpack.c.b16 %v1397, %v1393
  %v1738 = vpack.c.b16 %v1402, %v1398
  %v1739 = vpack.c.b16 %v1403, %v1399
  %v1740 = vpack.c.b16 %v1404, %v1400
  %v1741 = vpack.c.b16 %v1405, %v1401
  %v1742 = vpack.c.b16 %v1410, %v1406
  %v1743 = vpack.c.b16 %v1411, %v1407
  %v1744 = vpack.c.b16 %v1412, %v1408
  %v1745 = vpack.c.b16 %v1413, %v1409
  %v1746 = vpack.c.b16 %v1418, %v1414
  %v1747 = vpack.c.b16 %v1419, %v1415
  %v1748 = vpack.c.b16 %v1420, %v1416
  %v1749 = vpack.c.b16 %v1421, %v1417
  %v1750 = vpack.c.b16 %v1426, %v1422
  %v1751 = vpack.c.b16 %v1427, %v1423
  %v1752 = vpack.c.b16 %v1428, %v1424
  %v1753 = vpack.c.b16 %v1429, %v1425
  %v1754 = vpack.c.b16 %v1434, %v1430
  %v1755 = vpack.c.b16 %v1435, %v1431
  %v1756 = vpack.c.b16 %v1436, %v1432
  %v1757 = vpack.c.b16 %v1437, %v1433
  %v1758 = vpack.c.b16 %v1442, %v1438
  %v1759 = vpack.c.b16 %v1443, %v1439
  %v1760 = vpack.c.b16 %v1444, %v1440
  %v1761 = vpack.c.b16 %v1445, %v1441
  %v1762 = vpack.c.b16 %v1450, %v1446
  %v1763 = vpack.c.b16 %v1451, %v1447
  %v1764 = vpack.c.b16 %v1452, %v1448
  %v1765 = vpack.c.b16 %v1453, %v1449
  %v1766 = vpack.c.b16 %v1458, %v1454
  %v1767 = vpack.c.b16 %v1459, %v1455
  %v1768 = vpack.c.b16 %v1460, %v1456
  %v1769 = vpack.c.b16 %v1461, %v1457
  %v1770 = vpack.c.b16 %v1466, %v1462
  %v1771 = vpack.c.b16 %v1467, %v1463
  %v1772 = vpack.c.b16 %v1468, %v1464
  %v1773 = vpack.c.b16 %v1469, %v1465
  %v1774 = vpack.c.b16 %v1474, %v1470
  %v1775 = vpack.c.b16 %v1475, %v1471
  %v1776 = vpack.c.b16 %v1476, %v1472
  %v1777 = vpack.c.b16 %v1477, %v1473
  %v1778 = vpack.c.b16 %v1482, %v1478
  %v1779 = vpack.c.b16 %v1483, %v1479
  %v1780 = vpack.c.b16 %v1484, %v1480
  %v1781 = vpack.c.b16 %v1485, %v1481
  %v1782 = vpack.c.b16 %v1490, %v1486
  %v1783 = vpack.c.b16 %v1491, %v1487
  %v1784 = vpack.c.b16 %v1492, %v1488
  %v1785 = vpack.c.b16 %v1493, %v1489
  %v1786 = vpack.c.b16 %v1498, %v1494
  %v1787 = vpack.c.b16 %v1499, %v1495
  %v1788 = vpack.c.b16 %v1500, %v1496
  %v1789 = vpack.c.b16 %v1501, %v1497
  %v1790 = vpack.c.b16 %v1506, %v1502
  %v1791 = vpack.c.b16 %v1507, %v1503
  %v1792 = vpack.c.b16 %v1508, %v1504
  %v1793 = vpack.c.b16 %v1509, %v1505
  %v1794 = vpack.c.b16 %v1514, %v1510
  %v1795 = vpack.c.b16 %v1515, %v1511
  %v1796 = vpack.c.b16 %v1516, %v1512
  %v1797 = vpack.c.b16 %v1517, %v1513
  %v1798 = vpack.c.b16 %v1522, %v1518
  %v1799 = vpack.c.b16 %v1523, %v1519
  %v1800 = vpack.c.b16 %v1524, %v1520
  %v1801 = vpack.c.b16 %v1525, %v1521
  %v1802 = vpack.c.b16 %v1530, %v1526
  %v1803 = vpack.c.b16 %v1531, %v1527
  %v1804 = vpack.c.b16 %v1532, %v1528
  %v1805 = vpack.c.b16 %v1533, %v1529
  %v1806 = vpack.c.b16 %v1538, %v1534
  %v1807 = vpack.c.b16 %v1539, %v1535
  %v1808 = vpack.c.b16 %v1540, %v1536
  %v1809 = vpack.c.b16 %v1541, %v1537
  %v1810 = vpack.c.b16 %v1546, %v1542
  %v1811 = vpack.c.b16 %v1547, %v1543
  %v1812 = vpack.c.b16 %v1548, %v1544
  %v1813 = vpack.c.b16 %v1549, %v1545
  %v1814 = vpack.c.b16 %v1554, %v1550
  %v1815 = vpack.c.b16 %v1555, %v1551
  %v1816 = vpack.c.b16 %v1556, %v1552
  %v1817 = vpack.c.b16 %v1557, %v1553
  %v1818 = vpack.c.b16 %v1562, %v1558
  %v1819 = vpack.c.b16 %v1563, %v1559
  %v1820 = vpack.c.b16 %v1564, %v1560
  %v1821 = vpack.c.b16 %v1565, %v1561
  %v1822 = vpack.c.b16 %v1570, %v1566
  %v1823 = vpack.c.b16 %v1571, %v1567
  %v1824 = vpack.c.b16 %v1572, %v1568
  %v1825 = vpack.c.b16 %v1573, %v1569
  %v1826 = vpack.c.b16 %v1578, %v1574
  %v1827 = vpack.c.b16 %v1579, %v1575
  %v1828 = vpack.c.b16 %v1580, %v1576
  %v1829 = vpack.c.b16 %v1581, %v1577
  %v1830 = vpack.c.b16 %v1586, %v1582
  %v1831 = vpack.c.b16 %v1587, %v1583
  %v1832 = vpack.c.b16 %v1588, %v1584
  %v1833 = vpack.c.b16 %v1589, %v1585
  %v1834 = vpack.c.b16 %v1594, %v1590
  %v1835 = vpack.c.b16 %v1595, %v1591
  %v1836 = vpack.c.b16 %v1596, %v1592
  %v1837 = vpack.c.b16 %v1597, %v1593
  %v1838 = vpack.c.b16 %v1602, %v1598
  %v1839 = vpack.c.b16 %v1603, %v1599
  %v1840 = vpack.c.b16 %v1604, %v1600
  %v1841 = vpack.c.b16 %v1605, %v1601
  %v1842 = vpack.c.b16 %v1610, %v1606
  %v1843 = vpack.c.b16 %v1611, %v1607
  %v1844 = vpack.c.b16 %v1612, %v1608
  %v1845 = vpack.c.b16 %v1613, %v1609
  %v1846 = vpack.c.b16 %v1618, %v1614
  %v1847 = vpack.c.b16 %v1619, %v1615
  %v1848 = vpack.c.b16 %v1620, %v1616
  %v1849 = vpack.c.b16 %v1621, %v1617
  %v1850 = vpack.c.b16 %v1626, %v1622
  %v1851 = vpack.c.b16 %v1627, %v1623
  %v1852 = vpack.c.b16 %v1628, %v1624
  %v1853 = vpack.c.b16 %v1629, %v1625
  %2078 = vmatpush.bf16.msra.mxu0 %v1658
  %2079 = vmatpush.bf16.msra.mxu0 %v1654
  %2080 = vmatpush.bf16.msra.mxu0 %v1650
  %2081 = vmatpush.bf16.msra.mxu0 %v1646
  %2082 = vmatpush.bf16.msra.mxu0 %v1642
  %2083 = vmatpush.bf16.msra.mxu0 %v1638
  %2084 = vmatpush.bf16.msra.mxu0 %v1634
  %2085 = vmatpush.bf16.msra.mxu0 %v1630
  %2086 = vmatmul.bf16.gmra.mxu0 %v734
  %v2087 = vpop.f32.mrf.mxu0
  %v2088 = vadd.f32 %v374, %v2087
  %v2089 = vpop.f32.mrf.mxu0
  %v2090 = vadd.f32 %v374, %v2089
  %2091 = vmatmul.bf16.gmra.mxu0 %v741
  %v2092 = vpop.f32.mrf.mxu0
  %v2093 = vadd.f32 %v374, %v2092
  %v2094 = vpop.f32.mrf.mxu0
  %v2095 = vadd.f32 %v374, %v2094
  %2096 = vmatmul.bf16.gmra.mxu0 %v748
  %v2097 = vpop.f32.mrf.mxu0
  %v2098 = vadd.f32 %v374, %v2097
  %v2099 = vpop.f32.mrf.mxu0
  %v2100 = vadd.f32 %v374, %v2099
  %2101 = vmatmul.bf16.gmra.mxu0 %v755
  %v2102 = vpop.f32.mrf.mxu0
  %v2103 = vadd.f32 %v374, %v2102
  %v2104 = vpop.f32.mrf.mxu0
  %v2105 = vadd.f32 %v374, %v2104
  %2106 = vmatmul.bf16.gmra.mxu0 %v762
  %v2107 = vpop.f32.mrf.mxu0
  %v2108 = vadd.f32 %v374, %v2107
  %v2109 = vpop.f32.mrf.mxu0
  %v2110 = vadd.f32 %v374, %v2109
  %2111 = vmatmul.bf16.gmra.mxu0 %v769
  %v2112 = vpop.f32.mrf.mxu0
  %v2113 = vadd.f32 %v374, %v2112
  %v2114 = vpop.f32.mrf.mxu0
  %v2115 = vadd.f32 %v374, %v2114
  %2116 = vmatmul.bf16.gmra.mxu0 %v776
  %v2117 = vpop.f32.mrf.mxu0
  %v2118 = vadd.f32 %v374, %v2117
  %v2119 = vpop.f32.mrf.mxu0
  %v2120 = vadd.f32 %v374, %v2119
  %2121 = vmatmul.bf16.gmra.mxu0 %v783
  %v2122 = vpop.f32.mrf.mxu0
  %v2123 = vadd.f32 %v374, %v2122
  %v2124 = vpop.f32.mrf.mxu0
  %v2125 = vadd.f32 %v374, %v2124
  %2126 = vmatmul.bf16.gmra.mxu0 %v790
  %v2127 = vpop.f32.mrf.mxu0
  %v2128 = vadd.f32 %v374, %v2127
  %v2129 = vpop.f32.mrf.mxu0
  %v2130 = vadd.f32 %v374, %v2129
  %2131 = vmatmul.bf16.gmra.mxu0 %v797
  %v2132 = vpop.f32.mrf.mxu0
  %v2133 = vadd.f32 %v374, %v2132
  %v2134 = vpop.f32.mrf.mxu0
  %v2135 = vadd.f32 %v374, %v2134
  %2136 = vmatmul.bf16.gmra.mxu0 %v804
  %v2137 = vpop.f32.mrf.mxu0
  %v2138 = vadd.f32 %v374, %v2137
  %v2139 = vpop.f32.mrf.mxu0
  %v2140 = vadd.f32 %v374, %v2139
  %2141 = vmatmul.bf16.gmra.mxu0 %v811
  %v2142 = vpop.f32.mrf.mxu0
  %v2143 = vadd.f32 %v374, %v2142
  %v2144 = vpop.f32.mrf.mxu0
  %v2145 = vadd.f32 %v374, %v2144
  %2146 = vmatmul.bf16.gmra.mxu0 %v818
  %v2147 = vpop.f32.mrf.mxu0
  %v2148 = vadd.f32 %v374, %v2147
  %v2149 = vpop.f32.mrf.mxu0
  %v2150 = vadd.f32 %v374, %v2149
  %2151 = vmatmul.bf16.gmra.mxu0 %v825
  %v2152 = vpop.f32.mrf.mxu0
  %v2153 = vadd.f32 %v374, %v2152
  %v2154 = vpop.f32.mrf.mxu0
  %v2155 = vadd.f32 %v374, %v2154
  %2156 = vmatmul.bf16.gmra.mxu0 %v832
  %v2157 = vpop.f32.mrf.mxu0
  %v2158 = vadd.f32 %v374, %v2157
  %v2159 = vpop.f32.mrf.mxu0
  %v2160 = vadd.f32 %v374, %v2159
  %2161 = vmatmul.bf16.gmra.mxu0 %v839
  %v2162 = vpop.f32.mrf.mxu0
  %v2163 = vadd.f32 %v374, %v2162
  %v2164 = vpop.f32.mrf.mxu0
  %v2165 = vadd.f32 %v374, %v2164
  %2166 = vdwg.mxu0
  %2167 = vmatpush.bf16.msra.mxu0 %v1690
  %2168 = vmatpush.bf16.msra.mxu0 %v1686
  %2169 = vmatpush.bf16.msra.mxu0 %v1682
  %2170 = vmatpush.bf16.msra.mxu0 %v1678
  %2171 = vmatpush.bf16.msra.mxu0 %v1674
  %2172 = vmatpush.bf16.msra.mxu0 %v1670
  %2173 = vmatpush.bf16.msra.mxu0 %v1666
  %2174 = vmatpush.bf16.msra.mxu0 %v1662
  %2175 = vmatmul.bf16.gmra.mxu0 %v735
  %v2176 = vpop.f32.mrf.mxu0
  %v2177 = vadd.f32 %v2088, %v2176
  %v2178 = vpop.f32.mrf.mxu0
  %v2179 = vadd.f32 %v2090, %v2178
  %2180 = vmatmul.bf16.gmra.mxu0 %v742
  %v2181 = vpop.f32.mrf.mxu0
  %v2182 = vadd.f32 %v2093, %v2181
  %v2183 = vpop.f32.mrf.mxu0
  %v2184 = vadd.f32 %v2095, %v2183
  %2185 = vmatmul.bf16.gmra.mxu0 %v749
  %v2186 = vpop.f32.mrf.mxu0
  %v2187 = vadd.f32 %v2098, %v2186
  %v2188 = vpop.f32.mrf.mxu0
  %v2189 = vadd.f32 %v2100, %v2188
  %2190 = vmatmul.bf16.gmra.mxu0 %v756
  %v2191 = vpop.f32.mrf.mxu0
  %v2192 = vadd.f32 %v2103, %v2191
  %v2193 = vpop.f32.mrf.mxu0
  %v2194 = vadd.f32 %v2105, %v2193
  %2195 = vmatmul.bf16.gmra.mxu0 %v763
  %v2196 = vpop.f32.mrf.mxu0
  %v2197 = vadd.f32 %v2108, %v2196
  %v2198 = vpop.f32.mrf.mxu0
  %v2199 = vadd.f32 %v2110, %v2198
  %2200 = vmatmul.bf16.gmra.mxu0 %v770
  %v2201 = vpop.f32.mrf.mxu0
  %v2202 = vadd.f32 %v2113, %v2201
  %v2203 = vpop.f32.mrf.mxu0
  %v2204 = vadd.f32 %v2115, %v2203
  %2205 = vmatmul.bf16.gmra.mxu0 %v777
  %v2206 = vpop.f32.mrf.mxu0
  %v2207 = vadd.f32 %v2118, %v2206
  %v2208 = vpop.f32.mrf.mxu0
  %v2209 = vadd.f32 %v2120, %v2208
  %2210 = vmatmul.bf16.gmra.mxu0 %v784
  %v2211 = vpop.f32.mrf.mxu0
  %v2212 = vadd.f32 %v2123, %v2211
  %v2213 = vpop.f32.mrf.mxu0
  %v2214 = vadd.f32 %v2125, %v2213
  %2215 = vmatmul.bf16.gmra.mxu0 %v791
  %v2216 = vpop.f32.mrf.mxu0
  %v2217 = vadd.f32 %v2128, %v2216
  %v2218 = vpop.f32.mrf.mxu0
  %v2219 = vadd.f32 %v2130, %v2218
  %2220 = vmatmul.bf16.gmra.mxu0 %v798
  %v2221 = vpop.f32.mrf.mxu0
  %v2222 = vadd.f32 %v2133, %v2221
  %v2223 = vpop.f32.mrf.mxu0
  %v2224 = vadd.f32 %v2135, %v2223
  %2225 = vmatmul.bf16.gmra.mxu0 %v805
  %v2226 = vpop.f32.mrf.mxu0
  %v2227 = vadd.f32 %v2138, %v2226
  %v2228 = vpop.f32.mrf.mxu0
  %v2229 = vadd.f32 %v2140, %v2228
  %2230 = vmatmul.bf16.gmra.mxu0 %v812
  %v2231 = vpop.f32.mrf.mxu0
  %v2232 = vadd.f32 %v2143, %v2231
  %v2233 = vpop.f32.mrf.mxu0
  %v2234 = vadd.f32 %v2145, %v2233
  %2235 = vmatmul.bf16.gmra.mxu0 %v819
  %v2236 = vpop.f32.mrf.mxu0
  %v2237 = vadd.f32 %v2148, %v2236
  %v2238 = vpop.f32.mrf.mxu0
  %v2239 = vadd.f32 %v2150, %v2238
  %2240 = vmatmul.bf16.gmra.mxu0 %v826
  %v2241 = vpop.f32.mrf.mxu0
  %v2242 = vadd.f32 %v2153, %v2241
  %v2243 = vpop.f32.mrf.mxu0
  %v2244 = vadd.f32 %v2155, %v2243
  %2245 = vmatmul.bf16.gmra.mxu0 %v833
  %v2246 = vpop.f32.mrf.mxu0
  %v2247 = vadd.f32 %v2158, %v2246
  %v2248 = vpop.f32.mrf.mxu0
  %v2249 = vadd.f32 %v2160, %v2248
  %2250 = vmatmul.bf16.gmra.mxu0 %v840
  %v2251 = vpop.f32.mrf.mxu0
  %v2252 = vadd.f32 %v2163, %v2251
  %v2253 = vpop.f32.mrf.mxu0
  %v2254 = vadd.f32 %v2165, %v2253
  %2255 = vdwg.mxu0
  %2256 = vmatpush.bf16.msra.mxu0 %v1722
  %2257 = vmatpush.bf16.msra.mxu0 %v1718
  %2258 = vmatpush.bf16.msra.mxu0 %v1714
  %2259 = vmatpush.bf16.msra.mxu0 %v1710
  %2260 = vmatpush.bf16.msra.mxu0 %v1706
  %2261 = vmatpush.bf16.msra.mxu0 %v1702
  %2262 = vmatpush.bf16.msra.mxu0 %v1698
  %2263 = vmatpush.bf16.msra.mxu0 %v1694
  %2264 = vmatmul.bf16.gmra.mxu0 %v736
  %v2265 = vpop.f32.mrf.mxu0
  %v2266 = vadd.f32 %v2177, %v2265
  %v2267 = vpop.f32.mrf.mxu0
  %v2268 = vadd.f32 %v2179, %v2267
  %2269 = vmatmul.bf16.gmra.mxu0 %v743
  %v2270 = vpop.f32.mrf.mxu0
  %v2271 = vadd.f32 %v2182, %v2270
  %v2272 = vpop.f32.mrf.mxu0
  %v2273 = vadd.f32 %v2184, %v2272
  %2274 = vmatmul.bf16.gmra.mxu0 %v750
  %v2275 = vpop.f32.mrf.mxu0
  %v2276 = vadd.f32 %v2187, %v2275
  %v2277 = vpop.f32.mrf.mxu0
  %v2278 = vadd.f32 %v2189, %v2277
  %2279 = vmatmul.bf16.gmra.mxu0 %v757
  %v2280 = vpop.f32.mrf.mxu0
  %v2281 = vadd.f32 %v2192, %v2280
  %v2282 = vpop.f32.mrf.mxu0
  %v2283 = vadd.f32 %v2194, %v2282
  %2284 = vmatmul.bf16.gmra.mxu0 %v764
  %v2285 = vpop.f32.mrf.mxu0
  %v2286 = vadd.f32 %v2197, %v2285
  %v2287 = vpop.f32.mrf.mxu0
  %v2288 = vadd.f32 %v2199, %v2287
  %2289 = vmatmul.bf16.gmra.mxu0 %v771
  %v2290 = vpop.f32.mrf.mxu0
  %v2291 = vadd.f32 %v2202, %v2290
  %v2292 = vpop.f32.mrf.mxu0
  %v2293 = vadd.f32 %v2204, %v2292
  %2294 = vmatmul.bf16.gmra.mxu0 %v778
  %v2295 = vpop.f32.mrf.mxu0
  %v2296 = vadd.f32 %v2207, %v2295
  %v2297 = vpop.f32.mrf.mxu0
  %v2298 = vadd.f32 %v2209, %v2297
  %2299 = vmatmul.bf16.gmra.mxu0 %v785
  %v2300 = vpop.f32.mrf.mxu0
  %v2301 = vadd.f32 %v2212, %v2300
  %v2302 = vpop.f32.mrf.mxu0
  %v2303 = vadd.f32 %v2214, %v2302
  %2304 = vmatmul.bf16.gmra.mxu0 %v792
  %v2305 = vpop.f32.mrf.mxu0
  %v2306 = vadd.f32 %v2217, %v2305
  %v2307 = vpop.f32.mrf.mxu0
  %v2308 = vadd.f32 %v2219, %v2307
  %2309 = vmatmul.bf16.gmra.mxu0 %v799
  %v2310 = vpop.f32.mrf.mxu0
  %v2311 = vadd.f32 %v2222, %v2310
  %v2312 = vpop.f32.mrf.mxu0
  %v2313 = vadd.f32 %v2224, %v2312
  %2314 = vmatmul.bf16.gmra.mxu0 %v806
  %v2315 = vpop.f32.mrf.mxu0
  %v2316 = vadd.f32 %v2227, %v2315
  %v2317 = vpop.f32.mrf.mxu0
  %v2318 = vadd.f32 %v2229, %v2317
  %2319 = vmatmul.bf16.gmra.mxu0 %v813
  %v2320 = vpop.f32.mrf.mxu0
  %v2321 = vadd.f32 %v2232, %v2320
  %v2322 = vpop.f32.mrf.mxu0
  %v2323 = vadd.f32 %v2234, %v2322
  %2324 = vmatmul.bf16.gmra.mxu0 %v820
  %v2325 = vpop.f32.mrf.mxu0
  %v2326 = vadd.f32 %v2237, %v2325
  %v2327 = vpop.f32.mrf.mxu0
  %v2328 = vadd.f32 %v2239, %v2327
  %2329 = vmatmul.bf16.gmra.mxu0 %v827
  %v2330 = vpop.f32.mrf.mxu0
  %v2331 = vadd.f32 %v2242, %v2330
  %v2332 = vpop.f32.mrf.mxu0
  %v2333 = vadd.f32 %v2244, %v2332
  %2334 = vmatmul.bf16.gmra.mxu0 %v834
  %v2335 = vpop.f32.mrf.mxu0
  %v2336 = vadd.f32 %v2247, %v2335
  %v2337 = vpop.f32.mrf.mxu0
  %v2338 = vadd.f32 %v2249, %v2337
  %2339 = vmatmul.bf16.gmra.mxu0 %v841
  %v2340 = vpop.f32.mrf.mxu0
  %v2341 = vadd.f32 %v2252, %v2340
  %v2342 = vpop.f32.mrf.mxu0
  %v2343 = vadd.f32 %v2254, %v2342
  %2344 = vdwg.mxu0
  %2345 = vmatpush.bf16.msra.mxu0 %v1754
  %2346 = vmatpush.bf16.msra.mxu0 %v1750
  %2347 = vmatpush.bf16.msra.mxu0 %v1746
  %2348 = vmatpush.bf16.msra.mxu0 %v1742
  %2349 = vmatpush.bf16.msra.mxu0 %v1738
  %2350 = vmatpush.bf16.msra.mxu0 %v1734
  %2351 = vmatpush.bf16.msra.mxu0 %v1730
  %2352 = vmatpush.bf16.msra.mxu0 %v1726
  %2353 = vmatmul.bf16.gmra.mxu0 %v737
  %v2354 = vpop.f32.mrf.mxu0
  %v2355 = vadd.f32 %v2266, %v2354
  %v2356 = vpop.f32.mrf.mxu0
  %v2357 = vadd.f32 %v2268, %v2356
  %2358 = vmatmul.bf16.gmra.mxu0 %v744
  %v2359 = vpop.f32.mrf.mxu0
  %v2360 = vadd.f32 %v2271, %v2359
  %v2361 = vpop.f32.mrf.mxu0
  %v2362 = vadd.f32 %v2273, %v2361
  %2363 = vmatmul.bf16.gmra.mxu0 %v751
  %v2364 = vpop.f32.mrf.mxu0
  %v2365 = vadd.f32 %v2276, %v2364
  %v2366 = vpop.f32.mrf.mxu0
  %v2367 = vadd.f32 %v2278, %v2366
  %2368 = vmatmul.bf16.gmra.mxu0 %v758
  %v2369 = vpop.f32.mrf.mxu0
  %v2370 = vadd.f32 %v2281, %v2369
  %v2371 = vpop.f32.mrf.mxu0
  %v2372 = vadd.f32 %v2283, %v2371
  %2373 = vmatmul.bf16.gmra.mxu0 %v765
  %v2374 = vpop.f32.mrf.mxu0
  %v2375 = vadd.f32 %v2286, %v2374
  %v2376 = vpop.f32.mrf.mxu0
  %v2377 = vadd.f32 %v2288, %v2376
  %2378 = vmatmul.bf16.gmra.mxu0 %v772
  %v2379 = vpop.f32.mrf.mxu0
  %v2380 = vadd.f32 %v2291, %v2379
  %v2381 = vpop.f32.mrf.mxu0
  %v2382 = vadd.f32 %v2293, %v2381
  %2383 = vmatmul.bf16.gmra.mxu0 %v779
  %v2384 = vpop.f32.mrf.mxu0
  %v2385 = vadd.f32 %v2296, %v2384
  %v2386 = vpop.f32.mrf.mxu0
  %v2387 = vadd.f32 %v2298, %v2386
  %2388 = vmatmul.bf16.gmra.mxu0 %v786
  %v2389 = vpop.f32.mrf.mxu0
  %v2390 = vadd.f32 %v2301, %v2389
  %v2391 = vpop.f32.mrf.mxu0
  %v2392 = vadd.f32 %v2303, %v2391
  %2393 = vmatmul.bf16.gmra.mxu0 %v793
  %v2394 = vpop.f32.mrf.mxu0
  %v2395 = vadd.f32 %v2306, %v2394
  %v2396 = vpop.f32.mrf.mxu0
  %v2397 = vadd.f32 %v2308, %v2396
  %2398 = vmatmul.bf16.gmra.mxu0 %v800
  %v2399 = vpop.f32.mrf.mxu0
  %v2400 = vadd.f32 %v2311, %v2399
  %v2401 = vpop.f32.mrf.mxu0
  %v2402 = vadd.f32 %v2313, %v2401
  %2403 = vmatmul.bf16.gmra.mxu0 %v807
  %v2404 = vpop.f32.mrf.mxu0
  %v2405 = vadd.f32 %v2316, %v2404
  %v2406 = vpop.f32.mrf.mxu0
  %v2407 = vadd.f32 %v2318, %v2406
  %2408 = vmatmul.bf16.gmra.mxu0 %v814
  %v2409 = vpop.f32.mrf.mxu0
  %v2410 = vadd.f32 %v2321, %v2409
  %v2411 = vpop.f32.mrf.mxu0
  %v2412 = vadd.f32 %v2323, %v2411
  %2413 = vmatmul.bf16.gmra.mxu0 %v821
  %v2414 = vpop.f32.mrf.mxu0
  %v2415 = vadd.f32 %v2326, %v2414
  %v2416 = vpop.f32.mrf.mxu0
  %v2417 = vadd.f32 %v2328, %v2416
  %2418 = vmatmul.bf16.gmra.mxu0 %v828
  %v2419 = vpop.f32.mrf.mxu0
  %v2420 = vadd.f32 %v2331, %v2419
  %v2421 = vpop.f32.mrf.mxu0
  %v2422 = vadd.f32 %v2333, %v2421
  %2423 = vmatmul.bf16.gmra.mxu0 %v835
  %v2424 = vpop.f32.mrf.mxu0
  %v2425 = vadd.f32 %v2336, %v2424
  %v2426 = vpop.f32.mrf.mxu0
  %v2427 = vadd.f32 %v2338, %v2426
  %2428 = vmatmul.bf16.gmra.mxu0 %v842
  %v2429 = vpop.f32.mrf.mxu0
  %v2430 = vadd.f32 %v2341, %v2429
  %v2431 = vpop.f32.mrf.mxu0
  %v2432 = vadd.f32 %v2343, %v2431
  %2433 = vdwg.mxu0
  %2434 = vmatpush.bf16.msra.mxu0 %v1786
  %2435 = vmatpush.bf16.msra.mxu0 %v1782
  %2436 = vmatpush.bf16.msra.mxu0 %v1778
  %2437 = vmatpush.bf16.msra.mxu0 %v1774
  %2438 = vmatpush.bf16.msra.mxu0 %v1770
  %2439 = vmatpush.bf16.msra.mxu0 %v1766
  %2440 = vmatpush.bf16.msra.mxu0 %v1762
  %2441 = vmatpush.bf16.msra.mxu0 %v1758
  %2442 = vmatmul.bf16.gmra.mxu0 %v738
  %v2443 = vpop.f32.mrf.mxu0
  %v2444 = vadd.f32 %v2355, %v2443
  %v2445 = vpop.f32.mrf.mxu0
  %v2446 = vadd.f32 %v2357, %v2445
  %2447 = vmatmul.bf16.gmra.mxu0 %v745
  %v2448 = vpop.f32.mrf.mxu0
  %v2449 = vadd.f32 %v2360, %v2448
  %v2450 = vpop.f32.mrf.mxu0
  %v2451 = vadd.f32 %v2362, %v2450
  %2452 = vmatmul.bf16.gmra.mxu0 %v752
  %v2453 = vpop.f32.mrf.mxu0
  %v2454 = vadd.f32 %v2365, %v2453
  %v2455 = vpop.f32.mrf.mxu0
  %v2456 = vadd.f32 %v2367, %v2455
  %2457 = vmatmul.bf16.gmra.mxu0 %v759
  %v2458 = vpop.f32.mrf.mxu0
  %v2459 = vadd.f32 %v2370, %v2458
  %v2460 = vpop.f32.mrf.mxu0
  %v2461 = vadd.f32 %v2372, %v2460
  %2462 = vmatmul.bf16.gmra.mxu0 %v766
  %v2463 = vpop.f32.mrf.mxu0
  %v2464 = vadd.f32 %v2375, %v2463
  %v2465 = vpop.f32.mrf.mxu0
  %v2466 = vadd.f32 %v2377, %v2465
  %2467 = vmatmul.bf16.gmra.mxu0 %v773
  %v2468 = vpop.f32.mrf.mxu0
  %v2469 = vadd.f32 %v2380, %v2468
  %v2470 = vpop.f32.mrf.mxu0
  %v2471 = vadd.f32 %v2382, %v2470
  %2472 = vmatmul.bf16.gmra.mxu0 %v780
  %v2473 = vpop.f32.mrf.mxu0
  %v2474 = vadd.f32 %v2385, %v2473
  %v2475 = vpop.f32.mrf.mxu0
  %v2476 = vadd.f32 %v2387, %v2475
  %2477 = vmatmul.bf16.gmra.mxu0 %v787
  %v2478 = vpop.f32.mrf.mxu0
  %v2479 = vadd.f32 %v2390, %v2478
  %v2480 = vpop.f32.mrf.mxu0
  %v2481 = vadd.f32 %v2392, %v2480
  %2482 = vmatmul.bf16.gmra.mxu0 %v794
  %v2483 = vpop.f32.mrf.mxu0
  %v2484 = vadd.f32 %v2395, %v2483
  %v2485 = vpop.f32.mrf.mxu0
  %v2486 = vadd.f32 %v2397, %v2485
  %2487 = vmatmul.bf16.gmra.mxu0 %v801
  %v2488 = vpop.f32.mrf.mxu0
  %v2489 = vadd.f32 %v2400, %v2488
  %v2490 = vpop.f32.mrf.mxu0
  %v2491 = vadd.f32 %v2402, %v2490
  %2492 = vmatmul.bf16.gmra.mxu0 %v808
  %v2493 = vpop.f32.mrf.mxu0
  %v2494 = vadd.f32 %v2405, %v2493
  %v2495 = vpop.f32.mrf.mxu0
  %v2496 = vadd.f32 %v2407, %v2495
  %2497 = vmatmul.bf16.gmra.mxu0 %v815
  %v2498 = vpop.f32.mrf.mxu0
  %v2499 = vadd.f32 %v2410, %v2498
  %v2500 = vpop.f32.mrf.mxu0
  %v2501 = vadd.f32 %v2412, %v2500
  %2502 = vmatmul.bf16.gmra.mxu0 %v822
  %v2503 = vpop.f32.mrf.mxu0
  %v2504 = vadd.f32 %v2415, %v2503
  %v2505 = vpop.f32.mrf.mxu0
  %v2506 = vadd.f32 %v2417, %v2505
  %2507 = vmatmul.bf16.gmra.mxu0 %v829
  %v2508 = vpop.f32.mrf.mxu0
  %v2509 = vadd.f32 %v2420, %v2508
  %v2510 = vpop.f32.mrf.mxu0
  %v2511 = vadd.f32 %v2422, %v2510
  %2512 = vmatmul.bf16.gmra.mxu0 %v836
  %v2513 = vpop.f32.mrf.mxu0
  %v2514 = vadd.f32 %v2425, %v2513
  %v2515 = vpop.f32.mrf.mxu0
  %v2516 = vadd.f32 %v2427, %v2515
  %2517 = vmatmul.bf16.gmra.mxu0 %v843
  %v2518 = vpop.f32.mrf.mxu0
  %v2519 = vadd.f32 %v2430, %v2518
  %v2520 = vpop.f32.mrf.mxu0
  %v2521 = vadd.f32 %v2432, %v2520
  %2522 = vdwg.mxu0
  %2523 = vmatpush.bf16.msra.mxu0 %v1818
  %2524 = vmatpush.bf16.msra.mxu0 %v1814
  %2525 = vmatpush.bf16.msra.mxu0 %v1810
  %2526 = vmatpush.bf16.msra.mxu0 %v1806
  %2527 = vmatpush.bf16.msra.mxu0 %v1802
  %2528 = vmatpush.bf16.msra.mxu0 %v1798
  %2529 = vmatpush.bf16.msra.mxu0 %v1794
  %2530 = vmatpush.bf16.msra.mxu0 %v1790
  %2531 = vmatmul.bf16.gmra.mxu0 %v739
  %v2532 = vpop.f32.mrf.mxu0
  %v2533 = vadd.f32 %v2444, %v2532
  %v2534 = vpop.f32.mrf.mxu0
  %v2535 = vadd.f32 %v2446, %v2534
  %2536 = vmatmul.bf16.gmra.mxu0 %v746
  %v2537 = vpop.f32.mrf.mxu0
  %v2538 = vadd.f32 %v2449, %v2537
  %v2539 = vpop.f32.mrf.mxu0
  %v2540 = vadd.f32 %v2451, %v2539
  %2541 = vmatmul.bf16.gmra.mxu0 %v753
  %v2542 = vpop.f32.mrf.mxu0
  %v2543 = vadd.f32 %v2454, %v2542
  %v2544 = vpop.f32.mrf.mxu0
  %v2545 = vadd.f32 %v2456, %v2544
  %2546 = vmatmul.bf16.gmra.mxu0 %v760
  %v2547 = vpop.f32.mrf.mxu0
  %v2548 = vadd.f32 %v2459, %v2547
  %v2549 = vpop.f32.mrf.mxu0
  %v2550 = vadd.f32 %v2461, %v2549
  %2551 = vmatmul.bf16.gmra.mxu0 %v767
  %v2552 = vpop.f32.mrf.mxu0
  %v2553 = vadd.f32 %v2464, %v2552
  %v2554 = vpop.f32.mrf.mxu0
  %v2555 = vadd.f32 %v2466, %v2554
  %2556 = vmatmul.bf16.gmra.mxu0 %v774
  %v2557 = vpop.f32.mrf.mxu0
  %v2558 = vadd.f32 %v2469, %v2557
  %v2559 = vpop.f32.mrf.mxu0
  %v2560 = vadd.f32 %v2471, %v2559
  %2561 = vmatmul.bf16.gmra.mxu0 %v781
  %v2562 = vpop.f32.mrf.mxu0
  %v2563 = vadd.f32 %v2474, %v2562
  %v2564 = vpop.f32.mrf.mxu0
  %v2565 = vadd.f32 %v2476, %v2564
  %2566 = vmatmul.bf16.gmra.mxu0 %v788
  %v2567 = vpop.f32.mrf.mxu0
  %v2568 = vadd.f32 %v2479, %v2567
  %v2569 = vpop.f32.mrf.mxu0
  %v2570 = vadd.f32 %v2481, %v2569
  %2571 = vmatmul.bf16.gmra.mxu0 %v795
  %v2572 = vpop.f32.mrf.mxu0
  %v2573 = vadd.f32 %v2484, %v2572
  %v2574 = vpop.f32.mrf.mxu0
  %v2575 = vadd.f32 %v2486, %v2574
  %2576 = vmatmul.bf16.gmra.mxu0 %v802
  %v2577 = vpop.f32.mrf.mxu0
  %v2578 = vadd.f32 %v2489, %v2577
  %v2579 = vpop.f32.mrf.mxu0
  %v2580 = vadd.f32 %v2491, %v2579
  %2581 = vmatmul.bf16.gmra.mxu0 %v809
  %v2582 = vpop.f32.mrf.mxu0
  %v2583 = vadd.f32 %v2494, %v2582
  %v2584 = vpop.f32.mrf.mxu0
  %v2585 = vadd.f32 %v2496, %v2584
  %2586 = vmatmul.bf16.gmra.mxu0 %v816
  %v2587 = vpop.f32.mrf.mxu0
  %v2588 = vadd.f32 %v2499, %v2587
  %v2589 = vpop.f32.mrf.mxu0
  %v2590 = vadd.f32 %v2501, %v2589
  %2591 = vmatmul.bf16.gmra.mxu0 %v823
  %v2592 = vpop.f32.mrf.mxu0
  %v2593 = vadd.f32 %v2504, %v2592
  %v2594 = vpop.f32.mrf.mxu0
  %v2595 = vadd.f32 %v2506, %v2594
  %2596 = vmatmul.bf16.gmra.mxu0 %v830
  %v2597 = vpop.f32.mrf.mxu0
  %v2598 = vadd.f32 %v2509, %v2597
  %v2599 = vpop.f32.mrf.mxu0
  %v2600 = vadd.f32 %v2511, %v2599
  %2601 = vmatmul.bf16.gmra.mxu0 %v837
  %v2602 = vpop.f32.mrf.mxu0
  %v2603 = vadd.f32 %v2514, %v2602
  %v2604 = vpop.f32.mrf.mxu0
  %v2605 = vadd.f32 %v2516, %v2604
  %2606 = vmatmul.bf16.gmra.mxu0 %v844
  %v2607 = vpop.f32.mrf.mxu0
  %v2608 = vadd.f32 %v2519, %v2607
  %v2609 = vpop.f32.mrf.mxu0
  %v2610 = vadd.f32 %v2521, %v2609
  %2611 = vdwg.mxu0
  %2612 = vmatpush.bf16.msra.mxu0 %v1850
  %2613 = vmatpush.bf16.msra.mxu0 %v1846
  %2614 = vmatpush.bf16.msra.mxu0 %v1842
  %2615 = vmatpush.bf16.msra.mxu0 %v1838
  %2616 = vmatpush.bf16.msra.mxu0 %v1834
  %2617 = vmatpush.bf16.msra.mxu0 %v1830
  %2618 = vmatpush.bf16.msra.mxu0 %v1826
  %2619 = vmatpush.bf16.msra.mxu0 %v1822
  %2620 = vmatmul.bf16.gmra.mxu0 %v740
  %v2621 = vpop.f32.mrf.mxu0
  %v2622 = vadd.f32 %v2533, %v2621
  %v2623 = vpop.f32.mrf.mxu0
  %v2624 = vadd.f32 %v2535, %v2623
  %2625 = vmatmul.bf16.gmra.mxu0 %v747
  %v2626 = vpop.f32.mrf.mxu0
  %v2627 = vadd.f32 %v2538, %v2626
  %v2628 = vpop.f32.mrf.mxu0
  %v2629 = vadd.f32 %v2540, %v2628
  %2630 = vmatmul.bf16.gmra.mxu0 %v754
  %v2631 = vpop.f32.mrf.mxu0
  %v2632 = vadd.f32 %v2543, %v2631
  %v2633 = vpop.f32.mrf.mxu0
  %v2634 = vadd.f32 %v2545, %v2633
  %2635 = vmatmul.bf16.gmra.mxu0 %v761
  %v2636 = vpop.f32.mrf.mxu0
  %v2637 = vadd.f32 %v2548, %v2636
  %v2638 = vpop.f32.mrf.mxu0
  %v2639 = vadd.f32 %v2550, %v2638
  %2640 = vmatmul.bf16.gmra.mxu0 %v768
  %v2641 = vpop.f32.mrf.mxu0
  %v2642 = vadd.f32 %v2553, %v2641
  %v2643 = vpop.f32.mrf.mxu0
  %v2644 = vadd.f32 %v2555, %v2643
  %2645 = vmatmul.bf16.gmra.mxu0 %v775
  %v2646 = vpop.f32.mrf.mxu0
  %v2647 = vadd.f32 %v2558, %v2646
  %v2648 = vpop.f32.mrf.mxu0
  %v2649 = vadd.f32 %v2560, %v2648
  %2650 = vmatmul.bf16.gmra.mxu0 %v782
  %v2651 = vpop.f32.mrf.mxu0
  %v2652 = vadd.f32 %v2563, %v2651
  %v2653 = vpop.f32.mrf.mxu0
  %v2654 = vadd.f32 %v2565, %v2653
  %2655 = vmatmul.bf16.gmra.mxu0 %v789
  %v2656 = vpop.f32.mrf.mxu0
  %v2657 = vadd.f32 %v2568, %v2656
  %v2658 = vpop.f32.mrf.mxu0
  %v2659 = vadd.f32 %v2570, %v2658
  %2660 = vmatmul.bf16.gmra.mxu0 %v796
  %v2661 = vpop.f32.mrf.mxu0
  %v2662 = vadd.f32 %v2573, %v2661
  %v2663 = vpop.f32.mrf.mxu0
  %v2664 = vadd.f32 %v2575, %v2663
  %2665 = vmatmul.bf16.gmra.mxu0 %v803
  %v2666 = vpop.f32.mrf.mxu0
  %v2667 = vadd.f32 %v2578, %v2666
  %v2668 = vpop.f32.mrf.mxu0
  %v2669 = vadd.f32 %v2580, %v2668
  %2670 = vmatmul.bf16.gmra.mxu0 %v810
  %v2671 = vpop.f32.mrf.mxu0
  %v2672 = vadd.f32 %v2583, %v2671
  %v2673 = vpop.f32.mrf.mxu0
  %v2674 = vadd.f32 %v2585, %v2673
  %2675 = vmatmul.bf16.gmra.mxu0 %v817
  %v2676 = vpop.f32.mrf.mxu0
  %v2677 = vadd.f32 %v2588, %v2676
  %v2678 = vpop.f32.mrf.mxu0
  %v2679 = vadd.f32 %v2590, %v2678
  %2680 = vmatmul.bf16.gmra.mxu0 %v824
  %v2681 = vpop.f32.mrf.mxu0
  %v2682 = vadd.f32 %v2593, %v2681
  %v2683 = vpop.f32.mrf.mxu0
  %v2684 = vadd.f32 %v2595, %v2683
  %2685 = vmatmul.bf16.gmra.mxu0 %v831
  %v2686 = vpop.f32.mrf.mxu0
  %v2687 = vadd.f32 %v2598, %v2686
  %v2688 = vpop.f32.mrf.mxu0
  %v2689 = vadd.f32 %v2600, %v2688
  %2690 = vmatmul.bf16.gmra.mxu0 %v838
  %v2691 = vpop.f32.mrf.mxu0
  %v2692 = vadd.f32 %v2603, %v2691
  %v2693 = vpop.f32.mrf.mxu0
  %v2694 = vadd.f32 %v2605, %v2693
  %2695 = vmatmul.bf16.gmra.mxu0 %v845
  %v2696 = vpop.f32.mrf.mxu0
  %v2697 = vadd.f32 %v2608, %v2696
  %v2698 = vpop.f32.mrf.mxu0
  %v2699 = vadd.f32 %v2610, %v2698
  %2700 = vdwg.mxu0
  %2701 = vmatpush.bf16.msra.mxu0 %v1659
  %2702 = vmatpush.bf16.msra.mxu0 %v1655
  %2703 = vmatpush.bf16.msra.mxu0 %v1651
  %2704 = vmatpush.bf16.msra.mxu0 %v1647
  %2705 = vmatpush.bf16.msra.mxu0 %v1643
  %2706 = vmatpush.bf16.msra.mxu0 %v1639
  %2707 = vmatpush.bf16.msra.mxu0 %v1635
  %2708 = vmatpush.bf16.msra.mxu0 %v1631
  %2709 = vmatmul.bf16.gmra.mxu0 %v734
  %v2710 = vpop.f32.mrf.mxu0
  %v2711 = vadd.f32 %v375, %v2710
  %v2712 = vpop.f32.mrf.mxu0
  %v2713 = vadd.f32 %v375, %v2712
  %2714 = vmatmul.bf16.gmra.mxu0 %v741
  %v2715 = vpop.f32.mrf.mxu0
  %v2716 = vadd.f32 %v375, %v2715
  %v2717 = vpop.f32.mrf.mxu0
  %v2718 = vadd.f32 %v375, %v2717
  %2719 = vmatmul.bf16.gmra.mxu0 %v748
  %v2720 = vpop.f32.mrf.mxu0
  %v2721 = vadd.f32 %v375, %v2720
  %v2722 = vpop.f32.mrf.mxu0
  %v2723 = vadd.f32 %v375, %v2722
  %2724 = vmatmul.bf16.gmra.mxu0 %v755
  %v2725 = vpop.f32.mrf.mxu0
  %v2726 = vadd.f32 %v375, %v2725
  %v2727 = vpop.f32.mrf.mxu0
  %v2728 = vadd.f32 %v375, %v2727
  %2729 = vmatmul.bf16.gmra.mxu0 %v762
  %v2730 = vpop.f32.mrf.mxu0
  %v2731 = vadd.f32 %v375, %v2730
  %v2732 = vpop.f32.mrf.mxu0
  %v2733 = vadd.f32 %v375, %v2732
  %2734 = vmatmul.bf16.gmra.mxu0 %v769
  %v2735 = vpop.f32.mrf.mxu0
  %v2736 = vadd.f32 %v375, %v2735
  %v2737 = vpop.f32.mrf.mxu0
  %v2738 = vadd.f32 %v375, %v2737
  %2739 = vmatmul.bf16.gmra.mxu0 %v776
  %v2740 = vpop.f32.mrf.mxu0
  %v2741 = vadd.f32 %v375, %v2740
  %v2742 = vpop.f32.mrf.mxu0
  %v2743 = vadd.f32 %v375, %v2742
  %2744 = vmatmul.bf16.gmra.mxu0 %v783
  %v2745 = vpop.f32.mrf.mxu0
  %v2746 = vadd.f32 %v375, %v2745
  %v2747 = vpop.f32.mrf.mxu0
  %v2748 = vadd.f32 %v375, %v2747
  %2749 = vmatmul.bf16.gmra.mxu0 %v790
  %v2750 = vpop.f32.mrf.mxu0
  %v2751 = vadd.f32 %v375, %v2750
  %v2752 = vpop.f32.mrf.mxu0
  %v2753 = vadd.f32 %v375, %v2752
  %2754 = vmatmul.bf16.gmra.mxu0 %v797
  %v2755 = vpop.f32.mrf.mxu0
  %v2756 = vadd.f32 %v375, %v2755
  %v2757 = vpop.f32.mrf.mxu0
  %v2758 = vadd.f32 %v375, %v2757
  %2759 = vmatmul.bf16.gmra.mxu0 %v804
  %v2760 = vpop.f32.mrf.mxu0
  %v2761 = vadd.f32 %v375, %v2760
  %v2762 = vpop.f32.mrf.mxu0
  %v2763 = vadd.f32 %v375, %v2762
  %2764 = vmatmul.bf16.gmra.mxu0 %v811
  %v2765 = vpop.f32.mrf.mxu0
  %v2766 = vadd.f32 %v375, %v2765
  %v2767 = vpop.f32.mrf.mxu0
  %v2768 = vadd.f32 %v375, %v2767
  %2769 = vmatmul.bf16.gmra.mxu0 %v818
  %v2770 = vpop.f32.mrf.mxu0
  %v2771 = vadd.f32 %v375, %v2770
  %v2772 = vpop.f32.mrf.mxu0
  %v2773 = vadd.f32 %v375, %v2772
  %2774 = vmatmul.bf16.gmra.mxu0 %v825
  %v2775 = vpop.f32.mrf.mxu0
  %v2776 = vadd.f32 %v375, %v2775
  %v2777 = vpop.f32.mrf.mxu0
  %v2778 = vadd.f32 %v375, %v2777
  %2779 = vmatmul.bf16.gmra.mxu0 %v832
  %v2780 = vpop.f32.mrf.mxu0
  %v2781 = vadd.f32 %v375, %v2780
  %v2782 = vpop.f32.mrf.mxu0
  %v2783 = vadd.f32 %v375, %v2782
  %2784 = vmatmul.bf16.gmra.mxu0 %v839
  %v2785 = vpop.f32.mrf.mxu0
  %v2786 = vadd.f32 %v375, %v2785
  %v2787 = vpop.f32.mrf.mxu0
  %v2788 = vadd.f32 %v375, %v2787
  %2789 = vdwg.mxu0
  %2790 = vmatpush.bf16.msra.mxu0 %v1691
  %2791 = vmatpush.bf16.msra.mxu0 %v1687
  %2792 = vmatpush.bf16.msra.mxu0 %v1683
  %2793 = vmatpush.bf16.msra.mxu0 %v1679
  %2794 = vmatpush.bf16.msra.mxu0 %v1675
  %2795 = vmatpush.bf16.msra.mxu0 %v1671
  %2796 = vmatpush.bf16.msra.mxu0 %v1667
  %2797 = vmatpush.bf16.msra.mxu0 %v1663
  %2798 = vmatmul.bf16.gmra.mxu0 %v735
  %v2799 = vpop.f32.mrf.mxu0
  %v2800 = vadd.f32 %v2711, %v2799
  %v2801 = vpop.f32.mrf.mxu0
  %v2802 = vadd.f32 %v2713, %v2801
  %2803 = vmatmul.bf16.gmra.mxu0 %v742
  %v2804 = vpop.f32.mrf.mxu0
  %v2805 = vadd.f32 %v2716, %v2804
  %v2806 = vpop.f32.mrf.mxu0
  %v2807 = vadd.f32 %v2718, %v2806
  %2808 = vmatmul.bf16.gmra.mxu0 %v749
  %v2809 = vpop.f32.mrf.mxu0
  %v2810 = vadd.f32 %v2721, %v2809
  %v2811 = vpop.f32.mrf.mxu0
  %v2812 = vadd.f32 %v2723, %v2811
  %2813 = vmatmul.bf16.gmra.mxu0 %v756
  %v2814 = vpop.f32.mrf.mxu0
  %v2815 = vadd.f32 %v2726, %v2814
  %v2816 = vpop.f32.mrf.mxu0
  %v2817 = vadd.f32 %v2728, %v2816
  %2818 = vmatmul.bf16.gmra.mxu0 %v763
  %v2819 = vpop.f32.mrf.mxu0
  %v2820 = vadd.f32 %v2731, %v2819
  %v2821 = vpop.f32.mrf.mxu0
  %v2822 = vadd.f32 %v2733, %v2821
  %2823 = vmatmul.bf16.gmra.mxu0 %v770
  %v2824 = vpop.f32.mrf.mxu0
  %v2825 = vadd.f32 %v2736, %v2824
  %v2826 = vpop.f32.mrf.mxu0
  %v2827 = vadd.f32 %v2738, %v2826
  %2828 = vmatmul.bf16.gmra.mxu0 %v777
  %v2829 = vpop.f32.mrf.mxu0
  %v2830 = vadd.f32 %v2741, %v2829
  %v2831 = vpop.f32.mrf.mxu0
  %v2832 = vadd.f32 %v2743, %v2831
  %2833 = vmatmul.bf16.gmra.mxu0 %v784
  %v2834 = vpop.f32.mrf.mxu0
  %v2835 = vadd.f32 %v2746, %v2834
  %v2836 = vpop.f32.mrf.mxu0
  %v2837 = vadd.f32 %v2748, %v2836
  %2838 = vmatmul.bf16.gmra.mxu0 %v791
  %v2839 = vpop.f32.mrf.mxu0
  %v2840 = vadd.f32 %v2751, %v2839
  %v2841 = vpop.f32.mrf.mxu0
  %v2842 = vadd.f32 %v2753, %v2841
  %2843 = vmatmul.bf16.gmra.mxu0 %v798
  %v2844 = vpop.f32.mrf.mxu0
  %v2845 = vadd.f32 %v2756, %v2844
  %v2846 = vpop.f32.mrf.mxu0
  %v2847 = vadd.f32 %v2758, %v2846
  %2848 = vmatmul.bf16.gmra.mxu0 %v805
  %v2849 = vpop.f32.mrf.mxu0
  %v2850 = vadd.f32 %v2761, %v2849
  %v2851 = vpop.f32.mrf.mxu0
  %v2852 = vadd.f32 %v2763, %v2851
  %2853 = vmatmul.bf16.gmra.mxu0 %v812
  %v2854 = vpop.f32.mrf.mxu0
  %v2855 = vadd.f32 %v2766, %v2854
  %v2856 = vpop.f32.mrf.mxu0
  %v2857 = vadd.f32 %v2768, %v2856
  %2858 = vmatmul.bf16.gmra.mxu0 %v819
  %v2859 = vpop.f32.mrf.mxu0
  %v2860 = vadd.f32 %v2771, %v2859
  %v2861 = vpop.f32.mrf.mxu0
  %v2862 = vadd.f32 %v2773, %v2861
  %2863 = vmatmul.bf16.gmra.mxu0 %v826
  %v2864 = vpop.f32.mrf.mxu0
  %v2865 = vadd.f32 %v2776, %v2864
  %v2866 = vpop.f32.mrf.mxu0
  %v2867 = vadd.f32 %v2778, %v2866
  %2868 = vmatmul.bf16.gmra.mxu0 %v833
  %v2869 = vpop.f32.mrf.mxu0
  %v2870 = vadd.f32 %v2781, %v2869
  %v2871 = vpop.f32.mrf.mxu0
  %v2872 = vadd.f32 %v2783, %v2871
  %2873 = vmatmul.bf16.gmra.mxu0 %v840
  %v2874 = vpop.f32.mrf.mxu0
  %v2875 = vadd.f32 %v2786, %v2874
  %v2876 = vpop.f32.mrf.mxu0
  %v2877 = vadd.f32 %v2788, %v2876
  %2878 = vdwg.mxu0
  %2879 = vmatpush.bf16.msra.mxu0 %v1723
  %2880 = vmatpush.bf16.msra.mxu0 %v1719
  %2881 = vmatpush.bf16.msra.mxu0 %v1715
  %2882 = vmatpush.bf16.msra.mxu0 %v1711
  %2883 = vmatpush.bf16.msra.mxu0 %v1707
  %2884 = vmatpush.bf16.msra.mxu0 %v1703
  %2885 = vmatpush.bf16.msra.mxu0 %v1699
  %2886 = vmatpush.bf16.msra.mxu0 %v1695
  %2887 = vmatmul.bf16.gmra.mxu0 %v736
  %v2888 = vpop.f32.mrf.mxu0
  %v2889 = vadd.f32 %v2800, %v2888
  %v2890 = vpop.f32.mrf.mxu0
  %v2891 = vadd.f32 %v2802, %v2890
  %2892 = vmatmul.bf16.gmra.mxu0 %v743
  %v2893 = vpop.f32.mrf.mxu0
  %v2894 = vadd.f32 %v2805, %v2893
  %v2895 = vpop.f32.mrf.mxu0
  %v2896 = vadd.f32 %v2807, %v2895
  %2897 = vmatmul.bf16.gmra.mxu0 %v750
  %v2898 = vpop.f32.mrf.mxu0
  %v2899 = vadd.f32 %v2810, %v2898
  %v2900 = vpop.f32.mrf.mxu0
  %v2901 = vadd.f32 %v2812, %v2900
  %2902 = vmatmul.bf16.gmra.mxu0 %v757
  %v2903 = vpop.f32.mrf.mxu0
  %v2904 = vadd.f32 %v2815, %v2903
  %v2905 = vpop.f32.mrf.mxu0
  %v2906 = vadd.f32 %v2817, %v2905
  %2907 = vmatmul.bf16.gmra.mxu0 %v764
  %v2908 = vpop.f32.mrf.mxu0
  %v2909 = vadd.f32 %v2820, %v2908
  %v2910 = vpop.f32.mrf.mxu0
  %v2911 = vadd.f32 %v2822, %v2910
  %2912 = vmatmul.bf16.gmra.mxu0 %v771
  %v2913 = vpop.f32.mrf.mxu0
  %v2914 = vadd.f32 %v2825, %v2913
  %v2915 = vpop.f32.mrf.mxu0
  %v2916 = vadd.f32 %v2827, %v2915
  %2917 = vmatmul.bf16.gmra.mxu0 %v778
  %v2918 = vpop.f32.mrf.mxu0
  %v2919 = vadd.f32 %v2830, %v2918
  %v2920 = vpop.f32.mrf.mxu0
  %v2921 = vadd.f32 %v2832, %v2920
  %2922 = vmatmul.bf16.gmra.mxu0 %v785
  %v2923 = vpop.f32.mrf.mxu0
  %v2924 = vadd.f32 %v2835, %v2923
  %v2925 = vpop.f32.mrf.mxu0
  %v2926 = vadd.f32 %v2837, %v2925
  %2927 = vmatmul.bf16.gmra.mxu0 %v792
  %v2928 = vpop.f32.mrf.mxu0
  %v2929 = vadd.f32 %v2840, %v2928
  %v2930 = vpop.f32.mrf.mxu0
  %v2931 = vadd.f32 %v2842, %v2930
  %2932 = vmatmul.bf16.gmra.mxu0 %v799
  %v2933 = vpop.f32.mrf.mxu0
  %v2934 = vadd.f32 %v2845, %v2933
  %v2935 = vpop.f32.mrf.mxu0
  %v2936 = vadd.f32 %v2847, %v2935
  %2937 = vmatmul.bf16.gmra.mxu0 %v806
  %v2938 = vpop.f32.mrf.mxu0
  %v2939 = vadd.f32 %v2850, %v2938
  %v2940 = vpop.f32.mrf.mxu0
  %v2941 = vadd.f32 %v2852, %v2940
  %2942 = vmatmul.bf16.gmra.mxu0 %v813
  %v2943 = vpop.f32.mrf.mxu0
  %v2944 = vadd.f32 %v2855, %v2943
  %v2945 = vpop.f32.mrf.mxu0
  %v2946 = vadd.f32 %v2857, %v2945
  %2947 = vmatmul.bf16.gmra.mxu0 %v820
  %v2948 = vpop.f32.mrf.mxu0
  %v2949 = vadd.f32 %v2860, %v2948
  %v2950 = vpop.f32.mrf.mxu0
  %v2951 = vadd.f32 %v2862, %v2950
  %2952 = vmatmul.bf16.gmra.mxu0 %v827
  %v2953 = vpop.f32.mrf.mxu0
  %v2954 = vadd.f32 %v2865, %v2953
  %v2955 = vpop.f32.mrf.mxu0
  %v2956 = vadd.f32 %v2867, %v2955
  %2957 = vmatmul.bf16.gmra.mxu0 %v834
  %v2958 = vpop.f32.mrf.mxu0
  %v2959 = vadd.f32 %v2870, %v2958
  %v2960 = vpop.f32.mrf.mxu0
  %v2961 = vadd.f32 %v2872, %v2960
  %2962 = vmatmul.bf16.gmra.mxu0 %v841
  %v2963 = vpop.f32.mrf.mxu0
  %v2964 = vadd.f32 %v2875, %v2963
  %v2965 = vpop.f32.mrf.mxu0
  %v2966 = vadd.f32 %v2877, %v2965
  %2967 = vdwg.mxu0
  %2968 = vmatpush.bf16.msra.mxu0 %v1755
  %2969 = vmatpush.bf16.msra.mxu0 %v1751
  %2970 = vmatpush.bf16.msra.mxu0 %v1747
  %2971 = vmatpush.bf16.msra.mxu0 %v1743
  %2972 = vmatpush.bf16.msra.mxu0 %v1739
  %2973 = vmatpush.bf16.msra.mxu0 %v1735
  %2974 = vmatpush.bf16.msra.mxu0 %v1731
  %2975 = vmatpush.bf16.msra.mxu0 %v1727
  %2976 = vmatmul.bf16.gmra.mxu0 %v737
  %v2977 = vpop.f32.mrf.mxu0
  %v2978 = vadd.f32 %v2889, %v2977
  %v2979 = vpop.f32.mrf.mxu0
  %v2980 = vadd.f32 %v2891, %v2979
  %2981 = vmatmul.bf16.gmra.mxu0 %v744
  %v2982 = vpop.f32.mrf.mxu0
  %v2983 = vadd.f32 %v2894, %v2982
  %v2984 = vpop.f32.mrf.mxu0
  %v2985 = vadd.f32 %v2896, %v2984
  %2986 = vmatmul.bf16.gmra.mxu0 %v751
  %v2987 = vpop.f32.mrf.mxu0
  %v2988 = vadd.f32 %v2899, %v2987
  %v2989 = vpop.f32.mrf.mxu0
  %v2990 = vadd.f32 %v2901, %v2989
  %2991 = vmatmul.bf16.gmra.mxu0 %v758
  %v2992 = vpop.f32.mrf.mxu0
  %v2993 = vadd.f32 %v2904, %v2992
  %v2994 = vpop.f32.mrf.mxu0
  %v2995 = vadd.f32 %v2906, %v2994
  %2996 = vmatmul.bf16.gmra.mxu0 %v765
  %v2997 = vpop.f32.mrf.mxu0
  %v2998 = vadd.f32 %v2909, %v2997
  %v2999 = vpop.f32.mrf.mxu0
  %v3000 = vadd.f32 %v2911, %v2999
  %3001 = vmatmul.bf16.gmra.mxu0 %v772
  %v3002 = vpop.f32.mrf.mxu0
  %v3003 = vadd.f32 %v2914, %v3002
  %v3004 = vpop.f32.mrf.mxu0
  %v3005 = vadd.f32 %v2916, %v3004
  %3006 = vmatmul.bf16.gmra.mxu0 %v779
  %v3007 = vpop.f32.mrf.mxu0
  %v3008 = vadd.f32 %v2919, %v3007
  %v3009 = vpop.f32.mrf.mxu0
  %v3010 = vadd.f32 %v2921, %v3009
  %3011 = vmatmul.bf16.gmra.mxu0 %v786
  %v3012 = vpop.f32.mrf.mxu0
  %v3013 = vadd.f32 %v2924, %v3012
  %v3014 = vpop.f32.mrf.mxu0
  %v3015 = vadd.f32 %v2926, %v3014
  %3016 = vmatmul.bf16.gmra.mxu0 %v793
  %v3017 = vpop.f32.mrf.mxu0
  %v3018 = vadd.f32 %v2929, %v3017
  %v3019 = vpop.f32.mrf.mxu0
  %v3020 = vadd.f32 %v2931, %v3019
  %3021 = vmatmul.bf16.gmra.mxu0 %v800
  %v3022 = vpop.f32.mrf.mxu0
  %v3023 = vadd.f32 %v2934, %v3022
  %v3024 = vpop.f32.mrf.mxu0
  %v3025 = vadd.f32 %v2936, %v3024
  %3026 = vmatmul.bf16.gmra.mxu0 %v807
  %v3027 = vpop.f32.mrf.mxu0
  %v3028 = vadd.f32 %v2939, %v3027
  %v3029 = vpop.f32.mrf.mxu0
  %v3030 = vadd.f32 %v2941, %v3029
  %3031 = vmatmul.bf16.gmra.mxu0 %v814
  %v3032 = vpop.f32.mrf.mxu0
  %v3033 = vadd.f32 %v2944, %v3032
  %v3034 = vpop.f32.mrf.mxu0
  %v3035 = vadd.f32 %v2946, %v3034
  %3036 = vmatmul.bf16.gmra.mxu0 %v821
  %v3037 = vpop.f32.mrf.mxu0
  %v3038 = vadd.f32 %v2949, %v3037
  %v3039 = vpop.f32.mrf.mxu0
  %v3040 = vadd.f32 %v2951, %v3039
  %3041 = vmatmul.bf16.gmra.mxu0 %v828
  %v3042 = vpop.f32.mrf.mxu0
  %v3043 = vadd.f32 %v2954, %v3042
  %v3044 = vpop.f32.mrf.mxu0
  %v3045 = vadd.f32 %v2956, %v3044
  %3046 = vmatmul.bf16.gmra.mxu0 %v835
  %v3047 = vpop.f32.mrf.mxu0
  %v3048 = vadd.f32 %v2959, %v3047
  %v3049 = vpop.f32.mrf.mxu0
  %v3050 = vadd.f32 %v2961, %v3049
  %3051 = vmatmul.bf16.gmra.mxu0 %v842
  %v3052 = vpop.f32.mrf.mxu0
  %v3053 = vadd.f32 %v2964, %v3052
  %v3054 = vpop.f32.mrf.mxu0
  %v3055 = vadd.f32 %v2966, %v3054
  %3056 = vdwg.mxu0
  %3057 = vmatpush.bf16.msra.mxu0 %v1787
  %3058 = vmatpush.bf16.msra.mxu0 %v1783
  %3059 = vmatpush.bf16.msra.mxu0 %v1779
  %3060 = vmatpush.bf16.msra.mxu0 %v1775
  %3061 = vmatpush.bf16.msra.mxu0 %v1771
  %3062 = vmatpush.bf16.msra.mxu0 %v1767
  %3063 = vmatpush.bf16.msra.mxu0 %v1763
  %3064 = vmatpush.bf16.msra.mxu0 %v1759
  %3065 = vmatmul.bf16.gmra.mxu0 %v738
  %v3066 = vpop.f32.mrf.mxu0
  %v3067 = vadd.f32 %v2978, %v3066
  %v3068 = vpop.f32.mrf.mxu0
  %v3069 = vadd.f32 %v2980, %v3068
  %3070 = vmatmul.bf16.gmra.mxu0 %v745
  %v3071 = vpop.f32.mrf.mxu0
  %v3072 = vadd.f32 %v2983, %v3071
  %v3073 = vpop.f32.mrf.mxu0
  %v3074 = vadd.f32 %v2985, %v3073
  %3075 = vmatmul.bf16.gmra.mxu0 %v752
  %v3076 = vpop.f32.mrf.mxu0
  %v3077 = vadd.f32 %v2988, %v3076
  %v3078 = vpop.f32.mrf.mxu0
  %v3079 = vadd.f32 %v2990, %v3078
  %3080 = vmatmul.bf16.gmra.mxu0 %v759
  %v3081 = vpop.f32.mrf.mxu0
  %v3082 = vadd.f32 %v2993, %v3081
  %v3083 = vpop.f32.mrf.mxu0
  %v3084 = vadd.f32 %v2995, %v3083
  %3085 = vmatmul.bf16.gmra.mxu0 %v766
  %v3086 = vpop.f32.mrf.mxu0
  %v3087 = vadd.f32 %v2998, %v3086
  %v3088 = vpop.f32.mrf.mxu0
  %v3089 = vadd.f32 %v3000, %v3088
  %3090 = vmatmul.bf16.gmra.mxu0 %v773
  %v3091 = vpop.f32.mrf.mxu0
  %v3092 = vadd.f32 %v3003, %v3091
  %v3093 = vpop.f32.mrf.mxu0
  %v3094 = vadd.f32 %v3005, %v3093
  %3095 = vmatmul.bf16.gmra.mxu0 %v780
  %v3096 = vpop.f32.mrf.mxu0
  %v3097 = vadd.f32 %v3008, %v3096
  %v3098 = vpop.f32.mrf.mxu0
  %v3099 = vadd.f32 %v3010, %v3098
  %3100 = vmatmul.bf16.gmra.mxu0 %v787
  %v3101 = vpop.f32.mrf.mxu0
  %v3102 = vadd.f32 %v3013, %v3101
  %v3103 = vpop.f32.mrf.mxu0
  %v3104 = vadd.f32 %v3015, %v3103
  %3105 = vmatmul.bf16.gmra.mxu0 %v794
  %v3106 = vpop.f32.mrf.mxu0
  %v3107 = vadd.f32 %v3018, %v3106
  %v3108 = vpop.f32.mrf.mxu0
  %v3109 = vadd.f32 %v3020, %v3108
  %3110 = vmatmul.bf16.gmra.mxu0 %v801
  %v3111 = vpop.f32.mrf.mxu0
  %v3112 = vadd.f32 %v3023, %v3111
  %v3113 = vpop.f32.mrf.mxu0
  %v3114 = vadd.f32 %v3025, %v3113
  %3115 = vmatmul.bf16.gmra.mxu0 %v808
  %v3116 = vpop.f32.mrf.mxu0
  %v3117 = vadd.f32 %v3028, %v3116
  %v3118 = vpop.f32.mrf.mxu0
  %v3119 = vadd.f32 %v3030, %v3118
  %3120 = vmatmul.bf16.gmra.mxu0 %v815
  %v3121 = vpop.f32.mrf.mxu0
  %v3122 = vadd.f32 %v3033, %v3121
  %v3123 = vpop.f32.mrf.mxu0
  %v3124 = vadd.f32 %v3035, %v3123
  %3125 = vmatmul.bf16.gmra.mxu0 %v822
  %v3126 = vpop.f32.mrf.mxu0
  %v3127 = vadd.f32 %v3038, %v3126
  %v3128 = vpop.f32.mrf.mxu0
  %v3129 = vadd.f32 %v3040, %v3128
  %3130 = vmatmul.bf16.gmra.mxu0 %v829
  %v3131 = vpop.f32.mrf.mxu0
  %v3132 = vadd.f32 %v3043, %v3131
  %v3133 = vpop.f32.mrf.mxu0
  %v3134 = vadd.f32 %v3045, %v3133
  %3135 = vmatmul.bf16.gmra.mxu0 %v836
  %v3136 = vpop.f32.mrf.mxu0
  %v3137 = vadd.f32 %v3048, %v3136
  %v3138 = vpop.f32.mrf.mxu0
  %v3139 = vadd.f32 %v3050, %v3138
  %3140 = vmatmul.bf16.gmra.mxu0 %v843
  %v3141 = vpop.f32.mrf.mxu0
  %v3142 = vadd.f32 %v3053, %v3141
  %v3143 = vpop.f32.mrf.mxu0
  %v3144 = vadd.f32 %v3055, %v3143
  %3145 = vdwg.mxu0
  %3146 = vmatpush.bf16.msra.mxu0 %v1819
  %3147 = vmatpush.bf16.msra.mxu0 %v1815
  %3148 = vmatpush.bf16.msra.mxu0 %v1811
  %3149 = vmatpush.bf16.msra.mxu0 %v1807
  %3150 = vmatpush.bf16.msra.mxu0 %v1803
  %3151 = vmatpush.bf16.msra.mxu0 %v1799
  %3152 = vmatpush.bf16.msra.mxu0 %v1795
  %3153 = vmatpush.bf16.msra.mxu0 %v1791
  %3154 = vmatmul.bf16.gmra.mxu0 %v739
  %v3155 = vpop.f32.mrf.mxu0
  %v3156 = vadd.f32 %v3067, %v3155
  %v3157 = vpop.f32.mrf.mxu0
  %v3158 = vadd.f32 %v3069, %v3157
  %3159 = vmatmul.bf16.gmra.mxu0 %v746
  %v3160 = vpop.f32.mrf.mxu0
  %v3161 = vadd.f32 %v3072, %v3160
  %v3162 = vpop.f32.mrf.mxu0
  %v3163 = vadd.f32 %v3074, %v3162
  %3164 = vmatmul.bf16.gmra.mxu0 %v753
  %v3165 = vpop.f32.mrf.mxu0
  %v3166 = vadd.f32 %v3077, %v3165
  %v3167 = vpop.f32.mrf.mxu0
  %v3168 = vadd.f32 %v3079, %v3167
  %3169 = vmatmul.bf16.gmra.mxu0 %v760
  %v3170 = vpop.f32.mrf.mxu0
  %v3171 = vadd.f32 %v3082, %v3170
  %v3172 = vpop.f32.mrf.mxu0
  %v3173 = vadd.f32 %v3084, %v3172
  %3174 = vmatmul.bf16.gmra.mxu0 %v767
  %v3175 = vpop.f32.mrf.mxu0
  %v3176 = vadd.f32 %v3087, %v3175
  %v3177 = vpop.f32.mrf.mxu0
  %v3178 = vadd.f32 %v3089, %v3177
  %3179 = vmatmul.bf16.gmra.mxu0 %v774
  %v3180 = vpop.f32.mrf.mxu0
  %v3181 = vadd.f32 %v3092, %v3180
  %v3182 = vpop.f32.mrf.mxu0
  %v3183 = vadd.f32 %v3094, %v3182
  %3184 = vmatmul.bf16.gmra.mxu0 %v781
  %v3185 = vpop.f32.mrf.mxu0
  %v3186 = vadd.f32 %v3097, %v3185
  %v3187 = vpop.f32.mrf.mxu0
  %v3188 = vadd.f32 %v3099, %v3187
  %3189 = vmatmul.bf16.gmra.mxu0 %v788
  %v3190 = vpop.f32.mrf.mxu0
  %v3191 = vadd.f32 %v3102, %v3190
  %v3192 = vpop.f32.mrf.mxu0
  %v3193 = vadd.f32 %v3104, %v3192
  %3194 = vmatmul.bf16.gmra.mxu0 %v795
  %v3195 = vpop.f32.mrf.mxu0
  %v3196 = vadd.f32 %v3107, %v3195
  %v3197 = vpop.f32.mrf.mxu0
  %v3198 = vadd.f32 %v3109, %v3197
  %3199 = vmatmul.bf16.gmra.mxu0 %v802
  %v3200 = vpop.f32.mrf.mxu0
  %v3201 = vadd.f32 %v3112, %v3200
  %v3202 = vpop.f32.mrf.mxu0
  %v3203 = vadd.f32 %v3114, %v3202
  %3204 = vmatmul.bf16.gmra.mxu0 %v809
  %v3205 = vpop.f32.mrf.mxu0
  %v3206 = vadd.f32 %v3117, %v3205
  %v3207 = vpop.f32.mrf.mxu0
  %v3208 = vadd.f32 %v3119, %v3207
  %3209 = vmatmul.bf16.gmra.mxu0 %v816
  %v3210 = vpop.f32.mrf.mxu0
  %v3211 = vadd.f32 %v3122, %v3210
  %v3212 = vpop.f32.mrf.mxu0
  %v3213 = vadd.f32 %v3124, %v3212
  %3214 = vmatmul.bf16.gmra.mxu0 %v823
  %v3215 = vpop.f32.mrf.mxu0
  %v3216 = vadd.f32 %v3127, %v3215
  %v3217 = vpop.f32.mrf.mxu0
  %v3218 = vadd.f32 %v3129, %v3217
  %3219 = vmatmul.bf16.gmra.mxu0 %v830
  %v3220 = vpop.f32.mrf.mxu0
  %v3221 = vadd.f32 %v3132, %v3220
  %v3222 = vpop.f32.mrf.mxu0
  %v3223 = vadd.f32 %v3134, %v3222
  %3224 = vmatmul.bf16.gmra.mxu0 %v837
  %v3225 = vpop.f32.mrf.mxu0
  %v3226 = vadd.f32 %v3137, %v3225
  %v3227 = vpop.f32.mrf.mxu0
  %v3228 = vadd.f32 %v3139, %v3227
  %3229 = vmatmul.bf16.gmra.mxu0 %v844
  %v3230 = vpop.f32.mrf.mxu0
  %v3231 = vadd.f32 %v3142, %v3230
  %v3232 = vpop.f32.mrf.mxu0
  %v3233 = vadd.f32 %v3144, %v3232
  %3234 = vdwg.mxu0
  %3235 = vmatpush.bf16.msra.mxu0 %v1851
  %3236 = vmatpush.bf16.msra.mxu0 %v1847
  %3237 = vmatpush.bf16.msra.mxu0 %v1843
  %3238 = vmatpush.bf16.msra.mxu0 %v1839
  %3239 = vmatpush.bf16.msra.mxu0 %v1835
  %3240 = vmatpush.bf16.msra.mxu0 %v1831
  %3241 = vmatpush.bf16.msra.mxu0 %v1827
  %3242 = vmatpush.bf16.msra.mxu0 %v1823
  %3243 = vmatmul.bf16.gmra.mxu0 %v740
  %v3244 = vpop.f32.mrf.mxu0
  %v3245 = vadd.f32 %v3156, %v3244
  %v3246 = vpop.f32.mrf.mxu0
  %v3247 = vadd.f32 %v3158, %v3246
  %3248 = vmatmul.bf16.gmra.mxu0 %v747
  %v3249 = vpop.f32.mrf.mxu0
  %v3250 = vadd.f32 %v3161, %v3249
  %v3251 = vpop.f32.mrf.mxu0
  %v3252 = vadd.f32 %v3163, %v3251
  %3253 = vmatmul.bf16.gmra.mxu0 %v754
  %v3254 = vpop.f32.mrf.mxu0
  %v3255 = vadd.f32 %v3166, %v3254
  %v3256 = vpop.f32.mrf.mxu0
  %v3257 = vadd.f32 %v3168, %v3256
  %3258 = vmatmul.bf16.gmra.mxu0 %v761
  %v3259 = vpop.f32.mrf.mxu0
  %v3260 = vadd.f32 %v3171, %v3259
  %v3261 = vpop.f32.mrf.mxu0
  %v3262 = vadd.f32 %v3173, %v3261
  %3263 = vmatmul.bf16.gmra.mxu0 %v768
  %v3264 = vpop.f32.mrf.mxu0
  %v3265 = vadd.f32 %v3176, %v3264
  %v3266 = vpop.f32.mrf.mxu0
  %v3267 = vadd.f32 %v3178, %v3266
  %3268 = vmatmul.bf16.gmra.mxu0 %v775
  %v3269 = vpop.f32.mrf.mxu0
  %v3270 = vadd.f32 %v3181, %v3269
  %v3271 = vpop.f32.mrf.mxu0
  %v3272 = vadd.f32 %v3183, %v3271
  %3273 = vmatmul.bf16.gmra.mxu0 %v782
  %v3274 = vpop.f32.mrf.mxu0
  %v3275 = vadd.f32 %v3186, %v3274
  %v3276 = vpop.f32.mrf.mxu0
  %v3277 = vadd.f32 %v3188, %v3276
  %3278 = vmatmul.bf16.gmra.mxu0 %v789
  %v3279 = vpop.f32.mrf.mxu0
  %v3280 = vadd.f32 %v3191, %v3279
  %v3281 = vpop.f32.mrf.mxu0
  %v3282 = vadd.f32 %v3193, %v3281
  %3283 = vmatmul.bf16.gmra.mxu0 %v796
  %v3284 = vpop.f32.mrf.mxu0
  %v3285 = vadd.f32 %v3196, %v3284
  %v3286 = vpop.f32.mrf.mxu0
  %v3287 = vadd.f32 %v3198, %v3286
  %3288 = vmatmul.bf16.gmra.mxu0 %v803
  %v3289 = vpop.f32.mrf.mxu0
  %v3290 = vadd.f32 %v3201, %v3289
  %v3291 = vpop.f32.mrf.mxu0
  %v3292 = vadd.f32 %v3203, %v3291
  %3293 = vmatmul.bf16.gmra.mxu0 %v810
  %v3294 = vpop.f32.mrf.mxu0
  %v3295 = vadd.f32 %v3206, %v3294
  %v3296 = vpop.f32.mrf.mxu0
  %v3297 = vadd.f32 %v3208, %v3296
  %3298 = vmatmul.bf16.gmra.mxu0 %v817
  %v3299 = vpop.f32.mrf.mxu0
  %v3300 = vadd.f32 %v3211, %v3299
  %v3301 = vpop.f32.mrf.mxu0
  %v3302 = vadd.f32 %v3213, %v3301
  %3303 = vmatmul.bf16.gmra.mxu0 %v824
  %v3304 = vpop.f32.mrf.mxu0
  %v3305 = vadd.f32 %v3216, %v3304
  %v3306 = vpop.f32.mrf.mxu0
  %v3307 = vadd.f32 %v3218, %v3306
  %3308 = vmatmul.bf16.gmra.mxu0 %v831
  %v3309 = vpop.f32.mrf.mxu0
  %v3310 = vadd.f32 %v3221, %v3309
  %v3311 = vpop.f32.mrf.mxu0
  %v3312 = vadd.f32 %v3223, %v3311
  %3313 = vmatmul.bf16.gmra.mxu0 %v838
  %v3314 = vpop.f32.mrf.mxu0
  %v3315 = vadd.f32 %v3226, %v3314
  %v3316 = vpop.f32.mrf.mxu0
  %v3317 = vadd.f32 %v3228, %v3316
  %3318 = vmatmul.bf16.gmra.mxu0 %v845
  %v3319 = vpop.f32.mrf.mxu0
  %v3320 = vadd.f32 %v3231, %v3319
  %v3321 = vpop.f32.mrf.mxu0
  %v3322 = vadd.f32 %v3233, %v3321
  %3323 = vdwg.mxu0
  %3324 = vmatpush.bf16.msra.mxu0 %v1660
  %3325 = vmatpush.bf16.msra.mxu0 %v1656
  %3326 = vmatpush.bf16.msra.mxu0 %v1652
  %3327 = vmatpush.bf16.msra.mxu0 %v1648
  %3328 = vmatpush.bf16.msra.mxu0 %v1644
  %3329 = vmatpush.bf16.msra.mxu0 %v1640
  %3330 = vmatpush.bf16.msra.mxu0 %v1636
  %3331 = vmatpush.bf16.msra.mxu0 %v1632
  %3332 = vmatmul.bf16.gmra.mxu0 %v734
  %v3333 = vpop.f32.mrf.mxu0
  %v3334 = vadd.f32 %v376, %v3333
  %v3335 = vpop.f32.mrf.mxu0
  %v3336 = vadd.f32 %v376, %v3335
  %3337 = vmatmul.bf16.gmra.mxu0 %v741
  %v3338 = vpop.f32.mrf.mxu0
  %v3339 = vadd.f32 %v376, %v3338
  %v3340 = vpop.f32.mrf.mxu0
  %v3341 = vadd.f32 %v376, %v3340
  %3342 = vmatmul.bf16.gmra.mxu0 %v748
  %v3343 = vpop.f32.mrf.mxu0
  %v3344 = vadd.f32 %v376, %v3343
  %v3345 = vpop.f32.mrf.mxu0
  %v3346 = vadd.f32 %v376, %v3345
  %3347 = vmatmul.bf16.gmra.mxu0 %v755
  %v3348 = vpop.f32.mrf.mxu0
  %v3349 = vadd.f32 %v376, %v3348
  %v3350 = vpop.f32.mrf.mxu0
  %v3351 = vadd.f32 %v376, %v3350
  %3352 = vmatmul.bf16.gmra.mxu0 %v762
  %v3353 = vpop.f32.mrf.mxu0
  %v3354 = vadd.f32 %v376, %v3353
  %v3355 = vpop.f32.mrf.mxu0
  %v3356 = vadd.f32 %v376, %v3355
  %3357 = vmatmul.bf16.gmra.mxu0 %v769
  %v3358 = vpop.f32.mrf.mxu0
  %v3359 = vadd.f32 %v376, %v3358
  %v3360 = vpop.f32.mrf.mxu0
  %v3361 = vadd.f32 %v376, %v3360
  %3362 = vmatmul.bf16.gmra.mxu0 %v776
  %v3363 = vpop.f32.mrf.mxu0
  %v3364 = vadd.f32 %v376, %v3363
  %v3365 = vpop.f32.mrf.mxu0
  %v3366 = vadd.f32 %v376, %v3365
  %3367 = vmatmul.bf16.gmra.mxu0 %v783
  %v3368 = vpop.f32.mrf.mxu0
  %v3369 = vadd.f32 %v376, %v3368
  %v3370 = vpop.f32.mrf.mxu0
  %v3371 = vadd.f32 %v376, %v3370
  %3372 = vmatmul.bf16.gmra.mxu0 %v790
  %v3373 = vpop.f32.mrf.mxu0
  %v3374 = vadd.f32 %v376, %v3373
  %v3375 = vpop.f32.mrf.mxu0
  %v3376 = vadd.f32 %v376, %v3375
  %3377 = vmatmul.bf16.gmra.mxu0 %v797
  %v3378 = vpop.f32.mrf.mxu0
  %v3379 = vadd.f32 %v376, %v3378
  %v3380 = vpop.f32.mrf.mxu0
  %v3381 = vadd.f32 %v376, %v3380
  %3382 = vmatmul.bf16.gmra.mxu0 %v804
  %v3383 = vpop.f32.mrf.mxu0
  %v3384 = vadd.f32 %v376, %v3383
  %v3385 = vpop.f32.mrf.mxu0
  %v3386 = vadd.f32 %v376, %v3385
  %3387 = vmatmul.bf16.gmra.mxu0 %v811
  %v3388 = vpop.f32.mrf.mxu0
  %v3389 = vadd.f32 %v376, %v3388
  %v3390 = vpop.f32.mrf.mxu0
  %v3391 = vadd.f32 %v376, %v3390
  %3392 = vmatmul.bf16.gmra.mxu0 %v818
  %v3393 = vpop.f32.mrf.mxu0
  %v3394 = vadd.f32 %v376, %v3393
  %v3395 = vpop.f32.mrf.mxu0
  %v3396 = vadd.f32 %v376, %v3395
  %3397 = vmatmul.bf16.gmra.mxu0 %v825
  %v3398 = vpop.f32.mrf.mxu0
  %v3399 = vadd.f32 %v376, %v3398
  %v3400 = vpop.f32.mrf.mxu0
  %v3401 = vadd.f32 %v376, %v3400
  %3402 = vmatmul.bf16.gmra.mxu0 %v832
  %v3403 = vpop.f32.mrf.mxu0
  %v3404 = vadd.f32 %v376, %v3403
  %v3405 = vpop.f32.mrf.mxu0
  %v3406 = vadd.f32 %v376, %v3405
  %3407 = vmatmul.bf16.gmra.mxu0 %v839
  %v3408 = vpop.f32.mrf.mxu0
  %v3409 = vadd.f32 %v376, %v3408
  %v3410 = vpop.f32.mrf.mxu0
  %v3411 = vadd.f32 %v376, %v3410
  %3412 = vdwg.mxu0
  %3413 = vmatpush.bf16.msra.mxu0 %v1692
  %3414 = vmatpush.bf16.msra.mxu0 %v1688
  %3415 = vmatpush.bf16.msra.mxu0 %v1684
  %3416 = vmatpush.bf16.msra.mxu0 %v1680
  %3417 = vmatpush.bf16.msra.mxu0 %v1676
  %3418 = vmatpush.bf16.msra.mxu0 %v1672
  %3419 = vmatpush.bf16.msra.mxu0 %v1668
  %3420 = vmatpush.bf16.msra.mxu0 %v1664
  %3421 = vmatmul.bf16.gmra.mxu0 %v735
  %v3422 = vpop.f32.mrf.mxu0
  %v3423 = vadd.f32 %v3334, %v3422
  %v3424 = vpop.f32.mrf.mxu0
  %v3425 = vadd.f32 %v3336, %v3424
  %3426 = vmatmul.bf16.gmra.mxu0 %v742
  %v3427 = vpop.f32.mrf.mxu0
  %v3428 = vadd.f32 %v3339, %v3427
  %v3429 = vpop.f32.mrf.mxu0
  %v3430 = vadd.f32 %v3341, %v3429
  %3431 = vmatmul.bf16.gmra.mxu0 %v749
  %v3432 = vpop.f32.mrf.mxu0
  %v3433 = vadd.f32 %v3344, %v3432
  %v3434 = vpop.f32.mrf.mxu0
  %v3435 = vadd.f32 %v3346, %v3434
  %3436 = vmatmul.bf16.gmra.mxu0 %v756
  %v3437 = vpop.f32.mrf.mxu0
  %v3438 = vadd.f32 %v3349, %v3437
  %v3439 = vpop.f32.mrf.mxu0
  %v3440 = vadd.f32 %v3351, %v3439
  %3441 = vmatmul.bf16.gmra.mxu0 %v763
  %v3442 = vpop.f32.mrf.mxu0
  %v3443 = vadd.f32 %v3354, %v3442
  %v3444 = vpop.f32.mrf.mxu0
  %v3445 = vadd.f32 %v3356, %v3444
  %3446 = vmatmul.bf16.gmra.mxu0 %v770
  %v3447 = vpop.f32.mrf.mxu0
  %v3448 = vadd.f32 %v3359, %v3447
  %v3449 = vpop.f32.mrf.mxu0
  %v3450 = vadd.f32 %v3361, %v3449
  %3451 = vmatmul.bf16.gmra.mxu0 %v777
  %v3452 = vpop.f32.mrf.mxu0
  %v3453 = vadd.f32 %v3364, %v3452
  %v3454 = vpop.f32.mrf.mxu0
  %v3455 = vadd.f32 %v3366, %v3454
  %3456 = vmatmul.bf16.gmra.mxu0 %v784
  %v3457 = vpop.f32.mrf.mxu0
  %v3458 = vadd.f32 %v3369, %v3457
  %v3459 = vpop.f32.mrf.mxu0
  %v3460 = vadd.f32 %v3371, %v3459
  %3461 = vmatmul.bf16.gmra.mxu0 %v791
  %v3462 = vpop.f32.mrf.mxu0
  %v3463 = vadd.f32 %v3374, %v3462
  %v3464 = vpop.f32.mrf.mxu0
  %v3465 = vadd.f32 %v3376, %v3464
  %3466 = vmatmul.bf16.gmra.mxu0 %v798
  %v3467 = vpop.f32.mrf.mxu0
  %v3468 = vadd.f32 %v3379, %v3467
  %v3469 = vpop.f32.mrf.mxu0
  %v3470 = vadd.f32 %v3381, %v3469
  %3471 = vmatmul.bf16.gmra.mxu0 %v805
  %v3472 = vpop.f32.mrf.mxu0
  %v3473 = vadd.f32 %v3384, %v3472
  %v3474 = vpop.f32.mrf.mxu0
  %v3475 = vadd.f32 %v3386, %v3474
  %3476 = vmatmul.bf16.gmra.mxu0 %v812
  %v3477 = vpop.f32.mrf.mxu0
  %v3478 = vadd.f32 %v3389, %v3477
  %v3479 = vpop.f32.mrf.mxu0
  %v3480 = vadd.f32 %v3391, %v3479
  %3481 = vmatmul.bf16.gmra.mxu0 %v819
  %v3482 = vpop.f32.mrf.mxu0
  %v3483 = vadd.f32 %v3394, %v3482
  %v3484 = vpop.f32.mrf.mxu0
  %v3485 = vadd.f32 %v3396, %v3484
  %3486 = vmatmul.bf16.gmra.mxu0 %v826
  %v3487 = vpop.f32.mrf.mxu0
  %v3488 = vadd.f32 %v3399, %v3487
  %v3489 = vpop.f32.mrf.mxu0
  %v3490 = vadd.f32 %v3401, %v3489
  %3491 = vmatmul.bf16.gmra.mxu0 %v833
  %v3492 = vpop.f32.mrf.mxu0
  %v3493 = vadd.f32 %v3404, %v3492
  %v3494 = vpop.f32.mrf.mxu0
  %v3495 = vadd.f32 %v3406, %v3494
  %3496 = vmatmul.bf16.gmra.mxu0 %v840
  %v3497 = vpop.f32.mrf.mxu0
  %v3498 = vadd.f32 %v3409, %v3497
  %v3499 = vpop.f32.mrf.mxu0
  %v3500 = vadd.f32 %v3411, %v3499
  %3501 = vdwg.mxu0
  %3502 = vmatpush.bf16.msra.mxu0 %v1724
  %3503 = vmatpush.bf16.msra.mxu0 %v1720
  %3504 = vmatpush.bf16.msra.mxu0 %v1716
  %3505 = vmatpush.bf16.msra.mxu0 %v1712
  %3506 = vmatpush.bf16.msra.mxu0 %v1708
  %3507 = vmatpush.bf16.msra.mxu0 %v1704
  %3508 = vmatpush.bf16.msra.mxu0 %v1700
  %3509 = vmatpush.bf16.msra.mxu0 %v1696
  %3510 = vmatmul.bf16.gmra.mxu0 %v736
  %v3511 = vpop.f32.mrf.mxu0
  %v3512 = vadd.f32 %v3423, %v3511
  %v3513 = vpop.f32.mrf.mxu0
  %v3514 = vadd.f32 %v3425, %v3513
  %3515 = vmatmul.bf16.gmra.mxu0 %v743
  %v3516 = vpop.f32.mrf.mxu0
  %v3517 = vadd.f32 %v3428, %v3516
  %v3518 = vpop.f32.mrf.mxu0
  %v3519 = vadd.f32 %v3430, %v3518
  %3520 = vmatmul.bf16.gmra.mxu0 %v750
  %v3521 = vpop.f32.mrf.mxu0
  %v3522 = vadd.f32 %v3433, %v3521
  %v3523 = vpop.f32.mrf.mxu0
  %v3524 = vadd.f32 %v3435, %v3523
  %3525 = vmatmul.bf16.gmra.mxu0 %v757
  %v3526 = vpop.f32.mrf.mxu0
  %v3527 = vadd.f32 %v3438, %v3526
  %v3528 = vpop.f32.mrf.mxu0
  %v3529 = vadd.f32 %v3440, %v3528
  %3530 = vmatmul.bf16.gmra.mxu0 %v764
  %v3531 = vpop.f32.mrf.mxu0
  %v3532 = vadd.f32 %v3443, %v3531
  %v3533 = vpop.f32.mrf.mxu0
  %v3534 = vadd.f32 %v3445, %v3533
  %3535 = vmatmul.bf16.gmra.mxu0 %v771
  %v3536 = vpop.f32.mrf.mxu0
  %v3537 = vadd.f32 %v3448, %v3536
  %v3538 = vpop.f32.mrf.mxu0
  %v3539 = vadd.f32 %v3450, %v3538
  %3540 = vmatmul.bf16.gmra.mxu0 %v778
  %v3541 = vpop.f32.mrf.mxu0
  %v3542 = vadd.f32 %v3453, %v3541
  %v3543 = vpop.f32.mrf.mxu0
  %v3544 = vadd.f32 %v3455, %v3543
  %3545 = vmatmul.bf16.gmra.mxu0 %v785
  %v3546 = vpop.f32.mrf.mxu0
  %v3547 = vadd.f32 %v3458, %v3546
  %v3548 = vpop.f32.mrf.mxu0
  %v3549 = vadd.f32 %v3460, %v3548
  %3550 = vmatmul.bf16.gmra.mxu0 %v792
  %v3551 = vpop.f32.mrf.mxu0
  %v3552 = vadd.f32 %v3463, %v3551
  %v3553 = vpop.f32.mrf.mxu0
  %v3554 = vadd.f32 %v3465, %v3553
  %3555 = vmatmul.bf16.gmra.mxu0 %v799
  %v3556 = vpop.f32.mrf.mxu0
  %v3557 = vadd.f32 %v3468, %v3556
  %v3558 = vpop.f32.mrf.mxu0
  %v3559 = vadd.f32 %v3470, %v3558
  %3560 = vmatmul.bf16.gmra.mxu0 %v806
  %v3561 = vpop.f32.mrf.mxu0
  %v3562 = vadd.f32 %v3473, %v3561
  %v3563 = vpop.f32.mrf.mxu0
  %v3564 = vadd.f32 %v3475, %v3563
  %3565 = vmatmul.bf16.gmra.mxu0 %v813
  %v3566 = vpop.f32.mrf.mxu0
  %v3567 = vadd.f32 %v3478, %v3566
  %v3568 = vpop.f32.mrf.mxu0
  %v3569 = vadd.f32 %v3480, %v3568
  %3570 = vmatmul.bf16.gmra.mxu0 %v820
  %v3571 = vpop.f32.mrf.mxu0
  %v3572 = vadd.f32 %v3483, %v3571
  %v3573 = vpop.f32.mrf.mxu0
  %v3574 = vadd.f32 %v3485, %v3573
  %3575 = vmatmul.bf16.gmra.mxu0 %v827
  %v3576 = vpop.f32.mrf.mxu0
  %v3577 = vadd.f32 %v3488, %v3576
  %v3578 = vpop.f32.mrf.mxu0
  %v3579 = vadd.f32 %v3490, %v3578
  %3580 = vmatmul.bf16.gmra.mxu0 %v834
  %v3581 = vpop.f32.mrf.mxu0
  %v3582 = vadd.f32 %v3493, %v3581
  %v3583 = vpop.f32.mrf.mxu0
  %v3584 = vadd.f32 %v3495, %v3583
  %3585 = vmatmul.bf16.gmra.mxu0 %v841
  %v3586 = vpop.f32.mrf.mxu0
  %v3587 = vadd.f32 %v3498, %v3586
  %v3588 = vpop.f32.mrf.mxu0
  %v3589 = vadd.f32 %v3500, %v3588
  %3590 = vdwg.mxu0
  %3591 = vmatpush.bf16.msra.mxu0 %v1756
  %3592 = vmatpush.bf16.msra.mxu0 %v1752
  %3593 = vmatpush.bf16.msra.mxu0 %v1748
  %3594 = vmatpush.bf16.msra.mxu0 %v1744
  %3595 = vmatpush.bf16.msra.mxu0 %v1740
  %3596 = vmatpush.bf16.msra.mxu0 %v1736
  %3597 = vmatpush.bf16.msra.mxu0 %v1732
  %3598 = vmatpush.bf16.msra.mxu0 %v1728
  %3599 = vmatmul.bf16.gmra.mxu0 %v737
  %v3600 = vpop.f32.mrf.mxu0
  %v3601 = vadd.f32 %v3512, %v3600
  %v3602 = vpop.f32.mrf.mxu0
  %v3603 = vadd.f32 %v3514, %v3602
  %3604 = vmatmul.bf16.gmra.mxu0 %v744
  %v3605 = vpop.f32.mrf.mxu0
  %v3606 = vadd.f32 %v3517, %v3605
  %v3607 = vpop.f32.mrf.mxu0
  %v3608 = vadd.f32 %v3519, %v3607
  %3609 = vmatmul.bf16.gmra.mxu0 %v751
  %v3610 = vpop.f32.mrf.mxu0
  %v3611 = vadd.f32 %v3522, %v3610
  %v3612 = vpop.f32.mrf.mxu0
  %v3613 = vadd.f32 %v3524, %v3612
  %3614 = vmatmul.bf16.gmra.mxu0 %v758
  %v3615 = vpop.f32.mrf.mxu0
  %v3616 = vadd.f32 %v3527, %v3615
  %v3617 = vpop.f32.mrf.mxu0
  %v3618 = vadd.f32 %v3529, %v3617
  %3619 = vmatmul.bf16.gmra.mxu0 %v765
  %v3620 = vpop.f32.mrf.mxu0
  %v3621 = vadd.f32 %v3532, %v3620
  %v3622 = vpop.f32.mrf.mxu0
  %v3623 = vadd.f32 %v3534, %v3622
  %3624 = vmatmul.bf16.gmra.mxu0 %v772
  %v3625 = vpop.f32.mrf.mxu0
  %v3626 = vadd.f32 %v3537, %v3625
  %v3627 = vpop.f32.mrf.mxu0
  %v3628 = vadd.f32 %v3539, %v3627
  %3629 = vmatmul.bf16.gmra.mxu0 %v779
  %v3630 = vpop.f32.mrf.mxu0
  %v3631 = vadd.f32 %v3542, %v3630
  %v3632 = vpop.f32.mrf.mxu0
  %v3633 = vadd.f32 %v3544, %v3632
  %3634 = vmatmul.bf16.gmra.mxu0 %v786
  %v3635 = vpop.f32.mrf.mxu0
  %v3636 = vadd.f32 %v3547, %v3635
  %v3637 = vpop.f32.mrf.mxu0
  %v3638 = vadd.f32 %v3549, %v3637
  %3639 = vmatmul.bf16.gmra.mxu0 %v793
  %v3640 = vpop.f32.mrf.mxu0
  %v3641 = vadd.f32 %v3552, %v3640
  %v3642 = vpop.f32.mrf.mxu0
  %v3643 = vadd.f32 %v3554, %v3642
  %3644 = vmatmul.bf16.gmra.mxu0 %v800
  %v3645 = vpop.f32.mrf.mxu0
  %v3646 = vadd.f32 %v3557, %v3645
  %v3647 = vpop.f32.mrf.mxu0
  %v3648 = vadd.f32 %v3559, %v3647
  %3649 = vmatmul.bf16.gmra.mxu0 %v807
  %v3650 = vpop.f32.mrf.mxu0
  %v3651 = vadd.f32 %v3562, %v3650
  %v3652 = vpop.f32.mrf.mxu0
  %v3653 = vadd.f32 %v3564, %v3652
  %3654 = vmatmul.bf16.gmra.mxu0 %v814
  %v3655 = vpop.f32.mrf.mxu0
  %v3656 = vadd.f32 %v3567, %v3655
  %v3657 = vpop.f32.mrf.mxu0
  %v3658 = vadd.f32 %v3569, %v3657
  %3659 = vmatmul.bf16.gmra.mxu0 %v821
  %v3660 = vpop.f32.mrf.mxu0
  %v3661 = vadd.f32 %v3572, %v3660
  %v3662 = vpop.f32.mrf.mxu0
  %v3663 = vadd.f32 %v3574, %v3662
  %3664 = vmatmul.bf16.gmra.mxu0 %v828
  %v3665 = vpop.f32.mrf.mxu0
  %v3666 = vadd.f32 %v3577, %v3665
  %v3667 = vpop.f32.mrf.mxu0
  %v3668 = vadd.f32 %v3579, %v3667
  %3669 = vmatmul.bf16.gmra.mxu0 %v835
  %v3670 = vpop.f32.mrf.mxu0
  %v3671 = vadd.f32 %v3582, %v3670
  %v3672 = vpop.f32.mrf.mxu0
  %v3673 = vadd.f32 %v3584, %v3672
  %3674 = vmatmul.bf16.gmra.mxu0 %v842
  %v3675 = vpop.f32.mrf.mxu0
  %v3676 = vadd.f32 %v3587, %v3675
  %v3677 = vpop.f32.mrf.mxu0
  %v3678 = vadd.f32 %v3589, %v3677
  %3679 = vdwg.mxu0
  %3680 = vmatpush.bf16.msra.mxu0 %v1788
  %3681 = vmatpush.bf16.msra.mxu0 %v1784
  %3682 = vmatpush.bf16.msra.mxu0 %v1780
  %3683 = vmatpush.bf16.msra.mxu0 %v1776
  %3684 = vmatpush.bf16.msra.mxu0 %v1772
  %3685 = vmatpush.bf16.msra.mxu0 %v1768
  %3686 = vmatpush.bf16.msra.mxu0 %v1764
  %3687 = vmatpush.bf16.msra.mxu0 %v1760
  %3688 = vmatmul.bf16.gmra.mxu0 %v738
  %v3689 = vpop.f32.mrf.mxu0
  %v3690 = vadd.f32 %v3601, %v3689
  %v3691 = vpop.f32.mrf.mxu0
  %v3692 = vadd.f32 %v3603, %v3691
  %3693 = vmatmul.bf16.gmra.mxu0 %v745
  %v3694 = vpop.f32.mrf.mxu0
  %v3695 = vadd.f32 %v3606, %v3694
  %v3696 = vpop.f32.mrf.mxu0
  %v3697 = vadd.f32 %v3608, %v3696
  %3698 = vmatmul.bf16.gmra.mxu0 %v752
  %v3699 = vpop.f32.mrf.mxu0
  %v3700 = vadd.f32 %v3611, %v3699
  %v3701 = vpop.f32.mrf.mxu0
  %v3702 = vadd.f32 %v3613, %v3701
  %3703 = vmatmul.bf16.gmra.mxu0 %v759
  %v3704 = vpop.f32.mrf.mxu0
  %v3705 = vadd.f32 %v3616, %v3704
  %v3706 = vpop.f32.mrf.mxu0
  %v3707 = vadd.f32 %v3618, %v3706
  %3708 = vmatmul.bf16.gmra.mxu0 %v766
  %v3709 = vpop.f32.mrf.mxu0
  %v3710 = vadd.f32 %v3621, %v3709
  %v3711 = vpop.f32.mrf.mxu0
  %v3712 = vadd.f32 %v3623, %v3711
  %3713 = vmatmul.bf16.gmra.mxu0 %v773
  %v3714 = vpop.f32.mrf.mxu0
  %v3715 = vadd.f32 %v3626, %v3714
  %v3716 = vpop.f32.mrf.mxu0
  %v3717 = vadd.f32 %v3628, %v3716
  %3718 = vmatmul.bf16.gmra.mxu0 %v780
  %v3719 = vpop.f32.mrf.mxu0
  %v3720 = vadd.f32 %v3631, %v3719
  %v3721 = vpop.f32.mrf.mxu0
  %v3722 = vadd.f32 %v3633, %v3721
  %3723 = vmatmul.bf16.gmra.mxu0 %v787
  %v3724 = vpop.f32.mrf.mxu0
  %v3725 = vadd.f32 %v3636, %v3724
  %v3726 = vpop.f32.mrf.mxu0
  %v3727 = vadd.f32 %v3638, %v3726
  %3728 = vmatmul.bf16.gmra.mxu0 %v794
  %v3729 = vpop.f32.mrf.mxu0
  %v3730 = vadd.f32 %v3641, %v3729
  %v3731 = vpop.f32.mrf.mxu0
  %v3732 = vadd.f32 %v3643, %v3731
  %3733 = vmatmul.bf16.gmra.mxu0 %v801
  %v3734 = vpop.f32.mrf.mxu0
  %v3735 = vadd.f32 %v3646, %v3734
  %v3736 = vpop.f32.mrf.mxu0
  %v3737 = vadd.f32 %v3648, %v3736
  %3738 = vmatmul.bf16.gmra.mxu0 %v808
  %v3739 = vpop.f32.mrf.mxu0
  %v3740 = vadd.f32 %v3651, %v3739
  %v3741 = vpop.f32.mrf.mxu0
  %v3742 = vadd.f32 %v3653, %v3741
  %3743 = vmatmul.bf16.gmra.mxu0 %v815
  %v3744 = vpop.f32.mrf.mxu0
  %v3745 = vadd.f32 %v3656, %v3744
  %v3746 = vpop.f32.mrf.mxu0
  %v3747 = vadd.f32 %v3658, %v3746
  %3748 = vmatmul.bf16.gmra.mxu0 %v822
  %v3749 = vpop.f32.mrf.mxu0
  %v3750 = vadd.f32 %v3661, %v3749
  %v3751 = vpop.f32.mrf.mxu0
  %v3752 = vadd.f32 %v3663, %v3751
  %3753 = vmatmul.bf16.gmra.mxu0 %v829
  %v3754 = vpop.f32.mrf.mxu0
  %v3755 = vadd.f32 %v3666, %v3754
  %v3756 = vpop.f32.mrf.mxu0
  %v3757 = vadd.f32 %v3668, %v3756
  %3758 = vmatmul.bf16.gmra.mxu0 %v836
  %v3759 = vpop.f32.mrf.mxu0
  %v3760 = vadd.f32 %v3671, %v3759
  %v3761 = vpop.f32.mrf.mxu0
  %v3762 = vadd.f32 %v3673, %v3761
  %3763 = vmatmul.bf16.gmra.mxu0 %v843
  %v3764 = vpop.f32.mrf.mxu0
  %v3765 = vadd.f32 %v3676, %v3764
  %v3766 = vpop.f32.mrf.mxu0
  %v3767 = vadd.f32 %v3678, %v3766
  %3768 = vdwg.mxu0
  %3769 = vmatpush.bf16.msra.mxu0 %v1820
  %3770 = vmatpush.bf16.msra.mxu0 %v1816
  %3771 = vmatpush.bf16.msra.mxu0 %v1812
  %3772 = vmatpush.bf16.msra.mxu0 %v1808
  %3773 = vmatpush.bf16.msra.mxu0 %v1804
  %3774 = vmatpush.bf16.msra.mxu0 %v1800
  %3775 = vmatpush.bf16.msra.mxu0 %v1796
  %3776 = vmatpush.bf16.msra.mxu0 %v1792
  %3777 = vmatmul.bf16.gmra.mxu0 %v739
  %v3778 = vpop.f32.mrf.mxu0
  %v3779 = vadd.f32 %v3690, %v3778
  %v3780 = vpop.f32.mrf.mxu0
  %v3781 = vadd.f32 %v3692, %v3780
  %3782 = vmatmul.bf16.gmra.mxu0 %v746
  %v3783 = vpop.f32.mrf.mxu0
  %v3784 = vadd.f32 %v3695, %v3783
  %v3785 = vpop.f32.mrf.mxu0
  %v3786 = vadd.f32 %v3697, %v3785
  %3787 = vmatmul.bf16.gmra.mxu0 %v753
  %v3788 = vpop.f32.mrf.mxu0
  %v3789 = vadd.f32 %v3700, %v3788
  %v3790 = vpop.f32.mrf.mxu0
  %v3791 = vadd.f32 %v3702, %v3790
  %3792 = vmatmul.bf16.gmra.mxu0 %v760
  %v3793 = vpop.f32.mrf.mxu0
  %v3794 = vadd.f32 %v3705, %v3793
  %v3795 = vpop.f32.mrf.mxu0
  %v3796 = vadd.f32 %v3707, %v3795
  %3797 = vmatmul.bf16.gmra.mxu0 %v767
  %v3798 = vpop.f32.mrf.mxu0
  %v3799 = vadd.f32 %v3710, %v3798
  %v3800 = vpop.f32.mrf.mxu0
  %v3801 = vadd.f32 %v3712, %v3800
  %3802 = vmatmul.bf16.gmra.mxu0 %v774
  %v3803 = vpop.f32.mrf.mxu0
  %v3804 = vadd.f32 %v3715, %v3803
  %v3805 = vpop.f32.mrf.mxu0
  %v3806 = vadd.f32 %v3717, %v3805
  %3807 = vmatmul.bf16.gmra.mxu0 %v781
  %v3808 = vpop.f32.mrf.mxu0
  %v3809 = vadd.f32 %v3720, %v3808
  %v3810 = vpop.f32.mrf.mxu0
  %v3811 = vadd.f32 %v3722, %v3810
  %3812 = vmatmul.bf16.gmra.mxu0 %v788
  %v3813 = vpop.f32.mrf.mxu0
  %v3814 = vadd.f32 %v3725, %v3813
  %v3815 = vpop.f32.mrf.mxu0
  %v3816 = vadd.f32 %v3727, %v3815
  %3817 = vmatmul.bf16.gmra.mxu0 %v795
  %v3818 = vpop.f32.mrf.mxu0
  %v3819 = vadd.f32 %v3730, %v3818
  %v3820 = vpop.f32.mrf.mxu0
  %v3821 = vadd.f32 %v3732, %v3820
  %3822 = vmatmul.bf16.gmra.mxu0 %v802
  %v3823 = vpop.f32.mrf.mxu0
  %v3824 = vadd.f32 %v3735, %v3823
  %v3825 = vpop.f32.mrf.mxu0
  %v3826 = vadd.f32 %v3737, %v3825
  %3827 = vmatmul.bf16.gmra.mxu0 %v809
  %v3828 = vpop.f32.mrf.mxu0
  %v3829 = vadd.f32 %v3740, %v3828
  %v3830 = vpop.f32.mrf.mxu0
  %v3831 = vadd.f32 %v3742, %v3830
  %3832 = vmatmul.bf16.gmra.mxu0 %v816
  %v3833 = vpop.f32.mrf.mxu0
  %v3834 = vadd.f32 %v3745, %v3833
  %v3835 = vpop.f32.mrf.mxu0
  %v3836 = vadd.f32 %v3747, %v3835
  %3837 = vmatmul.bf16.gmra.mxu0 %v823
  %v3838 = vpop.f32.mrf.mxu0
  %v3839 = vadd.f32 %v3750, %v3838
  %v3840 = vpop.f32.mrf.mxu0
  %v3841 = vadd.f32 %v3752, %v3840
  %3842 = vmatmul.bf16.gmra.mxu0 %v830
  %v3843 = vpop.f32.mrf.mxu0
  %v3844 = vadd.f32 %v3755, %v3843
  %v3845 = vpop.f32.mrf.mxu0
  %v3846 = vadd.f32 %v3757, %v3845
  %3847 = vmatmul.bf16.gmra.mxu0 %v837
  %v3848 = vpop.f32.mrf.mxu0
  %v3849 = vadd.f32 %v3760, %v3848
  %v3850 = vpop.f32.mrf.mxu0
  %v3851 = vadd.f32 %v3762, %v3850
  %3852 = vmatmul.bf16.gmra.mxu0 %v844
  %v3853 = vpop.f32.mrf.mxu0
  %v3854 = vadd.f32 %v3765, %v3853
  %v3855 = vpop.f32.mrf.mxu0
  %v3856 = vadd.f32 %v3767, %v3855
  %3857 = vdwg.mxu0
  %3858 = vmatpush.bf16.msra.mxu0 %v1852
  %3859 = vmatpush.bf16.msra.mxu0 %v1848
  %3860 = vmatpush.bf16.msra.mxu0 %v1844
  %3861 = vmatpush.bf16.msra.mxu0 %v1840
  %3862 = vmatpush.bf16.msra.mxu0 %v1836
  %3863 = vmatpush.bf16.msra.mxu0 %v1832
  %3864 = vmatpush.bf16.msra.mxu0 %v1828
  %3865 = vmatpush.bf16.msra.mxu0 %v1824
  %3866 = vmatmul.bf16.gmra.mxu0 %v740
  %v3867 = vpop.f32.mrf.mxu0
  %v3868 = vadd.f32 %v3779, %v3867
  %v3869 = vpop.f32.mrf.mxu0
  %v3870 = vadd.f32 %v3781, %v3869
  %3871 = vmatmul.bf16.gmra.mxu0 %v747
  %v3872 = vpop.f32.mrf.mxu0
  %v3873 = vadd.f32 %v3784, %v3872
  %v3874 = vpop.f32.mrf.mxu0
  %v3875 = vadd.f32 %v3786, %v3874
  %3876 = vmatmul.bf16.gmra.mxu0 %v754
  %v3877 = vpop.f32.mrf.mxu0
  %v3878 = vadd.f32 %v3789, %v3877
  %v3879 = vpop.f32.mrf.mxu0
  %v3880 = vadd.f32 %v3791, %v3879
  %3881 = vmatmul.bf16.gmra.mxu0 %v761
  %v3882 = vpop.f32.mrf.mxu0
  %v3883 = vadd.f32 %v3794, %v3882
  %v3884 = vpop.f32.mrf.mxu0
  %v3885 = vadd.f32 %v3796, %v3884
  %3886 = vmatmul.bf16.gmra.mxu0 %v768
  %v3887 = vpop.f32.mrf.mxu0
  %v3888 = vadd.f32 %v3799, %v3887
  %v3889 = vpop.f32.mrf.mxu0
  %v3890 = vadd.f32 %v3801, %v3889
  %3891 = vmatmul.bf16.gmra.mxu0 %v775
  %v3892 = vpop.f32.mrf.mxu0
  %v3893 = vadd.f32 %v3804, %v3892
  %v3894 = vpop.f32.mrf.mxu0
  %v3895 = vadd.f32 %v3806, %v3894
  %3896 = vmatmul.bf16.gmra.mxu0 %v782
  %v3897 = vpop.f32.mrf.mxu0
  %v3898 = vadd.f32 %v3809, %v3897
  %v3899 = vpop.f32.mrf.mxu0
  %v3900 = vadd.f32 %v3811, %v3899
  %3901 = vmatmul.bf16.gmra.mxu0 %v789
  %v3902 = vpop.f32.mrf.mxu0
  %v3903 = vadd.f32 %v3814, %v3902
  %v3904 = vpop.f32.mrf.mxu0
  %v3905 = vadd.f32 %v3816, %v3904
  %3906 = vmatmul.bf16.gmra.mxu0 %v796
  %v3907 = vpop.f32.mrf.mxu0
  %v3908 = vadd.f32 %v3819, %v3907
  %v3909 = vpop.f32.mrf.mxu0
  %v3910 = vadd.f32 %v3821, %v3909
  %3911 = vmatmul.bf16.gmra.mxu0 %v803
  %v3912 = vpop.f32.mrf.mxu0
  %v3913 = vadd.f32 %v3824, %v3912
  %v3914 = vpop.f32.mrf.mxu0
  %v3915 = vadd.f32 %v3826, %v3914
  %3916 = vmatmul.bf16.gmra.mxu0 %v810
  %v3917 = vpop.f32.mrf.mxu0
  %v3918 = vadd.f32 %v3829, %v3917
  %v3919 = vpop.f32.mrf.mxu0
  %v3920 = vadd.f32 %v3831, %v3919
  %3921 = vmatmul.bf16.gmra.mxu0 %v817
  %v3922 = vpop.f32.mrf.mxu0
  %v3923 = vadd.f32 %v3834, %v3922
  %v3924 = vpop.f32.mrf.mxu0
  %v3925 = vadd.f32 %v3836, %v3924
  %3926 = vmatmul.bf16.gmra.mxu0 %v824
  %v3927 = vpop.f32.mrf.mxu0
  %v3928 = vadd.f32 %v3839, %v3927
  %v3929 = vpop.f32.mrf.mxu0
  %v3930 = vadd.f32 %v3841, %v3929
  %3931 = vmatmul.bf16.gmra.mxu0 %v831
  %v3932 = vpop.f32.mrf.mxu0
  %v3933 = vadd.f32 %v3844, %v3932
  %v3934 = vpop.f32.mrf.mxu0
  %v3935 = vadd.f32 %v3846, %v3934
  %3936 = vmatmul.bf16.gmra.mxu0 %v838
  %v3937 = vpop.f32.mrf.mxu0
  %v3938 = vadd.f32 %v3849, %v3937
  %v3939 = vpop.f32.mrf.mxu0
  %v3940 = vadd.f32 %v3851, %v3939
  %3941 = vmatmul.bf16.gmra.mxu0 %v845
  %v3942 = vpop.f32.mrf.mxu0
  %v3943 = vadd.f32 %v3854, %v3942
  %v3944 = vpop.f32.mrf.mxu0
  %v3945 = vadd.f32 %v3856, %v3944
  %3946 = vdwg.mxu0
  %3947 = vmatpush.bf16.msra.mxu0 %v1661
  %3948 = vmatpush.bf16.msra.mxu0 %v1657
  %3949 = vmatpush.bf16.msra.mxu0 %v1653
  %3950 = vmatpush.bf16.msra.mxu0 %v1649
  %3951 = vmatpush.bf16.msra.mxu0 %v1645
  %3952 = vmatpush.bf16.msra.mxu0 %v1641
  %3953 = vmatpush.bf16.msra.mxu0 %v1637
  %3954 = vmatpush.bf16.msra.mxu0 %v1633
  %3955 = vmatmul.bf16.gmra.mxu0 %v734
  %v3956 = vpop.f32.mrf.mxu0
  %v3957 = vadd.f32 %v377, %v3956
  %v3958 = vpop.f32.mrf.mxu0
  %v3959 = vadd.f32 %v377, %v3958
  %3960 = vmatmul.bf16.gmra.mxu0 %v741
  %v3961 = vpop.f32.mrf.mxu0
  %v3962 = vadd.f32 %v377, %v3961
  %v3963 = vpop.f32.mrf.mxu0
  %v3964 = vadd.f32 %v377, %v3963
  %3965 = vmatmul.bf16.gmra.mxu0 %v748
  %v3966 = vpop.f32.mrf.mxu0
  %v3967 = vadd.f32 %v377, %v3966
  %v3968 = vpop.f32.mrf.mxu0
  %v3969 = vadd.f32 %v377, %v3968
  %3970 = vmatmul.bf16.gmra.mxu0 %v755
  %v3971 = vpop.f32.mrf.mxu0
  %v3972 = vadd.f32 %v377, %v3971
  %v3973 = vpop.f32.mrf.mxu0
  %v3974 = vadd.f32 %v377, %v3973
  %3975 = vmatmul.bf16.gmra.mxu0 %v762
  %v3976 = vpop.f32.mrf.mxu0
  %v3977 = vadd.f32 %v377, %v3976
  %v3978 = vpop.f32.mrf.mxu0
  %v3979 = vadd.f32 %v377, %v3978
  %3980 = vmatmul.bf16.gmra.mxu0 %v769
  %v3981 = vpop.f32.mrf.mxu0
  %v3982 = vadd.f32 %v377, %v3981
  %v3983 = vpop.f32.mrf.mxu0
  %v3984 = vadd.f32 %v377, %v3983
  %3985 = vmatmul.bf16.gmra.mxu0 %v776
  %v3986 = vpop.f32.mrf.mxu0
  %v3987 = vadd.f32 %v377, %v3986
  %v3988 = vpop.f32.mrf.mxu0
  %v3989 = vadd.f32 %v377, %v3988
  %3990 = vmatmul.bf16.gmra.mxu0 %v783
  %v3991 = vpop.f32.mrf.mxu0
  %v3992 = vadd.f32 %v377, %v3991
  %v3993 = vpop.f32.mrf.mxu0
  %v3994 = vadd.f32 %v377, %v3993
  %3995 = vmatmul.bf16.gmra.mxu0 %v790
  %v3996 = vpop.f32.mrf.mxu0
  %v3997 = vadd.f32 %v377, %v3996
  %v3998 = vpop.f32.mrf.mxu0
  %v3999 = vadd.f32 %v377, %v3998
  %4000 = vmatmul.bf16.gmra.mxu0 %v797
  %v4001 = vpop.f32.mrf.mxu0
  %v4002 = vadd.f32 %v377, %v4001
  %v4003 = vpop.f32.mrf.mxu0
  %v4004 = vadd.f32 %v377, %v4003
  %4005 = vmatmul.bf16.gmra.mxu0 %v804
  %v4006 = vpop.f32.mrf.mxu0
  %v4007 = vadd.f32 %v377, %v4006
  %v4008 = vpop.f32.mrf.mxu0
  %v4009 = vadd.f32 %v377, %v4008
  %4010 = vmatmul.bf16.gmra.mxu0 %v811
  %v4011 = vpop.f32.mrf.mxu0
  %v4012 = vadd.f32 %v377, %v4011
  %v4013 = vpop.f32.mrf.mxu0
  %v4014 = vadd.f32 %v377, %v4013
  %4015 = vmatmul.bf16.gmra.mxu0 %v818
  %v4016 = vpop.f32.mrf.mxu0
  %v4017 = vadd.f32 %v377, %v4016
  %v4018 = vpop.f32.mrf.mxu0
  %v4019 = vadd.f32 %v377, %v4018
  %4020 = vmatmul.bf16.gmra.mxu0 %v825
  %v4021 = vpop.f32.mrf.mxu0
  %v4022 = vadd.f32 %v377, %v4021
  %v4023 = vpop.f32.mrf.mxu0
  %v4024 = vadd.f32 %v377, %v4023
  %4025 = vmatmul.bf16.gmra.mxu0 %v832
  %v4026 = vpop.f32.mrf.mxu0
  %v4027 = vadd.f32 %v377, %v4026
  %v4028 = vpop.f32.mrf.mxu0
  %v4029 = vadd.f32 %v377, %v4028
  %4030 = vmatmul.bf16.gmra.mxu0 %v839
  %v4031 = vpop.f32.mrf.mxu0
  %v4032 = vadd.f32 %v377, %v4031
  %v4033 = vpop.f32.mrf.mxu0
  %v4034 = vadd.f32 %v377, %v4033
  %4035 = vdwg.mxu0
  %4036 = vmatpush.bf16.msra.mxu0 %v1693
  %4037 = vmatpush.bf16.msra.mxu0 %v1689
  %4038 = vmatpush.bf16.msra.mxu0 %v1685
  %4039 = vmatpush.bf16.msra.mxu0 %v1681
  %4040 = vmatpush.bf16.msra.mxu0 %v1677
  %4041 = vmatpush.bf16.msra.mxu0 %v1673
  %4042 = vmatpush.bf16.msra.mxu0 %v1669
  %4043 = vmatpush.bf16.msra.mxu0 %v1665
  %4044 = vmatmul.bf16.gmra.mxu0 %v735
  %v4045 = vpop.f32.mrf.mxu0
  %v4046 = vadd.f32 %v3957, %v4045
  %v4047 = vpop.f32.mrf.mxu0
  %v4048 = vadd.f32 %v3959, %v4047
  %4049 = vmatmul.bf16.gmra.mxu0 %v742
  %v4050 = vpop.f32.mrf.mxu0
  %v4051 = vadd.f32 %v3962, %v4050
  %v4052 = vpop.f32.mrf.mxu0
  %v4053 = vadd.f32 %v3964, %v4052
  %4054 = vmatmul.bf16.gmra.mxu0 %v749
  %v4055 = vpop.f32.mrf.mxu0
  %v4056 = vadd.f32 %v3967, %v4055
  %v4057 = vpop.f32.mrf.mxu0
  %v4058 = vadd.f32 %v3969, %v4057
  %4059 = vmatmul.bf16.gmra.mxu0 %v756
  %v4060 = vpop.f32.mrf.mxu0
  %v4061 = vadd.f32 %v3972, %v4060
  %v4062 = vpop.f32.mrf.mxu0
  %v4063 = vadd.f32 %v3974, %v4062
  %4064 = vmatmul.bf16.gmra.mxu0 %v763
  %v4065 = vpop.f32.mrf.mxu0
  %v4066 = vadd.f32 %v3977, %v4065
  %v4067 = vpop.f32.mrf.mxu0
  %v4068 = vadd.f32 %v3979, %v4067
  %4069 = vmatmul.bf16.gmra.mxu0 %v770
  %v4070 = vpop.f32.mrf.mxu0
  %v4071 = vadd.f32 %v3982, %v4070
  %v4072 = vpop.f32.mrf.mxu0
  %v4073 = vadd.f32 %v3984, %v4072
  %4074 = vmatmul.bf16.gmra.mxu0 %v777
  %v4075 = vpop.f32.mrf.mxu0
  %v4076 = vadd.f32 %v3987, %v4075
  %v4077 = vpop.f32.mrf.mxu0
  %v4078 = vadd.f32 %v3989, %v4077
  %4079 = vmatmul.bf16.gmra.mxu0 %v784
  %v4080 = vpop.f32.mrf.mxu0
  %v4081 = vadd.f32 %v3992, %v4080
  %v4082 = vpop.f32.mrf.mxu0
  %v4083 = vadd.f32 %v3994, %v4082
  %4084 = vmatmul.bf16.gmra.mxu0 %v791
  %v4085 = vpop.f32.mrf.mxu0
  %v4086 = vadd.f32 %v3997, %v4085
  %v4087 = vpop.f32.mrf.mxu0
  %v4088 = vadd.f32 %v3999, %v4087
  %4089 = vmatmul.bf16.gmra.mxu0 %v798
  %v4090 = vpop.f32.mrf.mxu0
  %v4091 = vadd.f32 %v4002, %v4090
  %v4092 = vpop.f32.mrf.mxu0
  %v4093 = vadd.f32 %v4004, %v4092
  %4094 = vmatmul.bf16.gmra.mxu0 %v805
  %v4095 = vpop.f32.mrf.mxu0
  %v4096 = vadd.f32 %v4007, %v4095
  %v4097 = vpop.f32.mrf.mxu0
  %v4098 = vadd.f32 %v4009, %v4097
  %4099 = vmatmul.bf16.gmra.mxu0 %v812
  %v4100 = vpop.f32.mrf.mxu0
  %v4101 = vadd.f32 %v4012, %v4100
  %v4102 = vpop.f32.mrf.mxu0
  %v4103 = vadd.f32 %v4014, %v4102
  %4104 = vmatmul.bf16.gmra.mxu0 %v819
  %v4105 = vpop.f32.mrf.mxu0
  %v4106 = vadd.f32 %v4017, %v4105
  %v4107 = vpop.f32.mrf.mxu0
  %v4108 = vadd.f32 %v4019, %v4107
  %4109 = vmatmul.bf16.gmra.mxu0 %v826
  %v4110 = vpop.f32.mrf.mxu0
  %v4111 = vadd.f32 %v4022, %v4110
  %v4112 = vpop.f32.mrf.mxu0
  %v4113 = vadd.f32 %v4024, %v4112
  %4114 = vmatmul.bf16.gmra.mxu0 %v833
  %v4115 = vpop.f32.mrf.mxu0
  %v4116 = vadd.f32 %v4027, %v4115
  %v4117 = vpop.f32.mrf.mxu0
  %v4118 = vadd.f32 %v4029, %v4117
  %4119 = vmatmul.bf16.gmra.mxu0 %v840
  %v4120 = vpop.f32.mrf.mxu0
  %v4121 = vadd.f32 %v4032, %v4120
  %v4122 = vpop.f32.mrf.mxu0
  %v4123 = vadd.f32 %v4034, %v4122
  %4124 = vdwg.mxu0
  %4125 = vmatpush.bf16.msra.mxu0 %v1725
  %4126 = vmatpush.bf16.msra.mxu0 %v1721
  %4127 = vmatpush.bf16.msra.mxu0 %v1717
  %4128 = vmatpush.bf16.msra.mxu0 %v1713
  %4129 = vmatpush.bf16.msra.mxu0 %v1709
  %4130 = vmatpush.bf16.msra.mxu0 %v1705
  %4131 = vmatpush.bf16.msra.mxu0 %v1701
  %4132 = vmatpush.bf16.msra.mxu0 %v1697
  %4133 = vmatmul.bf16.gmra.mxu0 %v736
  %v4134 = vpop.f32.mrf.mxu0
  %v4135 = vadd.f32 %v4046, %v4134
  %v4136 = vpop.f32.mrf.mxu0
  %v4137 = vadd.f32 %v4048, %v4136
  %4138 = vmatmul.bf16.gmra.mxu0 %v743
  %v4139 = vpop.f32.mrf.mxu0
  %v4140 = vadd.f32 %v4051, %v4139
  %v4141 = vpop.f32.mrf.mxu0
  %v4142 = vadd.f32 %v4053, %v4141
  %4143 = vmatmul.bf16.gmra.mxu0 %v750
  %v4144 = vpop.f32.mrf.mxu0
  %v4145 = vadd.f32 %v4056, %v4144
  %v4146 = vpop.f32.mrf.mxu0
  %v4147 = vadd.f32 %v4058, %v4146
  %4148 = vmatmul.bf16.gmra.mxu0 %v757
  %v4149 = vpop.f32.mrf.mxu0
  %v4150 = vadd.f32 %v4061, %v4149
  %v4151 = vpop.f32.mrf.mxu0
  %v4152 = vadd.f32 %v4063, %v4151
  %4153 = vmatmul.bf16.gmra.mxu0 %v764
  %v4154 = vpop.f32.mrf.mxu0
  %v4155 = vadd.f32 %v4066, %v4154
  %v4156 = vpop.f32.mrf.mxu0
  %v4157 = vadd.f32 %v4068, %v4156
  %4158 = vmatmul.bf16.gmra.mxu0 %v771
  %v4159 = vpop.f32.mrf.mxu0
  %v4160 = vadd.f32 %v4071, %v4159
  %v4161 = vpop.f32.mrf.mxu0
  %v4162 = vadd.f32 %v4073, %v4161
  %4163 = vmatmul.bf16.gmra.mxu0 %v778
  %v4164 = vpop.f32.mrf.mxu0
  %v4165 = vadd.f32 %v4076, %v4164
  %v4166 = vpop.f32.mrf.mxu0
  %v4167 = vadd.f32 %v4078, %v4166
  %4168 = vmatmul.bf16.gmra.mxu0 %v785
  %v4169 = vpop.f32.mrf.mxu0
  %v4170 = vadd.f32 %v4081, %v4169
  %v4171 = vpop.f32.mrf.mxu0
  %v4172 = vadd.f32 %v4083, %v4171
  %4173 = vmatmul.bf16.gmra.mxu0 %v792
  %v4174 = vpop.f32.mrf.mxu0
  %v4175 = vadd.f32 %v4086, %v4174
  %v4176 = vpop.f32.mrf.mxu0
  %v4177 = vadd.f32 %v4088, %v4176
  %4178 = vmatmul.bf16.gmra.mxu0 %v799
  %v4179 = vpop.f32.mrf.mxu0
  %v4180 = vadd.f32 %v4091, %v4179
  %v4181 = vpop.f32.mrf.mxu0
  %v4182 = vadd.f32 %v4093, %v4181
  %4183 = vmatmul.bf16.gmra.mxu0 %v806
  %v4184 = vpop.f32.mrf.mxu0
  %v4185 = vadd.f32 %v4096, %v4184
  %v4186 = vpop.f32.mrf.mxu0
  %v4187 = vadd.f32 %v4098, %v4186
  %4188 = vmatmul.bf16.gmra.mxu0 %v813
  %v4189 = vpop.f32.mrf.mxu0
  %v4190 = vadd.f32 %v4101, %v4189
  %v4191 = vpop.f32.mrf.mxu0
  %v4192 = vadd.f32 %v4103, %v4191
  %4193 = vmatmul.bf16.gmra.mxu0 %v820
  %v4194 = vpop.f32.mrf.mxu0
  %v4195 = vadd.f32 %v4106, %v4194
  %v4196 = vpop.f32.mrf.mxu0
  %v4197 = vadd.f32 %v4108, %v4196
  %4198 = vmatmul.bf16.gmra.mxu0 %v827
  %v4199 = vpop.f32.mrf.mxu0
  %v4200 = vadd.f32 %v4111, %v4199
  %v4201 = vpop.f32.mrf.mxu0
  %v4202 = vadd.f32 %v4113, %v4201
  %4203 = vmatmul.bf16.gmra.mxu0 %v834
  %v4204 = vpop.f32.mrf.mxu0
  %v4205 = vadd.f32 %v4116, %v4204
  %v4206 = vpop.f32.mrf.mxu0
  %v4207 = vadd.f32 %v4118, %v4206
  %4208 = vmatmul.bf16.gmra.mxu0 %v841
  %v4209 = vpop.f32.mrf.mxu0
  %v4210 = vadd.f32 %v4121, %v4209
  %v4211 = vpop.f32.mrf.mxu0
  %v4212 = vadd.f32 %v4123, %v4211
  %4213 = vdwg.mxu0
  %4214 = vmatpush.bf16.msra.mxu0 %v1757
  %4215 = vmatpush.bf16.msra.mxu0 %v1753
  %4216 = vmatpush.bf16.msra.mxu0 %v1749
  %4217 = vmatpush.bf16.msra.mxu0 %v1745
  %4218 = vmatpush.bf16.msra.mxu0 %v1741
  %4219 = vmatpush.bf16.msra.mxu0 %v1737
  %4220 = vmatpush.bf16.msra.mxu0 %v1733
  %4221 = vmatpush.bf16.msra.mxu0 %v1729
  %4222 = vmatmul.bf16.gmra.mxu0 %v737
  %v4223 = vpop.f32.mrf.mxu0
  %v4224 = vadd.f32 %v4135, %v4223
  %v4225 = vpop.f32.mrf.mxu0
  %v4226 = vadd.f32 %v4137, %v4225
  %4227 = vmatmul.bf16.gmra.mxu0 %v744
  %v4228 = vpop.f32.mrf.mxu0
  %v4229 = vadd.f32 %v4140, %v4228
  %v4230 = vpop.f32.mrf.mxu0
  %v4231 = vadd.f32 %v4142, %v4230
  %4232 = vmatmul.bf16.gmra.mxu0 %v751
  %v4233 = vpop.f32.mrf.mxu0
  %v4234 = vadd.f32 %v4145, %v4233
  %v4235 = vpop.f32.mrf.mxu0
  %v4236 = vadd.f32 %v4147, %v4235
  %4237 = vmatmul.bf16.gmra.mxu0 %v758
  %v4238 = vpop.f32.mrf.mxu0
  %v4239 = vadd.f32 %v4150, %v4238
  %v4240 = vpop.f32.mrf.mxu0
  %v4241 = vadd.f32 %v4152, %v4240
  %4242 = vmatmul.bf16.gmra.mxu0 %v765
  %v4243 = vpop.f32.mrf.mxu0
  %v4244 = vadd.f32 %v4155, %v4243
  %v4245 = vpop.f32.mrf.mxu0
  %v4246 = vadd.f32 %v4157, %v4245
  %4247 = vmatmul.bf16.gmra.mxu0 %v772
  %v4248 = vpop.f32.mrf.mxu0
  %v4249 = vadd.f32 %v4160, %v4248
  %v4250 = vpop.f32.mrf.mxu0
  %v4251 = vadd.f32 %v4162, %v4250
  %4252 = vmatmul.bf16.gmra.mxu0 %v779
  %v4253 = vpop.f32.mrf.mxu0
  %v4254 = vadd.f32 %v4165, %v4253
  %v4255 = vpop.f32.mrf.mxu0
  %v4256 = vadd.f32 %v4167, %v4255
  %4257 = vmatmul.bf16.gmra.mxu0 %v786
  %v4258 = vpop.f32.mrf.mxu0
  %v4259 = vadd.f32 %v4170, %v4258
  %v4260 = vpop.f32.mrf.mxu0
  %v4261 = vadd.f32 %v4172, %v4260
  %4262 = vmatmul.bf16.gmra.mxu0 %v793
  %v4263 = vpop.f32.mrf.mxu0
  %v4264 = vadd.f32 %v4175, %v4263
  %v4265 = vpop.f32.mrf.mxu0
  %v4266 = vadd.f32 %v4177, %v4265
  %4267 = vmatmul.bf16.gmra.mxu0 %v800
  %v4268 = vpop.f32.mrf.mxu0
  %v4269 = vadd.f32 %v4180, %v4268
  %v4270 = vpop.f32.mrf.mxu0
  %v4271 = vadd.f32 %v4182, %v4270
  %4272 = vmatmul.bf16.gmra.mxu0 %v807
  %v4273 = vpop.f32.mrf.mxu0
  %v4274 = vadd.f32 %v4185, %v4273
  %v4275 = vpop.f32.mrf.mxu0
  %v4276 = vadd.f32 %v4187, %v4275
  %4277 = vmatmul.bf16.gmra.mxu0 %v814
  %v4278 = vpop.f32.mrf.mxu0
  %v4279 = vadd.f32 %v4190, %v4278
  %v4280 = vpop.f32.mrf.mxu0
  %v4281 = vadd.f32 %v4192, %v4280
  %4282 = vmatmul.bf16.gmra.mxu0 %v821
  %v4283 = vpop.f32.mrf.mxu0
  %v4284 = vadd.f32 %v4195, %v4283
  %v4285 = vpop.f32.mrf.mxu0
  %v4286 = vadd.f32 %v4197, %v4285
  %4287 = vmatmul.bf16.gmra.mxu0 %v828
  %v4288 = vpop.f32.mrf.mxu0
  %v4289 = vadd.f32 %v4200, %v4288
  %v4290 = vpop.f32.mrf.mxu0
  %v4291 = vadd.f32 %v4202, %v4290
  %4292 = vmatmul.bf16.gmra.mxu0 %v835
  %v4293 = vpop.f32.mrf.mxu0
  %v4294 = vadd.f32 %v4205, %v4293
  %v4295 = vpop.f32.mrf.mxu0
  %v4296 = vadd.f32 %v4207, %v4295
  %4297 = vmatmul.bf16.gmra.mxu0 %v842
  %v4298 = vpop.f32.mrf.mxu0
  %v4299 = vadd.f32 %v4210, %v4298
  %v4300 = vpop.f32.mrf.mxu0
  %v4301 = vadd.f32 %v4212, %v4300
  %4302 = vdwg.mxu0
  %4303 = vmatpush.bf16.msra.mxu0 %v1789
  %4304 = vmatpush.bf16.msra.mxu0 %v1785
  %4305 = vmatpush.bf16.msra.mxu0 %v1781
  %4306 = vmatpush.bf16.msra.mxu0 %v1777
  %4307 = vmatpush.bf16.msra.mxu0 %v1773
  %4308 = vmatpush.bf16.msra.mxu0 %v1769
  %4309 = vmatpush.bf16.msra.mxu0 %v1765
  %4310 = vmatpush.bf16.msra.mxu0 %v1761
  %4311 = vmatmul.bf16.gmra.mxu0 %v738
  %v4312 = vpop.f32.mrf.mxu0
  %v4313 = vadd.f32 %v4224, %v4312
  %v4314 = vpop.f32.mrf.mxu0
  %v4315 = vadd.f32 %v4226, %v4314
  %4316 = vmatmul.bf16.gmra.mxu0 %v745
  %v4317 = vpop.f32.mrf.mxu0
  %v4318 = vadd.f32 %v4229, %v4317
  %v4319 = vpop.f32.mrf.mxu0
  %v4320 = vadd.f32 %v4231, %v4319
  %4321 = vmatmul.bf16.gmra.mxu0 %v752
  %v4322 = vpop.f32.mrf.mxu0
  %v4323 = vadd.f32 %v4234, %v4322
  %v4324 = vpop.f32.mrf.mxu0
  %v4325 = vadd.f32 %v4236, %v4324
  %4326 = vmatmul.bf16.gmra.mxu0 %v759
  %v4327 = vpop.f32.mrf.mxu0
  %v4328 = vadd.f32 %v4239, %v4327
  %v4329 = vpop.f32.mrf.mxu0
  %v4330 = vadd.f32 %v4241, %v4329
  %4331 = vmatmul.bf16.gmra.mxu0 %v766
  %v4332 = vpop.f32.mrf.mxu0
  %v4333 = vadd.f32 %v4244, %v4332
  %v4334 = vpop.f32.mrf.mxu0
  %v4335 = vadd.f32 %v4246, %v4334
  %4336 = vmatmul.bf16.gmra.mxu0 %v773
  %v4337 = vpop.f32.mrf.mxu0
  %v4338 = vadd.f32 %v4249, %v4337
  %v4339 = vpop.f32.mrf.mxu0
  %v4340 = vadd.f32 %v4251, %v4339
  %4341 = vmatmul.bf16.gmra.mxu0 %v780
  %v4342 = vpop.f32.mrf.mxu0
  %v4343 = vadd.f32 %v4254, %v4342
  %v4344 = vpop.f32.mrf.mxu0
  %v4345 = vadd.f32 %v4256, %v4344
  %4346 = vmatmul.bf16.gmra.mxu0 %v787
  %v4347 = vpop.f32.mrf.mxu0
  %v4348 = vadd.f32 %v4259, %v4347
  %v4349 = vpop.f32.mrf.mxu0
  %v4350 = vadd.f32 %v4261, %v4349
  %4351 = vmatmul.bf16.gmra.mxu0 %v794
  %v4352 = vpop.f32.mrf.mxu0
  %v4353 = vadd.f32 %v4264, %v4352
  %v4354 = vpop.f32.mrf.mxu0
  %v4355 = vadd.f32 %v4266, %v4354
  %4356 = vmatmul.bf16.gmra.mxu0 %v801
  %v4357 = vpop.f32.mrf.mxu0
  %v4358 = vadd.f32 %v4269, %v4357
  %v4359 = vpop.f32.mrf.mxu0
  %v4360 = vadd.f32 %v4271, %v4359
  %4361 = vmatmul.bf16.gmra.mxu0 %v808
  %v4362 = vpop.f32.mrf.mxu0
  %v4363 = vadd.f32 %v4274, %v4362
  %v4364 = vpop.f32.mrf.mxu0
  %v4365 = vadd.f32 %v4276, %v4364
  %4366 = vmatmul.bf16.gmra.mxu0 %v815
  %v4367 = vpop.f32.mrf.mxu0
  %v4368 = vadd.f32 %v4279, %v4367
  %v4369 = vpop.f32.mrf.mxu0
  %v4370 = vadd.f32 %v4281, %v4369
  %4371 = vmatmul.bf16.gmra.mxu0 %v822
  %v4372 = vpop.f32.mrf.mxu0
  %v4373 = vadd.f32 %v4284, %v4372
  %v4374 = vpop.f32.mrf.mxu0
  %v4375 = vadd.f32 %v4286, %v4374
  %4376 = vmatmul.bf16.gmra.mxu0 %v829
  %v4377 = vpop.f32.mrf.mxu0
  %v4378 = vadd.f32 %v4289, %v4377
  %v4379 = vpop.f32.mrf.mxu0
  %v4380 = vadd.f32 %v4291, %v4379
  %4381 = vmatmul.bf16.gmra.mxu0 %v836
  %v4382 = vpop.f32.mrf.mxu0
  %v4383 = vadd.f32 %v4294, %v4382
  %v4384 = vpop.f32.mrf.mxu0
  %v4385 = vadd.f32 %v4296, %v4384
  %4386 = vmatmul.bf16.gmra.mxu0 %v843
  %v4387 = vpop.f32.mrf.mxu0
  %v4388 = vadd.f32 %v4299, %v4387
  %v4389 = vpop.f32.mrf.mxu0
  %v4390 = vadd.f32 %v4301, %v4389
  %4391 = vdwg.mxu0
  %4392 = vmatpush.bf16.msra.mxu0 %v1821
  %4393 = vmatpush.bf16.msra.mxu0 %v1817
  %4394 = vmatpush.bf16.msra.mxu0 %v1813
  %4395 = vmatpush.bf16.msra.mxu0 %v1809
  %4396 = vmatpush.bf16.msra.mxu0 %v1805
  %4397 = vmatpush.bf16.msra.mxu0 %v1801
  %4398 = vmatpush.bf16.msra.mxu0 %v1797
  %4399 = vmatpush.bf16.msra.mxu0 %v1793
  %4400 = vmatmul.bf16.gmra.mxu0 %v739
  %v4401 = vpop.f32.mrf.mxu0
  %v4402 = vadd.f32 %v4313, %v4401
  %v4403 = vpop.f32.mrf.mxu0
  %v4404 = vadd.f32 %v4315, %v4403
  %4405 = vmatmul.bf16.gmra.mxu0 %v746
  %v4406 = vpop.f32.mrf.mxu0
  %v4407 = vadd.f32 %v4318, %v4406
  %v4408 = vpop.f32.mrf.mxu0
  %v4409 = vadd.f32 %v4320, %v4408
  %4410 = vmatmul.bf16.gmra.mxu0 %v753
  %v4411 = vpop.f32.mrf.mxu0
  %v4412 = vadd.f32 %v4323, %v4411
  %v4413 = vpop.f32.mrf.mxu0
  %v4414 = vadd.f32 %v4325, %v4413
  %4415 = vmatmul.bf16.gmra.mxu0 %v760
  %v4416 = vpop.f32.mrf.mxu0
  %v4417 = vadd.f32 %v4328, %v4416
  %v4418 = vpop.f32.mrf.mxu0
  %v4419 = vadd.f32 %v4330, %v4418
  %4420 = vmatmul.bf16.gmra.mxu0 %v767
  %v4421 = vpop.f32.mrf.mxu0
  %v4422 = vadd.f32 %v4333, %v4421
  %v4423 = vpop.f32.mrf.mxu0
  %v4424 = vadd.f32 %v4335, %v4423
  %4425 = vmatmul.bf16.gmra.mxu0 %v774
  %v4426 = vpop.f32.mrf.mxu0
  %v4427 = vadd.f32 %v4338, %v4426
  %v4428 = vpop.f32.mrf.mxu0
  %v4429 = vadd.f32 %v4340, %v4428
  %4430 = vmatmul.bf16.gmra.mxu0 %v781
  %v4431 = vpop.f32.mrf.mxu0
  %v4432 = vadd.f32 %v4343, %v4431
  %v4433 = vpop.f32.mrf.mxu0
  %v4434 = vadd.f32 %v4345, %v4433
  %4435 = vmatmul.bf16.gmra.mxu0 %v788
  %v4436 = vpop.f32.mrf.mxu0
  %v4437 = vadd.f32 %v4348, %v4436
  %v4438 = vpop.f32.mrf.mxu0
  %v4439 = vadd.f32 %v4350, %v4438
  %4440 = vmatmul.bf16.gmra.mxu0 %v795
  %v4441 = vpop.f32.mrf.mxu0
  %v4442 = vadd.f32 %v4353, %v4441
  %v4443 = vpop.f32.mrf.mxu0
  %v4444 = vadd.f32 %v4355, %v4443
  %4445 = vmatmul.bf16.gmra.mxu0 %v802
  %v4446 = vpop.f32.mrf.mxu0
  %v4447 = vadd.f32 %v4358, %v4446
  %v4448 = vpop.f32.mrf.mxu0
  %v4449 = vadd.f32 %v4360, %v4448
  %4450 = vmatmul.bf16.gmra.mxu0 %v809
  %v4451 = vpop.f32.mrf.mxu0
  %v4452 = vadd.f32 %v4363, %v4451
  %v4453 = vpop.f32.mrf.mxu0
  %v4454 = vadd.f32 %v4365, %v4453
  %4455 = vmatmul.bf16.gmra.mxu0 %v816
  %v4456 = vpop.f32.mrf.mxu0
  %v4457 = vadd.f32 %v4368, %v4456
  %v4458 = vpop.f32.mrf.mxu0
  %v4459 = vadd.f32 %v4370, %v4458
  %4460 = vmatmul.bf16.gmra.mxu0 %v823
  %v4461 = vpop.f32.mrf.mxu0
  %v4462 = vadd.f32 %v4373, %v4461
  %v4463 = vpop.f32.mrf.mxu0
  %v4464 = vadd.f32 %v4375, %v4463
  %4465 = vmatmul.bf16.gmra.mxu0 %v830
  %v4466 = vpop.f32.mrf.mxu0
  %v4467 = vadd.f32 %v4378, %v4466
  %v4468 = vpop.f32.mrf.mxu0
  %v4469 = vadd.f32 %v4380, %v4468
  %4470 = vmatmul.bf16.gmra.mxu0 %v837
  %v4471 = vpop.f32.mrf.mxu0
  %v4472 = vadd.f32 %v4383, %v4471
  %v4473 = vpop.f32.mrf.mxu0
  %v4474 = vadd.f32 %v4385, %v4473
  %4475 = vmatmul.bf16.gmra.mxu0 %v844
  %v4476 = vpop.f32.mrf.mxu0
  %v4477 = vadd.f32 %v4388, %v4476
  %v4478 = vpop.f32.mrf.mxu0
  %v4479 = vadd.f32 %v4390, %v4478
  %4480 = vdwg.mxu0
  %4481 = vmatpush.bf16.msra.mxu0 %v1853
  %4482 = vmatpush.bf16.msra.mxu0 %v1849
  %4483 = vmatpush.bf16.msra.mxu0 %v1845
  %4484 = vmatpush.bf16.msra.mxu0 %v1841
  %4485 = vmatpush.bf16.msra.mxu0 %v1837
  %4486 = vmatpush.bf16.msra.mxu0 %v1833
  %4487 = vmatpush.bf16.msra.mxu0 %v1829
  %4488 = vmatpush.bf16.msra.mxu0 %v1825
  %4489 = vmatmul.bf16.gmra.mxu0 %v740
  %v4490 = vpop.f32.mrf.mxu0
  %v4491 = vadd.f32 %v4402, %v4490
  %v4492 = vpop.f32.mrf.mxu0
  %v4493 = vadd.f32 %v4404, %v4492
  %4494 = vmatmul.bf16.gmra.mxu0 %v747
  %v4495 = vpop.f32.mrf.mxu0
  %v4496 = vadd.f32 %v4407, %v4495
  %v4497 = vpop.f32.mrf.mxu0
  %v4498 = vadd.f32 %v4409, %v4497
  %4499 = vmatmul.bf16.gmra.mxu0 %v754
  %v4500 = vpop.f32.mrf.mxu0
  %v4501 = vadd.f32 %v4412, %v4500
  %v4502 = vpop.f32.mrf.mxu0
  %v4503 = vadd.f32 %v4414, %v4502
  %4504 = vmatmul.bf16.gmra.mxu0 %v761
  %v4505 = vpop.f32.mrf.mxu0
  %v4506 = vadd.f32 %v4417, %v4505
  %v4507 = vpop.f32.mrf.mxu0
  %v4508 = vadd.f32 %v4419, %v4507
  %4509 = vmatmul.bf16.gmra.mxu0 %v768
  %v4510 = vpop.f32.mrf.mxu0
  %v4511 = vadd.f32 %v4422, %v4510
  %v4512 = vpop.f32.mrf.mxu0
  %v4513 = vadd.f32 %v4424, %v4512
  %4514 = vmatmul.bf16.gmra.mxu0 %v775
  %v4515 = vpop.f32.mrf.mxu0
  %v4516 = vadd.f32 %v4427, %v4515
  %v4517 = vpop.f32.mrf.mxu0
  %v4518 = vadd.f32 %v4429, %v4517
  %4519 = vmatmul.bf16.gmra.mxu0 %v782
  %v4520 = vpop.f32.mrf.mxu0
  %v4521 = vadd.f32 %v4432, %v4520
  %v4522 = vpop.f32.mrf.mxu0
  %v4523 = vadd.f32 %v4434, %v4522
  %4524 = vmatmul.bf16.gmra.mxu0 %v789
  %v4525 = vpop.f32.mrf.mxu0
  %v4526 = vadd.f32 %v4437, %v4525
  %v4527 = vpop.f32.mrf.mxu0
  %v4528 = vadd.f32 %v4439, %v4527
  %4529 = vmatmul.bf16.gmra.mxu0 %v796
  %v4530 = vpop.f32.mrf.mxu0
  %v4531 = vadd.f32 %v4442, %v4530
  %v4532 = vpop.f32.mrf.mxu0
  %v4533 = vadd.f32 %v4444, %v4532
  %4534 = vmatmul.bf16.gmra.mxu0 %v803
  %v4535 = vpop.f32.mrf.mxu0
  %v4536 = vadd.f32 %v4447, %v4535
  %v4537 = vpop.f32.mrf.mxu0
  %v4538 = vadd.f32 %v4449, %v4537
  %4539 = vmatmul.bf16.gmra.mxu0 %v810
  %v4540 = vpop.f32.mrf.mxu0
  %v4541 = vadd.f32 %v4452, %v4540
  %v4542 = vpop.f32.mrf.mxu0
  %v4543 = vadd.f32 %v4454, %v4542
  %4544 = vmatmul.bf16.gmra.mxu0 %v817
  %v4545 = vpop.f32.mrf.mxu0
  %v4546 = vadd.f32 %v4457, %v4545
  %v4547 = vpop.f32.mrf.mxu0
  %v4548 = vadd.f32 %v4459, %v4547
  %4549 = vmatmul.bf16.gmra.mxu0 %v824
  %v4550 = vpop.f32.mrf.mxu0
  %v4551 = vadd.f32 %v4462, %v4550
  %v4552 = vpop.f32.mrf.mxu0
  %v4553 = vadd.f32 %v4464, %v4552
  %4554 = vmatmul.bf16.gmra.mxu0 %v831
  %v4555 = vpop.f32.mrf.mxu0
  %v4556 = vadd.f32 %v4467, %v4555
  %v4557 = vpop.f32.mrf.mxu0
  %v4558 = vadd.f32 %v4469, %v4557
  %4559 = vmatmul.bf16.gmra.mxu0 %v838
  %v4560 = vpop.f32.mrf.mxu0
  %v4561 = vadd.f32 %v4472, %v4560
  %v4562 = vpop.f32.mrf.mxu0
  %v4563 = vadd.f32 %v4474, %v4562
  %4564 = vmatmul.bf16.gmra.mxu0 %v845
  %v4565 = vpop.f32.mrf.mxu0
  %v4566 = vadd.f32 %v4477, %v4565
  %v4567 = vpop.f32.mrf.mxu0
  %v4568 = vadd.f32 %v4479, %v4567
  %4569 = vdwg.mxu0
  %v4570 = vmax.f32 %v2622, 0.0
  %v4571 = vmax.f32 %v3245, 0.0
  %v4572 = vmax.f32 %v3868, 0.0
  %v4573 = vmax.f32 %v4491, 0.0
  %v4574 = vmax.f32 %v2624, 0.0
  %v4575 = vmax.f32 %v3247, 0.0
  %v4576 = vmax.f32 %v3870, 0.0
  %v4577 = vmax.f32 %v4493, 0.0
  %v4578 = vmax.f32 %v2627, 0.0
  %v4579 = vmax.f32 %v3250, 0.0
  %v4580 = vmax.f32 %v3873, 0.0
  %v4581 = vmax.f32 %v4496, 0.0
  %v4582 = vmax.f32 %v2629, 0.0
  %v4583 = vmax.f32 %v3252, 0.0
  %v4584 = vmax.f32 %v3875, 0.0
  %v4585 = vmax.f32 %v4498, 0.0
  %v4586 = vmax.f32 %v2632, 0.0
  %v4587 = vmax.f32 %v3255, 0.0
  %v4588 = vmax.f32 %v3878, 0.0
  %v4589 = vmax.f32 %v4501, 0.0
  %v4590 = vmax.f32 %v2634, 0.0
  %v4591 = vmax.f32 %v3257, 0.0
  %v4592 = vmax.f32 %v3880, 0.0
  %v4593 = vmax.f32 %v4503, 0.0
  %v4594 = vmax.f32 %v2637, 0.0
  %v4595 = vmax.f32 %v3260, 0.0
  %v4596 = vmax.f32 %v3883, 0.0
  %v4597 = vmax.f32 %v4506, 0.0
  %v4598 = vmax.f32 %v2639, 0.0
  %v4599 = vmax.f32 %v3262, 0.0
  %v4600 = vmax.f32 %v3885, 0.0
  %v4601 = vmax.f32 %v4508, 0.0
  %v4602 = vmax.f32 %v2642, 0.0
  %v4603 = vmax.f32 %v3265, 0.0
  %v4604 = vmax.f32 %v3888, 0.0
  %v4605 = vmax.f32 %v4511, 0.0
  %v4606 = vmax.f32 %v2644, 0.0
  %v4607 = vmax.f32 %v3267, 0.0
  %v4608 = vmax.f32 %v3890, 0.0
  %v4609 = vmax.f32 %v4513, 0.0
  %v4610 = vmax.f32 %v2647, 0.0
  %v4611 = vmax.f32 %v3270, 0.0
  %v4612 = vmax.f32 %v3893, 0.0
  %v4613 = vmax.f32 %v4516, 0.0
  %v4614 = vmax.f32 %v2649, 0.0
  %v4615 = vmax.f32 %v3272, 0.0
  %v4616 = vmax.f32 %v3895, 0.0
  %v4617 = vmax.f32 %v4518, 0.0
  %v4618 = vmax.f32 %v2652, 0.0
  %v4619 = vmax.f32 %v3275, 0.0
  %v4620 = vmax.f32 %v3898, 0.0
  %v4621 = vmax.f32 %v4521, 0.0
  %v4622 = vmax.f32 %v2654, 0.0
  %v4623 = vmax.f32 %v3277, 0.0
  %v4624 = vmax.f32 %v3900, 0.0
  %v4625 = vmax.f32 %v4523, 0.0
  %v4626 = vmax.f32 %v2657, 0.0
  %v4627 = vmax.f32 %v3280, 0.0
  %v4628 = vmax.f32 %v3903, 0.0
  %v4629 = vmax.f32 %v4526, 0.0
  %v4630 = vmax.f32 %v2659, 0.0
  %v4631 = vmax.f32 %v3282, 0.0
  %v4632 = vmax.f32 %v3905, 0.0
  %v4633 = vmax.f32 %v4528, 0.0
  %v4634 = vmax.f32 %v2662, 0.0
  %v4635 = vmax.f32 %v3285, 0.0
  %v4636 = vmax.f32 %v3908, 0.0
  %v4637 = vmax.f32 %v4531, 0.0
  %v4638 = vmax.f32 %v2664, 0.0
  %v4639 = vmax.f32 %v3287, 0.0
  %v4640 = vmax.f32 %v3910, 0.0
  %v4641 = vmax.f32 %v4533, 0.0
  %v4642 = vmax.f32 %v2667, 0.0
  %v4643 = vmax.f32 %v3290, 0.0
  %v4644 = vmax.f32 %v3913, 0.0
  %v4645 = vmax.f32 %v4536, 0.0
  %v4646 = vmax.f32 %v2669, 0.0
  %v4647 = vmax.f32 %v3292, 0.0
  %v4648 = vmax.f32 %v3915, 0.0
  %v4649 = vmax.f32 %v4538, 0.0
  %v4650 = vmax.f32 %v2672, 0.0
  %v4651 = vmax.f32 %v3295, 0.0
  %v4652 = vmax.f32 %v3918, 0.0
  %v4653 = vmax.f32 %v4541, 0.0
  %v4654 = vmax.f32 %v2674, 0.0
  %v4655 = vmax.f32 %v3297, 0.0
  %v4656 = vmax.f32 %v3920, 0.0
  %v4657 = vmax.f32 %v4543, 0.0
  %v4658 = vmax.f32 %v2677, 0.0
  %v4659 = vmax.f32 %v3300, 0.0
  %v4660 = vmax.f32 %v3923, 0.0
  %v4661 = vmax.f32 %v4546, 0.0
  %v4662 = vmax.f32 %v2679, 0.0
  %v4663 = vmax.f32 %v3302, 0.0
  %v4664 = vmax.f32 %v3925, 0.0
  %v4665 = vmax.f32 %v4548, 0.0
  %v4666 = vmax.f32 %v2682, 0.0
  %v4667 = vmax.f32 %v3305, 0.0
  %v4668 = vmax.f32 %v3928, 0.0
  %v4669 = vmax.f32 %v4551, 0.0
  %v4670 = vmax.f32 %v2684, 0.0
  %v4671 = vmax.f32 %v3307, 0.0
  %v4672 = vmax.f32 %v3930, 0.0
  %v4673 = vmax.f32 %v4553, 0.0
  %v4674 = vmax.f32 %v2687, 0.0
  %v4675 = vmax.f32 %v3310, 0.0
  %v4676 = vmax.f32 %v3933, 0.0
  %v4677 = vmax.f32 %v4556, 0.0
  %v4678 = vmax.f32 %v2689, 0.0
  %v4679 = vmax.f32 %v3312, 0.0
  %v4680 = vmax.f32 %v3935, 0.0
  %v4681 = vmax.f32 %v4558, 0.0
  %v4682 = vmax.f32 %v2692, 0.0
  %v4683 = vmax.f32 %v3315, 0.0
  %v4684 = vmax.f32 %v3938, 0.0
  %v4685 = vmax.f32 %v4561, 0.0
  %v4686 = vmax.f32 %v2694, 0.0
  %v4687 = vmax.f32 %v3317, 0.0
  %v4688 = vmax.f32 %v3940, 0.0
  %v4689 = vmax.f32 %v4563, 0.0
  %v4690 = vmax.f32 %v2697, 0.0
  %v4691 = vmax.f32 %v3320, 0.0
  %v4692 = vmax.f32 %v3943, 0.0
  %v4693 = vmax.f32 %v4566, 0.0
  %v4694 = vmax.f32 %v2699, 0.0
  %v4695 = vmax.f32 %v3322, 0.0
  %v4696 = vmax.f32 %v3945, 0.0
  %v4697 = vmax.f32 %v4568, 0.0
  %v4698 = vpack.c.bf16 %v4574, %v4570
  %v4699 = vpack.c.bf16 %v4575, %v4571
  %v4700 = vpack.c.bf16 %v4576, %v4572
  %v4701 = vpack.c.bf16 %v4577, %v4573
  %v4702 = vpack.c.bf16 %v4582, %v4578
  %v4703 = vpack.c.bf16 %v4583, %v4579
  %v4704 = vpack.c.bf16 %v4584, %v4580
  %v4705 = vpack.c.bf16 %v4585, %v4581
  %v4706 = vpack.c.bf16 %v4590, %v4586
  %v4707 = vpack.c.bf16 %v4591, %v4587
  %v4708 = vpack.c.bf16 %v4592, %v4588
  %v4709 = vpack.c.bf16 %v4593, %v4589
  %v4710 = vpack.c.bf16 %v4598, %v4594
  %v4711 = vpack.c.bf16 %v4599, %v4595
  %v4712 = vpack.c.bf16 %v4600, %v4596
  %v4713 = vpack.c.bf16 %v4601, %v4597
  %v4714 = vpack.c.bf16 %v4606, %v4602
  %v4715 = vpack.c.bf16 %v4607, %v4603
  %v4716 = vpack.c.bf16 %v4608, %v4604
  %v4717 = vpack.c.bf16 %v4609, %v4605
  %v4718 = vpack.c.bf16 %v4614, %v4610
  %v4719 = vpack.c.bf16 %v4615, %v4611
  %v4720 = vpack.c.bf16 %v4616, %v4612
  %v4721 = vpack.c.bf16 %v4617, %v4613
  %v4722 = vpack.c.bf16 %v4622, %v4618
  %v4723 = vpack.c.bf16 %v4623, %v4619
  %v4724 = vpack.c.bf16 %v4624, %v4620
  %v4725 = vpack.c.bf16 %v4625, %v4621
  %v4726 = vpack.c.bf16 %v4630, %v4626
  %v4727 = vpack.c.bf16 %v4631, %v4627
  %v4728 = vpack.c.bf16 %v4632, %v4628
  %v4729 = vpack.c.bf16 %v4633, %v4629
  %v4730 = vpack.c.bf16 %v4638, %v4634
  %v4731 = vpack.c.bf16 %v4639, %v4635
  %v4732 = vpack.c.bf16 %v4640, %v4636
  %v4733 = vpack.c.bf16 %v4641, %v4637
  %v4734 = vpack.c.bf16 %v4646, %v4642
  %v4735 = vpack.c.bf16 %v4647, %v4643
  %v4736 = vpack.c.bf16 %v4648, %v4644
  %v4737 = vpack.c.bf16 %v4649, %v4645
  %v4738 = vpack.c.bf16 %v4654, %v4650
  %v4739 = vpack.c.bf16 %v4655, %v4651
  %v4740 = vpack.c.bf16 %v4656, %v4652
  %v4741 = vpack.c.bf16 %v4657, %v4653
  %v4742 = vpack.c.bf16 %v4662, %v4658
  %v4743 = vpack.c.bf16 %v4663, %v4659
  %v4744 = vpack.c.bf16 %v4664, %v4660
  %v4745 = vpack.c.bf16 %v4665, %v4661
  %v4746 = vpack.c.bf16 %v4670, %v4666
  %v4747 = vpack.c.bf16 %v4671, %v4667
  %v4748 = vpack.c.bf16 %v4672, %v4668
  %v4749 = vpack.c.bf16 %v4673, %v4669
  %v4750 = vpack.c.bf16 %v4678, %v4674
  %v4751 = vpack.c.bf16 %v4679, %v4675
  %v4752 = vpack.c.bf16 %v4680, %v4676
  %v4753 = vpack.c.bf16 %v4681, %v4677
  %v4754 = vpack.c.bf16 %v4686, %v4682
  %v4755 = vpack.c.bf16 %v4687, %v4683
  %v4756 = vpack.c.bf16 %v4688, %v4684
  %v4757 = vpack.c.bf16 %v4689, %v4685
  %v4758 = vpack.c.bf16 %v4694, %v4690
  %v4759 = vpack.c.bf16 %v4695, %v4691
  %v4760 = vpack.c.bf16 %v4696, %v4692
  %v4761 = vpack.c.bf16 %v4697, %v4693
  %v4762 = vld [vmem:[%s3] sm:$0xf]
  %v4763 = vld [vmem:[%s3 + $0x4] sm:$0xf]
  %v4764 = vld [vmem:[%s3 + $0x8] sm:$0xf]
  %v4765 = vld [vmem:[%s3 + $0xc] sm:$0xf]
  %v4766 = vld [vmem:[%s3 + $0x10] sm:$0xf]
  %v4767 = vld [vmem:[%s3 + $0x14] sm:$0xf]
  %v4768 = vld [vmem:[%s3 + $0x18] sm:$0xf]
  %v4769 = vld [vmem:[%s3 + $0x1c] sm:$0xf]
  %v4770 = vld [vmem:[%s3 + $0x20] sm:$0xf]
  %v4771 = vld [vmem:[%s3 + $0x24] sm:$0xf]
  %v4772 = vld [vmem:[%s3 + $0x28] sm:$0xf]
  %v4773 = vld [vmem:[%s3 + $0x2c] sm:$0xf]
  %v4774 = vld [vmem:[%s3 + $0x30] sm:$0xf]
  %v4775 = vld [vmem:[%s3 + $0x34] sm:$0xf]
  %v4776 = vld [vmem:[%s3 + $0x38] sm:$0xf]
  %v4777 = vld [vmem:[%s3 + $0x3c] sm:$0xf]
  %v4778 = vld [vmem:[%s3 + $0x40] sm:$0xf]
  %v4779 = vld [vmem:[%s3 + $0x44] sm:$0xf]
  %v4780 = vld [vmem:[%s3 + $0x48] sm:$0xf]
  %v4781 = vld [vmem:[%s3 + $0x4c] sm:$0xf]
  %v4782 = vld [vmem:[%s3 + $0x50] sm:$0xf]
  %v4783 = vld [vmem:[%s3 + $0x54] sm:$0xf]
  %v4784 = vld [vmem:[%s3 + $0x58] sm:$0xf]
  %v4785 = vld [vmem:[%s3 + $0x5c] sm:$0xf]
  %v4786 = vld [vmem:[%s3 + $0x60] sm:$0xf]
  %v4787 = vld [vmem:[%s3 + $0x64] sm:$0xf]
  %v4788 = vld [vmem:[%s3 + $0x68] sm:$0xf]
  %v4789 = vld [vmem:[%s3 + $0x6c] sm:$0xf]
  %v4790 = vld [vmem:[%s3 + $0x70] sm:$0xf]
  %v4791 = vld [vmem:[%s3 + $0x74] sm:$0xf]
  %v4792 = vld [vmem:[%s3 + $0x78] sm:$0xf]
  %v4793 = vld [vmem:[%s3 + $0x7c] sm:$0xf]
  %v4794 = vld [vmem:[%s3 + $0x80] sm:$0xf]
  %v4795 = vld [vmem:[%s3 + $0x84] sm:$0xf]
  %v4796 = vld [vmem:[%s3 + $0x88] sm:$0xf]
  %v4797 = vld [vmem:[%s3 + $0x8c] sm:$0xf]
  %v4798 = vld [vmem:[%s3 + $0x90] sm:$0xf]
  %v4799 = vld [vmem:[%s3 + $0x94] sm:$0xf]
  %v4800 = vld [vmem:[%s3 + $0x98] sm:$0xf]
  %v4801 = vld [vmem:[%s3 + $0x9c] sm:$0xf]
  %v4802 = vld [vmem:[%s3 + $0xa0] sm:$0xf]
  %v4803 = vld [vmem:[%s3 + $0xa4] sm:$0xf]
  %v4804 = vld [vmem:[%s3 + $0xa8] sm:$0xf]
  %v4805 = vld [vmem:[%s3 + $0xac] sm:$0xf]
  %v4806 = vld [vmem:[%s3 + $0xb0] sm:$0xf]
  %v4807 = vld [vmem:[%s3 + $0xb4] sm:$0xf]
  %v4808 = vld [vmem:[%s3 + $0xb8] sm:$0xf]
  %v4809 = vld [vmem:[%s3 + $0xbc] sm:$0xf]
  %v4810 = vld [vmem:[%s3 + $0xc0] sm:$0xf]
  %v4811 = vld [vmem:[%s3 + $0xc4] sm:$0xf]
  %v4812 = vld [vmem:[%s3 + $0xc8] sm:$0xf]
  %v4813 = vld [vmem:[%s3 + $0xcc] sm:$0xf]
  %v4814 = vld [vmem:[%s3 + $0xd0] sm:$0xf]
  %v4815 = vld [vmem:[%s3 + $0xd4] sm:$0xf]
  %v4816 = vld [vmem:[%s3 + $0xd8] sm:$0xf]
  %v4817 = vld [vmem:[%s3 + $0xdc] sm:$0xf]
  %v4818 = vld [vmem:[%s3 + $0xe0] sm:$0xf]
  %v4819 = vld [vmem:[%s3 + $0xe4] sm:$0xf]
  %v4820 = vld [vmem:[%s3 + $0xe8] sm:$0xf]
  %v4821 = vld [vmem:[%s3 + $0xec] sm:$0xf]
  %v4822 = vld [vmem:[%s3 + $0xf0] sm:$0xf]
  %v4823 = vld [vmem:[%s3 + $0xf4] sm:$0xf]
  %v4824 = vld [vmem:[%s3 + $0xf8] sm:$0xf]
  %v4825 = vld [vmem:[%s3 + $0xfc] sm:$0xf]
  %v4826 = vld [vmem:[%s4] sm:$0x1]
  %v4828 = vperm.slane %v4826, 0
  %v4894 = vunpack.c.l.b16 %v4762
  %v4895 = vunpack.c.l.b16 %v4763
  %v4896 = vunpack.c.l.b16 %v4764
  %v4897 = vunpack.c.l.b16 %v4765
  %v4898 = vunpack.c.l.b16 %v4766
  %v4899 = vunpack.c.l.b16 %v4767
  %v4900 = vunpack.c.l.b16 %v4768
  %v4901 = vunpack.c.l.b16 %v4769
  %v4902 = vunpack.c.l.b16 %v4770
  %v4903 = vunpack.c.l.b16 %v4771
  %v4904 = vunpack.c.l.b16 %v4772
  %v4905 = vunpack.c.l.b16 %v4773
  %v4906 = vunpack.c.l.b16 %v4774
  %v4907 = vunpack.c.l.b16 %v4775
  %v4908 = vunpack.c.l.b16 %v4776
  %v4909 = vunpack.c.l.b16 %v4777
  %v4910 = vunpack.c.l.b16 %v4778
  %v4911 = vunpack.c.l.b16 %v4779
  %v4912 = vunpack.c.l.b16 %v4780
  %v4913 = vunpack.c.l.b16 %v4781
  %v4914 = vunpack.c.l.b16 %v4782
  %v4915 = vunpack.c.l.b16 %v4783
  %v4916 = vunpack.c.l.b16 %v4784
  %v4917 = vunpack.c.l.b16 %v4785
  %v4918 = vunpack.c.l.b16 %v4786
  %v4919 = vunpack.c.l.b16 %v4787
  %v4920 = vunpack.c.l.b16 %v4788
  %v4921 = vunpack.c.l.b16 %v4789
  %v4922 = vunpack.c.l.b16 %v4790
  %v4923 = vunpack.c.l.b16 %v4791
  %v4924 = vunpack.c.l.b16 %v4792
  %v4925 = vunpack.c.l.b16 %v4793
  %v4926 = vunpack.c.l.b16 %v4794
  %v4927 = vunpack.c.l.b16 %v4795
  %v4928 = vunpack.c.l.b16 %v4796
  %v4929 = vunpack.c.l.b16 %v4797
  %v4930 = vunpack.c.l.b16 %v4798
  %v4931 = vunpack.c.l.b16 %v4799
  %v4932 = vunpack.c.l.b16 %v4800
  %v4933 = vunpack.c.l.b16 %v4801
  %v4934 = vunpack.c.l.b16 %v4802
  %v4935 = vunpack.c.l.b16 %v4803
  %v4936 = vunpack.c.l.b16 %v4804
  %v4937 = vunpack.c.l.b16 %v4805
  %v4938 = vunpack.c.l.b16 %v4806
  %v4939 = vunpack.c.l.b16 %v4807
  %v4940 = vunpack.c.l.b16 %v4808
  %v4941 = vunpack.c.l.b16 %v4809
  %v4942 = vunpack.c.l.b16 %v4810
  %v4943 = vunpack.c.l.b16 %v4811
  %v4944 = vunpack.c.l.b16 %v4812
  %v4945 = vunpack.c.l.b16 %v4813
  %v4946 = vunpack.c.l.b16 %v4814
  %v4947 = vunpack.c.l.b16 %v4815
  %v4948 = vunpack.c.l.b16 %v4816
  %v4949 = vunpack.c.l.b16 %v4817
  %v4950 = vunpack.c.l.b16 %v4818
  %v4951 = vunpack.c.l.b16 %v4819
  %v4952 = vunpack.c.l.b16 %v4820
  %v4953 = vunpack.c.l.b16 %v4821
  %v4954 = vunpack.c.l.b16 %v4822
  %v4955 = vunpack.c.l.b16 %v4823
  %v4956 = vunpack.c.l.b16 %v4824
  %v4957 = vunpack.c.l.b16 %v4825
  %v4958 = vpack.c.b16 %v4895, %v4894
  %v4959 = vpack.c.b16 %v4897, %v4896
  %v4960 = vpack.c.b16 %v4899, %v4898
  %v4961 = vpack.c.b16 %v4901, %v4900
  %v4962 = vpack.c.b16 %v4903, %v4902
  %v4963 = vpack.c.b16 %v4905, %v4904
  %v4964 = vpack.c.b16 %v4907, %v4906
  %v4965 = vpack.c.b16 %v4909, %v4908
  %v4966 = vpack.c.b16 %v4911, %v4910
  %v4967 = vpack.c.b16 %v4913, %v4912
  %v4968 = vpack.c.b16 %v4915, %v4914
  %v4969 = vpack.c.b16 %v4917, %v4916
  %v4970 = vpack.c.b16 %v4919, %v4918
  %v4971 = vpack.c.b16 %v4921, %v4920
  %v4972 = vpack.c.b16 %v4923, %v4922
  %v4973 = vpack.c.b16 %v4925, %v4924
  %v4974 = vpack.c.b16 %v4927, %v4926
  %v4975 = vpack.c.b16 %v4929, %v4928
  %v4976 = vpack.c.b16 %v4931, %v4930
  %v4977 = vpack.c.b16 %v4933, %v4932
  %v4978 = vpack.c.b16 %v4935, %v4934
  %v4979 = vpack.c.b16 %v4937, %v4936
  %v4980 = vpack.c.b16 %v4939, %v4938
  %v4981 = vpack.c.b16 %v4941, %v4940
  %v4982 = vpack.c.b16 %v4943, %v4942
  %v4983 = vpack.c.b16 %v4945, %v4944
  %v4984 = vpack.c.b16 %v4947, %v4946
  %v4985 = vpack.c.b16 %v4949, %v4948
  %v4986 = vpack.c.b16 %v4951, %v4950
  %v4987 = vpack.c.b16 %v4953, %v4952
  %v4988 = vpack.c.b16 %v4955, %v4954
  %v4989 = vpack.c.b16 %v4957, %v4956
  %5022 = vmatpush.bf16.msra.mxu0 %v4965
  %5023 = vmatpush.bf16.msra.mxu0 %v4964
  %5024 = vmatpush.bf16.msra.mxu0 %v4963
  %5025 = vmatpush.bf16.msra.mxu0 %v4962
  %5026 = vmatpush.bf16.msra.mxu0 %v4961
  %5027 = vmatpush.bf16.msra.mxu0 %v4960
  %5028 = vmatpush.bf16.msra.mxu0 %v4959
  %5029 = vmatpush.bf16.msra.mxu0 %v4958
  %5030 = vmatmul.bf16.gmra.mxu0 %v4698
  %v5031 = vpop.f32.mrf.mxu0
  %v5032 = vadd.f32 %v4828, %v5031
  %v5033 = vpop.f32.mrf.mxu0
  %v5034 = vadd.f32 %v4828, %v5033
  %5035 = vmatmul.bf16.gmra.mxu0 %v4702
  %v5036 = vpop.f32.mrf.mxu0
  %v5037 = vadd.f32 %v4828, %v5036
  %v5038 = vpop.f32.mrf.mxu0
  %v5039 = vadd.f32 %v4828, %v5038
  %5040 = vmatmul.bf16.gmra.mxu0 %v4706
  %v5041 = vpop.f32.mrf.mxu0
  %v5042 = vadd.f32 %v4828, %v5041
  %v5043 = vpop.f32.mrf.mxu0
  %v5044 = vadd.f32 %v4828, %v5043
  %5045 = vmatmul.bf16.gmra.mxu0 %v4710
  %v5046 = vpop.f32.mrf.mxu0
  %v5047 = vadd.f32 %v4828, %v5046
  %v5048 = vpop.f32.mrf.mxu0
  %v5049 = vadd.f32 %v4828, %v5048
  %5050 = vmatmul.bf16.gmra.mxu0 %v4714
  %v5051 = vpop.f32.mrf.mxu0
  %v5052 = vadd.f32 %v4828, %v5051
  %v5053 = vpop.f32.mrf.mxu0
  %v5054 = vadd.f32 %v4828, %v5053
  %5055 = vmatmul.bf16.gmra.mxu0 %v4718
  %v5056 = vpop.f32.mrf.mxu0
  %v5057 = vadd.f32 %v4828, %v5056
  %v5058 = vpop.f32.mrf.mxu0
  %v5059 = vadd.f32 %v4828, %v5058
  %5060 = vmatmul.bf16.gmra.mxu0 %v4722
  %v5061 = vpop.f32.mrf.mxu0
  %v5062 = vadd.f32 %v4828, %v5061
  %v5063 = vpop.f32.mrf.mxu0
  %v5064 = vadd.f32 %v4828, %v5063
  %5065 = vmatmul.bf16.gmra.mxu0 %v4726
  %v5066 = vpop.f32.mrf.mxu0
  %v5067 = vadd.f32 %v4828, %v5066
  %v5068 = vpop.f32.mrf.mxu0
  %v5069 = vadd.f32 %v4828, %v5068
  %5070 = vmatmul.bf16.gmra.mxu0 %v4730
  %v5071 = vpop.f32.mrf.mxu0
  %v5072 = vadd.f32 %v4828, %v5071
  %v5073 = vpop.f32.mrf.mxu0
  %v5074 = vadd.f32 %v4828, %v5073
  %5075 = vmatmul.bf16.gmra.mxu0 %v4734
  %v5076 = vpop.f32.mrf.mxu0
  %v5077 = vadd.f32 %v4828, %v5076
  %v5078 = vpop.f32.mrf.mxu0
  %v5079 = vadd.f32 %v4828, %v5078
  %5080 = vmatmul.bf16.gmra.mxu0 %v4738
  %v5081 = vpop.f32.mrf.mxu0
  %v5082 = vadd.f32 %v4828, %v5081
  %v5083 = vpop.f32.mrf.mxu0
  %v5084 = vadd.f32 %v4828, %v5083
  %5085 = vmatmul.bf16.gmra.mxu0 %v4742
  %v5086 = vpop.f32.mrf.mxu0
  %v5087 = vadd.f32 %v4828, %v5086
  %v5088 = vpop.f32.mrf.mxu0
  %v5089 = vadd.f32 %v4828, %v5088
  %5090 = vmatmul.bf16.gmra.mxu0 %v4746
  %v5091 = vpop.f32.mrf.mxu0
  %v5092 = vadd.f32 %v4828, %v5091
  %v5093 = vpop.f32.mrf.mxu0
  %v5094 = vadd.f32 %v4828, %v5093
  %5095 = vmatmul.bf16.gmra.mxu0 %v4750
  %v5096 = vpop.f32.mrf.mxu0
  %v5097 = vadd.f32 %v4828, %v5096
  %v5098 = vpop.f32.mrf.mxu0
  %v5099 = vadd.f32 %v4828, %v5098
  %5100 = vmatmul.bf16.gmra.mxu0 %v4754
  %v5101 = vpop.f32.mrf.mxu0
  %v5102 = vadd.f32 %v4828, %v5101
  %v5103 = vpop.f32.mrf.mxu0
  %v5104 = vadd.f32 %v4828, %v5103
  %5105 = vmatmul.bf16.gmra.mxu0 %v4758
  %v5106 = vpop.f32.mrf.mxu0
  %v5107 = vadd.f32 %v4828, %v5106
  %v5108 = vpop.f32.mrf.mxu0
  %v5109 = vadd.f32 %v4828, %v5108
  %5110 = vdwg.mxu0
  %5111 = vmatpush.bf16.msra.mxu0 %v4973
  %5112 = vmatpush.bf16.msra.mxu0 %v4972
  %5113 = vmatpush.bf16.msra.mxu0 %v4971
  %5114 = vmatpush.bf16.msra.mxu0 %v4970
  %5115 = vmatpush.bf16.msra.mxu0 %v4969
  %5116 = vmatpush.bf16.msra.mxu0 %v4968
  %5117 = vmatpush.bf16.msra.mxu0 %v4967
  %5118 = vmatpush.bf16.msra.mxu0 %v4966
  %5119 = vmatmul.bf16.gmra.mxu0 %v4699
  %v5120 = vpop.f32.mrf.mxu0
  %v5121 = vadd.f32 %v5032, %v5120
  %v5122 = vpop.f32.mrf.mxu0
  %v5123 = vadd.f32 %v5034, %v5122
  %5124 = vmatmul.bf16.gmra.mxu0 %v4703
  %v5125 = vpop.f32.mrf.mxu0
  %v5126 = vadd.f32 %v5037, %v5125
  %v5127 = vpop.f32.mrf.mxu0
  %v5128 = vadd.f32 %v5039, %v5127
  %5129 = vmatmul.bf16.gmra.mxu0 %v4707
  %v5130 = vpop.f32.mrf.mxu0
  %v5131 = vadd.f32 %v5042, %v5130
  %v5132 = vpop.f32.mrf.mxu0
  %v5133 = vadd.f32 %v5044, %v5132
  %5134 = vmatmul.bf16.gmra.mxu0 %v4711
  %v5135 = vpop.f32.mrf.mxu0
  %v5136 = vadd.f32 %v5047, %v5135
  %v5137 = vpop.f32.mrf.mxu0
  %v5138 = vadd.f32 %v5049, %v5137
  %5139 = vmatmul.bf16.gmra.mxu0 %v4715
  %v5140 = vpop.f32.mrf.mxu0
  %v5141 = vadd.f32 %v5052, %v5140
  %v5142 = vpop.f32.mrf.mxu0
  %v5143 = vadd.f32 %v5054, %v5142
  %5144 = vmatmul.bf16.gmra.mxu0 %v4719
  %v5145 = vpop.f32.mrf.mxu0
  %v5146 = vadd.f32 %v5057, %v5145
  %v5147 = vpop.f32.mrf.mxu0
  %v5148 = vadd.f32 %v5059, %v5147
  %5149 = vmatmul.bf16.gmra.mxu0 %v4723
  %v5150 = vpop.f32.mrf.mxu0
  %v5151 = vadd.f32 %v5062, %v5150
  %v5152 = vpop.f32.mrf.mxu0
  %v5153 = vadd.f32 %v5064, %v5152
  %5154 = vmatmul.bf16.gmra.mxu0 %v4727
  %v5155 = vpop.f32.mrf.mxu0
  %v5156 = vadd.f32 %v5067, %v5155
  %v5157 = vpop.f32.mrf.mxu0
  %v5158 = vadd.f32 %v5069, %v5157
  %5159 = vmatmul.bf16.gmra.mxu0 %v4731
  %v5160 = vpop.f32.mrf.mxu0
  %v5161 = vadd.f32 %v5072, %v5160
  %v5162 = vpop.f32.mrf.mxu0
  %v5163 = vadd.f32 %v5074, %v5162
  %5164 = vmatmul.bf16.gmra.mxu0 %v4735
  %v5165 = vpop.f32.mrf.mxu0
  %v5166 = vadd.f32 %v5077, %v5165
  %v5167 = vpop.f32.mrf.mxu0
  %v5168 = vadd.f32 %v5079, %v5167
  %5169 = vmatmul.bf16.gmra.mxu0 %v4739
  %v5170 = vpop.f32.mrf.mxu0
  %v5171 = vadd.f32 %v5082, %v5170
  %v5172 = vpop.f32.mrf.mxu0
  %v5173 = vadd.f32 %v5084, %v5172
  %5174 = vmatmul.bf16.gmra.mxu0 %v4743
  %v5175 = vpop.f32.mrf.mxu0
  %v5176 = vadd.f32 %v5087, %v5175
  %v5177 = vpop.f32.mrf.mxu0
  %v5178 = vadd.f32 %v5089, %v5177
  %5179 = vmatmul.bf16.gmra.mxu0 %v4747
  %v5180 = vpop.f32.mrf.mxu0
  %v5181 = vadd.f32 %v5092, %v5180
  %v5182 = vpop.f32.mrf.mxu0
  %v5183 = vadd.f32 %v5094, %v5182
  %5184 = vmatmul.bf16.gmra.mxu0 %v4751
  %v5185 = vpop.f32.mrf.mxu0
  %v5186 = vadd.f32 %v5097, %v5185
  %v5187 = vpop.f32.mrf.mxu0
  %v5188 = vadd.f32 %v5099, %v5187
  %5189 = vmatmul.bf16.gmra.mxu0 %v4755
  %v5190 = vpop.f32.mrf.mxu0
  %v5191 = vadd.f32 %v5102, %v5190
  %v5192 = vpop.f32.mrf.mxu0
  %v5193 = vadd.f32 %v5104, %v5192
  %5194 = vmatmul.bf16.gmra.mxu0 %v4759
  %v5195 = vpop.f32.mrf.mxu0
  %v5196 = vadd.f32 %v5107, %v5195
  %v5197 = vpop.f32.mrf.mxu0
  %v5198 = vadd.f32 %v5109, %v5197
  %5199 = vdwg.mxu0
  %5200 = vmatpush.bf16.msra.mxu0 %v4981
  %5201 = vmatpush.bf16.msra.mxu0 %v4980
  %5202 = vmatpush.bf16.msra.mxu0 %v4979
  %5203 = vmatpush.bf16.msra.mxu0 %v4978
  %5204 = vmatpush.bf16.msra.mxu0 %v4977
  %5205 = vmatpush.bf16.msra.mxu0 %v4976
  %5206 = vmatpush.bf16.msra.mxu0 %v4975
  %5207 = vmatpush.bf16.msra.mxu0 %v4974
  %5208 = vmatmul.bf16.gmra.mxu0 %v4700
  %v5209 = vpop.f32.mrf.mxu0
  %v5210 = vadd.f32 %v5121, %v5209
  %v5211 = vpop.f32.mrf.mxu0
  %v5212 = vadd.f32 %v5123, %v5211
  %5213 = vmatmul.bf16.gmra.mxu0 %v4704
  %v5214 = vpop.f32.mrf.mxu0
  %v5215 = vadd.f32 %v5126, %v5214
  %v5216 = vpop.f32.mrf.mxu0
  %v5217 = vadd.f32 %v5128, %v5216
  %5218 = vmatmul.bf16.gmra.mxu0 %v4708
  %v5219 = vpop.f32.mrf.mxu0
  %v5220 = vadd.f32 %v5131, %v5219
  %v5221 = vpop.f32.mrf.mxu0
  %v5222 = vadd.f32 %v5133, %v5221
  %5223 = vmatmul.bf16.gmra.mxu0 %v4712
  %v5224 = vpop.f32.mrf.mxu0
  %v5225 = vadd.f32 %v5136, %v5224
  %v5226 = vpop.f32.mrf.mxu0
  %v5227 = vadd.f32 %v5138, %v5226
  %5228 = vmatmul.bf16.gmra.mxu0 %v4716
  %v5229 = vpop.f32.mrf.mxu0
  %v5230 = vadd.f32 %v5141, %v5229
  %v5231 = vpop.f32.mrf.mxu0
  %v5232 = vadd.f32 %v5143, %v5231
  %5233 = vmatmul.bf16.gmra.mxu0 %v4720
  %v5234 = vpop.f32.mrf.mxu0
  %v5235 = vadd.f32 %v5146, %v5234
  %v5236 = vpop.f32.mrf.mxu0
  %v5237 = vadd.f32 %v5148, %v5236
  %5238 = vmatmul.bf16.gmra.mxu0 %v4724
  %v5239 = vpop.f32.mrf.mxu0
  %v5240 = vadd.f32 %v5151, %v5239
  %v5241 = vpop.f32.mrf.mxu0
  %v5242 = vadd.f32 %v5153, %v5241
  %5243 = vmatmul.bf16.gmra.mxu0 %v4728
  %v5244 = vpop.f32.mrf.mxu0
  %v5245 = vadd.f32 %v5156, %v5244
  %v5246 = vpop.f32.mrf.mxu0
  %v5247 = vadd.f32 %v5158, %v5246
  %5248 = vmatmul.bf16.gmra.mxu0 %v4732
  %v5249 = vpop.f32.mrf.mxu0
  %v5250 = vadd.f32 %v5161, %v5249
  %v5251 = vpop.f32.mrf.mxu0
  %v5252 = vadd.f32 %v5163, %v5251
  %5253 = vmatmul.bf16.gmra.mxu0 %v4736
  %v5254 = vpop.f32.mrf.mxu0
  %v5255 = vadd.f32 %v5166, %v5254
  %v5256 = vpop.f32.mrf.mxu0
  %v5257 = vadd.f32 %v5168, %v5256
  %5258 = vmatmul.bf16.gmra.mxu0 %v4740
  %v5259 = vpop.f32.mrf.mxu0
  %v5260 = vadd.f32 %v5171, %v5259
  %v5261 = vpop.f32.mrf.mxu0
  %v5262 = vadd.f32 %v5173, %v5261
  %5263 = vmatmul.bf16.gmra.mxu0 %v4744
  %v5264 = vpop.f32.mrf.mxu0
  %v5265 = vadd.f32 %v5176, %v5264
  %v5266 = vpop.f32.mrf.mxu0
  %v5267 = vadd.f32 %v5178, %v5266
  %5268 = vmatmul.bf16.gmra.mxu0 %v4748
  %v5269 = vpop.f32.mrf.mxu0
  %v5270 = vadd.f32 %v5181, %v5269
  %v5271 = vpop.f32.mrf.mxu0
  %v5272 = vadd.f32 %v5183, %v5271
  %5273 = vmatmul.bf16.gmra.mxu0 %v4752
  %v5274 = vpop.f32.mrf.mxu0
  %v5275 = vadd.f32 %v5186, %v5274
  %v5276 = vpop.f32.mrf.mxu0
  %v5277 = vadd.f32 %v5188, %v5276
  %5278 = vmatmul.bf16.gmra.mxu0 %v4756
  %v5279 = vpop.f32.mrf.mxu0
  %v5280 = vadd.f32 %v5191, %v5279
  %v5281 = vpop.f32.mrf.mxu0
  %v5282 = vadd.f32 %v5193, %v5281
  %5283 = vmatmul.bf16.gmra.mxu0 %v4760
  %v5284 = vpop.f32.mrf.mxu0
  %v5285 = vadd.f32 %v5196, %v5284
  %v5286 = vpop.f32.mrf.mxu0
  %v5287 = vadd.f32 %v5198, %v5286
  %5288 = vdwg.mxu0
  %5289 = vmatpush.bf16.msra.mxu0 %v4989
  %5290 = vmatpush.bf16.msra.mxu0 %v4988
  %5291 = vmatpush.bf16.msra.mxu0 %v4987
  %5292 = vmatpush.bf16.msra.mxu0 %v4986
  %5293 = vmatpush.bf16.msra.mxu0 %v4985
  %5294 = vmatpush.bf16.msra.mxu0 %v4984
  %5295 = vmatpush.bf16.msra.mxu0 %v4983
  %5296 = vmatpush.bf16.msra.mxu0 %v4982
  %5297 = vmatmul.bf16.gmra.mxu0 %v4701
  %v5298 = vpop.f32.mrf.mxu0
  %v5299 = vadd.f32 %v5210, %v5298
  %v5300 = vpop.f32.mrf.mxu0
  %v5301 = vadd.f32 %v5212, %v5300
  %5302 = vmatmul.bf16.gmra.mxu0 %v4705
  %v5303 = vpop.f32.mrf.mxu0
  %v5304 = vadd.f32 %v5215, %v5303
  %v5305 = vpop.f32.mrf.mxu0
  %v5306 = vadd.f32 %v5217, %v5305
  %5307 = vmatmul.bf16.gmra.mxu0 %v4709
  %v5308 = vpop.f32.mrf.mxu0
  %v5309 = vadd.f32 %v5220, %v5308
  %v5310 = vpop.f32.mrf.mxu0
  %v5311 = vadd.f32 %v5222, %v5310
  %5312 = vmatmul.bf16.gmra.mxu0 %v4713
  %v5313 = vpop.f32.mrf.mxu0
  %v5314 = vadd.f32 %v5225, %v5313
  %v5315 = vpop.f32.mrf.mxu0
  %v5316 = vadd.f32 %v5227, %v5315
  %5317 = vmatmul.bf16.gmra.mxu0 %v4717
  %v5318 = vpop.f32.mrf.mxu0
  %v5319 = vadd.f32 %v5230, %v5318
  %v5320 = vpop.f32.mrf.mxu0
  %v5321 = vadd.f32 %v5232, %v5320
  %5322 = vmatmul.bf16.gmra.mxu0 %v4721
  %v5323 = vpop.f32.mrf.mxu0
  %v5324 = vadd.f32 %v5235, %v5323
  %v5325 = vpop.f32.mrf.mxu0
  %v5326 = vadd.f32 %v5237, %v5325
  %5327 = vmatmul.bf16.gmra.mxu0 %v4725
  %v5328 = vpop.f32.mrf.mxu0
  %v5329 = vadd.f32 %v5240, %v5328
  %v5330 = vpop.f32.mrf.mxu0
  %v5331 = vadd.f32 %v5242, %v5330
  %5332 = vmatmul.bf16.gmra.mxu0 %v4729
  %v5333 = vpop.f32.mrf.mxu0
  %v5334 = vadd.f32 %v5245, %v5333
  %v5335 = vpop.f32.mrf.mxu0
  %v5336 = vadd.f32 %v5247, %v5335
  %5337 = vmatmul.bf16.gmra.mxu0 %v4733
  %v5338 = vpop.f32.mrf.mxu0
  %v5339 = vadd.f32 %v5250, %v5338
  %v5340 = vpop.f32.mrf.mxu0
  %v5341 = vadd.f32 %v5252, %v5340
  %5342 = vmatmul.bf16.gmra.mxu0 %v4737
  %v5343 = vpop.f32.mrf.mxu0
  %v5344 = vadd.f32 %v5255, %v5343
  %v5345 = vpop.f32.mrf.mxu0
  %v5346 = vadd.f32 %v5257, %v5345
  %5347 = vmatmul.bf16.gmra.mxu0 %v4741
  %v5348 = vpop.f32.mrf.mxu0
  %v5349 = vadd.f32 %v5260, %v5348
  %v5350 = vpop.f32.mrf.mxu0
  %v5351 = vadd.f32 %v5262, %v5350
  %5352 = vmatmul.bf16.gmra.mxu0 %v4745
  %v5353 = vpop.f32.mrf.mxu0
  %v5354 = vadd.f32 %v5265, %v5353
  %v5355 = vpop.f32.mrf.mxu0
  %v5356 = vadd.f32 %v5267, %v5355
  %5357 = vmatmul.bf16.gmra.mxu0 %v4749
  %v5358 = vpop.f32.mrf.mxu0
  %v5359 = vadd.f32 %v5270, %v5358
  %v5360 = vpop.f32.mrf.mxu0
  %v5361 = vadd.f32 %v5272, %v5360
  %5362 = vmatmul.bf16.gmra.mxu0 %v4753
  %v5363 = vpop.f32.mrf.mxu0
  %v5364 = vadd.f32 %v5275, %v5363
  %v5365 = vpop.f32.mrf.mxu0
  %v5366 = vadd.f32 %v5277, %v5365
  %5367 = vmatmul.bf16.gmra.mxu0 %v4757
  %v5368 = vpop.f32.mrf.mxu0
  %v5369 = vadd.f32 %v5280, %v5368
  %v5370 = vpop.f32.mrf.mxu0
  %v5371 = vadd.f32 %v5282, %v5370
  %5372 = vmatmul.bf16.gmra.mxu0 %v4761
  %v5373 = vpop.f32.mrf.mxu0
  %v5374 = vadd.f32 %v5285, %v5373
  %v5375 = vpop.f32.mrf.mxu0
  %v5376 = vadd.f32 %v5287, %v5375
  %5377 = vdwg.mxu0
  %5378 = vst [vmem:[%s5] sm:$0xff] %v5299
  %5379 = vst [vmem:[%s5 + $0x8] sm:$0xff] %v5301
  %5380 = vst [vmem:[%s5 + $0x10] sm:$0xff] %v5304
  %5381 = vst [vmem:[%s5 + $0x18] sm:$0xff] %v5306
  %5382 = vst [vmem:[%s5 + $0x20] sm:$0xff] %v5309
  %5383 = vst [vmem:[%s5 + $0x28] sm:$0xff] %v5311
  %5384 = vst [vmem:[%s5 + $0x30] sm:$0xff] %v5314
  %5385 = vst [vmem:[%s5 + $0x38] sm:$0xff] %v5316
  %5386 = vst [vmem:[%s5 + $0x40] sm:$0xff] %v5319
  %5387 = vst [vmem:[%s5 + $0x48] sm:$0xff] %v5321
  %5388 = vst [vmem:[%s5 + $0x50] sm:$0xff] %v5324
  %5389 = vst [vmem:[%s5 + $0x58] sm:$0xff] %v5326
  %5390 = vst [vmem:[%s5 + $0x60] sm:$0xff] %v5329
  %5391 = vst [vmem:[%s5 + $0x68] sm:$0xff] %v5331
  %5392 = vst [vmem:[%s5 + $0x70] sm:$0xff] %v5334
  %5393 = vst [vmem:[%s5 + $0x78] sm:$0xff] %v5336
  %5394 = vst [vmem:[%s5 + $0x80] sm:$0xff] %v5339
  %5395 = vst [vmem:[%s5 + $0x88] sm:$0xff] %v5341
  %5396 = vst [vmem:[%s5 + $0x90] sm:$0xff] %v5344
  %5397 = vst [vmem:[%s5 + $0x98] sm:$0xff] %v5346
  %5398 = vst [vmem:[%s5 + $0xa0] sm:$0xff] %v5349
  %5399 = vst [vmem:[%s5 + $0xa8] sm:$0xff] %v5351
  %5400 = vst [vmem:[%s5 + $0xb0] sm:$0xff] %v5354
  %5401 = vst [vmem:[%s5 + $0xb8] sm:$0xff] %v5356
  %5402 = vst [vmem:[%s5 + $0xc0] sm:$0xff] %v5359
  %5403 = vst [vmem:[%s5 + $0xc8] sm:$0xff] %v5361
  %5404 = vst [vmem:[%s5 + $0xd0] sm:$0xff] %v5364
  %5405 = vst [vmem:[%s5 + $0xd8] sm:$0xff] %v5366
  %5406 = vst [vmem:[%s5 + $0xe0] sm:$0xff] %v5369
  %5407 = vst [vmem:[%s5 + $0xe8] sm:$0xff] %v5371
  %5408 = vst [vmem:[%s5 + $0xf0] sm:$0xff] %v5374
  %5409 = vst [vmem:[%s5 + $0xf8] sm:$0xff] %v5376
  // Predicated region
  $region22: #{mlp_forward.1} parent=0 // pred_check
    _
  $region23: #{mlp_forward.1} parent=0 // pred_check_branch
    %5411 = sbr.rel (0) target = $region25
  $region24: #{mlp_forward.1} parent=0 // pred_region
    _
  $region25: #{mlp_forward.1} parent=0 // pred_fallthru
    _
  // Predicated region
  $region26: #{mlp_forward.1} parent=0 // pred_check
    _
  $region27: #{mlp_forward.1} parent=0 // pred_check_branch
    %5413 = sbr.rel (0) target = $region29
  $region28: #{mlp_forward.1} parent=0 // pred_region
    _
  $region29: #{mlp_forward.1} parent=0 // pred_fallthru
    _

</llo_original>
